<compile_context>
chip_gen: v5e
topology: v5e:2x2
jax: 0.10.0
libtpu: 0.0.40
codegen_flags: <defaults>
</compile_context>

<pallas_src>
import functools
import math

import jax
import jax.numpy as jnp
from jax.experimental import pallas as pl
from jax.experimental.pallas import tpu as pltpu  # noqa: F401  (kept for TPU-specific extensions)


# ----------------------------------------------------------------------------
# In-kernel helpers (traced inside the Pallas kernel; everything stays 2-D)
# ----------------------------------------------------------------------------
def _tap_selector(k, n_batch, l_in, l_out, dtype):
    """0/1 selection matrix S_k of shape (B*l_out, B*l_in).

    Row r = b*l_out + t selects input row b*l_in + (2t + k - 1)  (tap k of a
    kernel_size=3 / stride=2 / padding=1 conv); rows whose tap falls in the
    left zero-padding stay all-zero.  Requires l_in == 2 * l_out.
    """
    rows, cols = n_batch * l_out, n_batch * l_in
    r = jax.lax.broadcasted_iota(jnp.int32, (rows, cols), 0)
    c = jax.lax.broadcasted_iota(jnp.int32, (rows, cols), 1)
    sel = c == 2 * r + (k - 1)
    if k == 0:
        # With batch rows merged, the left zero-pad tap (source index -1) of
        # each batch block would alias the last row of the previous block
        # (column b*l_in - 1).  Those columns are never a legal k==0 tap, so
        # masking them out exactly reproduces the zero padding.
        for b in range(1, n_batch):
            sel = jnp.logical_and(sel, c != b * l_in - 1)
    return sel.astype(dtype)


def _pool_matrix(n_batch, l_len, dtype):
    """(B, B*l_len) matrix that averages each batch block of rows."""
    r = jax.lax.broadcasted_iota(jnp.int32, (n_batch, n_batch * l_len), 0)
    c = jax.lax.broadcasted_iota(jnp.int32, (n_batch, n_batch * l_len), 1)
    d = c - r * l_len
    sel = jnp.logical_and(d >= 0, d < l_len)
    return sel.astype(dtype) * (1.0 / l_len)


def _conv_block(a, w_ref, b_ref, n_batch, l_in):
    """relu(conv1d(k=3, s=2, p=1)) on merged-batch activations.

    a:      (B*l_in, C_in)    f32
    w_ref:  (3, C_in, C_out)  bf16  (tap-major conv weight)
    b_ref:  (1, C_out)        f32
    ->      (B*l_out, C_out)  f32,  l_out = l_in // 2
    """
    l_out = l_in // 2
    terms = []
    for k in range(3):
        sel = _tap_selector(k, n_batch, l_in, l_out, a.dtype)
        # Exact row-gather of the shifted/strided input (MXU, tiny).
        tap = jnp.dot(sel, a, preferred_element_type=jnp.float32)
        # Main conv matmul in bf16 with f32 accumulation.
        terms.append(jnp.dot(tap.astype(jnp.bfloat16), w_ref[k],
                             preferred_element_type=jnp.float32))
    y = terms[0] + terms[1] + terms[2] + b_ref[...]
    return jnp.maximum(y, 0.0)


# ----------------------------------------------------------------------------
# Fused encoder kernel: conv0..conv3 + ReLU + avg-pool + FC in one pallas_call
# ----------------------------------------------------------------------------
def _fused_encoder_kernel(p0_ref, w0_ref, b0_ref,
                          w1_ref, b1_ref,
                          w2_ref, b2_ref,
                          w3_ref, b3_ref,
                          fcw_ref, fcb_ref,
                          o_ref, *, n_batch, l1):
    # conv0: single tiny contraction-(3*C_in) matmul on pre-gathered taps.
    a = jnp.maximum(
        jnp.dot(p0_ref[...], w0_ref[...], preferred_element_type=jnp.float32)
        + b0_ref[...], 0.0)                                     # (B*l1, 64)

    l = l1
    a = _conv_block(a, w1_ref, b1_ref, n_batch, l)              # (B*l1/2, 128)
    l //= 2
    a = _conv_block(a, w2_ref, b2_ref, n_batch, l)              # (B*l1/4, 256)
    l //= 2
    a = _conv_block(a, w3_ref, b3_ref, n_batch, l)              # (B*l1/8, 512)
    l //= 2

    # AdaptiveAvgPool1d(1) as a tiny matmul epilogue (f32, exact mean).
    pool = _pool_matrix(n_batch, l, jnp.float32)                # (B, B*l)
    pooled = jnp.dot(pool, a, preferred_element_type=jnp.float32)   # (B, 512)

    # Batched FC (M = B) in bf16 with f32 accumulation.
    emb = jnp.dot(pooled.astype(jnp.bfloat16), fcw_ref[...],
                  preferred_element_type=jnp.float32) + fcb_ref[...]
    o_ref[...] = emb.astype(o_ref.dtype)


# ----------------------------------------------------------------------------
# Forward wrapper (mirrors SimpleAudioEncoder.forward)
# ----------------------------------------------------------------------------
@functools.partial(jax.jit, static_argnames=("input_channels",))
def simple_audio_encoder_forward(params, audio_segment, input_channels=1):
    if audio_segment.ndim == 2:
        audio_segment = audio_segment[:, None, :]               # (B, 1, L)
    elif audio_segment.ndim != 3:
        raise ValueError(
            f"Expected audio_segment to have 2 or 3 dimensions, got {audio_segment.ndim}")
    if audio_segment.shape[1] != input_channels:
        raise ValueError(
            f"Expected audio_segment to have {input_channels} channel(s), "
            f"got {audio_segment.shape[1]}")

    B, C_in, L = audio_segment.shape
    if L < 16 or L % 16 != 0:
        # TODO(synk): odd intermediate lengths need extra right-padding taps;
        # only multiple-of-16 segment lengths are supported by the fused kernel.
        raise NotImplementedError("segment_length must be a multiple of 16")
    # TODO(synk): for very long segments (L >> 64k) add a length-tile grid axis
    # so the fused activations stay under v7x's 32 MiB scoped VMEM.

    # NCL (PyTorch) -> NLC, f32
    x = jnp.transpose(audio_segment, (0, 2, 1)).astype(jnp.float32)   # (B, L, C_in)

    # Layer-0 taps, gathered once from the tiny raw input (≈3*C_in*L floats).
    L1 = L // 2
    x_pad = jnp.pad(x, ((0, 0), (1, 1), (0, 0)))
    idx = 2 * jnp.arange(L1)[:, None] + jnp.arange(3)[None, :]        # (L1, 3)
    p0 = x_pad[:, idx, :].reshape(B * L1, 3 * C_in)                   # (B*L1, 3*C_in)

    # Weight prep: tap-major layouts, bf16 for the MXU, f32 biases.
    w0, b0 = params["conv0"]
    w0f = jnp.transpose(w0, (2, 1, 0)).reshape(3 * C_in, w0.shape[0]).astype(jnp.float32)
    args = [p0, w0f, b0.reshape(1, -1).astype(jnp.float32)]
    for i in (1, 2, 3):
        w, b = params[f"conv{i}"]
        args.append(jnp.transpose(w, (2, 1, 0)).astype(jnp.bfloat16))  # (3, Cin, Cout)
        args.append(b.reshape(1, -1).astype(jnp.float32))
    fcw, fcb = params["fc"]
    args.append(fcw.T.astype(jnp.bfloat16))                            # (512, D)
    args.append(fcb.reshape(1, -1).astype(jnp.float32))

    D = fcw.shape[0]
    # Grid-less call: whole (tiny) operands live in VMEM, kernel runs once.
    return pl.pallas_call(
        functools.partial(_fused_encoder_kernel, n_batch=B, l1=L1),
        out_shape=jax.ShapeDtypeStruct((B, D), jnp.float32),
    )(*args)


# ----------------------------------------------------------------------------
# Parameter init (deterministic, PyTorch-style uniform(-1/sqrt(fan_in), ...))
# ----------------------------------------------------------------------------
def init_params(key, input_channels=1, output_embedding_dim=512):
    params = {}
    conv_defs = [(input_channels, 64), (64, 128), (128, 256), (256, 512)]
    K = 3
    keys = jax.random.split(key, 2 * len(conv_defs) + 2)
    ki = 0
    for i, (cin, cout) in enumerate(conv_defs):
        bound = 1.0 / math.sqrt(cin * K)
        w = jax.random.uniform(keys[ki], (cout, cin, K), jnp.float32,
                               minval=-bound, maxval=bound)
        b = jax.random.uniform(keys[ki + 1], (cout,), jnp.float32,
                               minval=-bound, maxval=bound)
        ki += 2
        params[f"conv{i}"] = (w, b)

    bound = 1.0 / math.sqrt(512)
    fc_w = jax.random.uniform(keys[ki], (output_embedding_dim, 512), jnp.float32,
                              minval=-bound, maxval=bound)
    fc_b = jax.random.uniform(keys[ki + 1], (output_embedding_dim,), jnp.float32,
                              minval=-bound, maxval=bound)
    params["fc"] = (fc_w, fc_b)
    return params


# ----------------------------------------------------------------------------
# Pure-JAX reference (f32 end-to-end) for a loose numerical self-check.
# ----------------------------------------------------------------------------
def _reference_forward(params, audio_segment, input_channels=1):
    if audio_segment.ndim == 2:
        audio_segment = audio_segment[:, None, :]
    x = jnp.transpose(audio_segment, (0, 2, 1)).astype(jnp.float32)
    for i in range(4):
        w, b = params[f"conv{i}"]
        Bb, Ll, Ci = x.shape
        Lo = (Ll + 2 - 3) // 2 + 1
        xp = jnp.pad(x, ((0, 0), (1, 1), (0, 0)))
        idx = 2 * jnp.arange(Lo)[:, None] + jnp.arange(3)[None, :]
        p = xp[:, idx, :].reshape(Bb, Lo, 3 * Ci)
        wf = jnp.transpose(w, (2, 1, 0)).reshape(3 * Ci, -1)
        x = jnp.maximum(jnp.einsum("blk,kc->blc", p, wf) + b, 0.0)
    pooled = jnp.mean(x, axis=1)
    fw, fb = params["fc"]
    return pooled @ fw.T + fb


# ----------------------------------------------------------------------------
if __name__ == "__main__":
    key = jax.random.PRNGKey(0)
    pkey, xkey = jax.random.split(key)

    params = init_params(pkey, input_channels=1, output_embedding_dim=512)

    # Small deterministic input: (batch=2, segment_length=128)
    # Lengths through the conv stack: 128 -> 64 -> 32 -> 16 -> 8
    audio = jax.random.normal(xkey, (2, 128), dtype=jnp.float32)

    emb = simple_audio_encoder_forward(params, audio, input_channels=1)
    emb = jax.block_until_ready(emb)

    assert emb.shape == (2, 512), emb.shape
    assert emb.dtype == jnp.float32
    assert bool(jnp.all(jnp.isfinite(emb)))

    # Loose tolerance: conv1..3 / fc matmuls run in bf16 with f32 accumulation.
    ref = _reference_forward(params, audio, input_channels=1)
    assert bool(jnp.allclose(emb, ref, atol=5e-2, rtol=5e-2)), (
        float(jnp.max(jnp.abs(emb - ref))))

    print("KERNEL_OK")
</pallas_src>

<mosaic_0001>
module attributes {stable_mosaic.version = 11 : i64} {
  func.func @_fused_encoder_kernel(%arg0: memref<128x3xf32, #tpu.memory_space<vmem>>, %arg1: memref<3x64xf32, #tpu.memory_space<vmem>>, %arg2: memref<1x64xf32, #tpu.memory_space<vmem>>, %arg3: memref<3x64x128xbf16, #tpu.memory_space<vmem>>, %arg4: memref<1x128xf32, #tpu.memory_space<vmem>>, %arg5: memref<3x128x256xbf16, #tpu.memory_space<vmem>>, %arg6: memref<1x256xf32, #tpu.memory_space<vmem>>, %arg7: memref<3x256x512xbf16, #tpu.memory_space<vmem>>, %arg8: memref<1x512xf32, #tpu.memory_space<vmem>>, %arg9: memref<512x512xbf16, #tpu.memory_space<vmem>>, %arg10: memref<1x512xf32, #tpu.memory_space<vmem>>, %arg11: memref<2x512xf32, #tpu.memory_space<vmem>>) attributes {dimension_semantics = [], scalar_prefetch = 0 : i64, scratch_operands = 0 : i64, tpu.core_type = #tpu.core_type<tc>} {
    %c0 = arith.constant 0 : index
    %c0_0 = arith.constant 0 : index
    %0 = vector.load %arg0[%c0, %c0_0] : memref<128x3xf32, #tpu.memory_space<vmem>>, vector<128x3xf32>
    %c0_1 = arith.constant 0 : index
    %c0_2 = arith.constant 0 : index
    %1 = vector.load %arg1[%c0_1, %c0_2] : memref<3x64xf32, #tpu.memory_space<vmem>>, vector<3x64xf32>
    %cst = arith.constant dense<0.000000e+00> : vector<128x64xf32>
    %2 = tpu.matmul %0, %1, %cst {dimension_numbers = #tpu.dot_dimension_numbers<[1], [0], [0], [1], [0, 0, 1, 1], [], []>} : vector<128x3xf32>, vector<3x64xf32>, vector<128x64xf32> -> vector<128x64xf32>
    %c0_3 = arith.constant 0 : index
    %c0_4 = arith.constant 0 : index
    %3 = vector.load %arg2[%c0_3, %c0_4] : memref<1x64xf32, #tpu.memory_space<vmem>>, vector<1x64xf32>
    %4 = vector.broadcast %3 : vector<1x64xf32> to vector<128x64xf32>
    %5 = arith.addf %2, %4 : vector<128x64xf32>
    %cst_5 = arith.constant 0.000000e+00 : f32
    %6 = vector.broadcast %cst_5 : f32 to vector<128x64xf32>
    %7 = arith.maximumf %5, %6 : vector<128x64xf32>
    %8 = tpu.iota {dimensions = array<i32: 0>} : vector<64x128xi32>
    %9 = tpu.iota {dimensions = array<i32: 1>} : vector<64x128xi32>
    %c2_i32 = arith.constant 2 : i32
    %10 = vector.broadcast %c2_i32 : i32 to vector<64x128xi32>
    %11 = arith.muli %10, %8 : vector<64x128xi32>
    %c-1_i32 = arith.constant -1 : i32
    %12 = vector.broadcast %c-1_i32 : i32 to vector<64x128xi32>
    %13 = arith.addi %11, %12 : vector<64x128xi32>
    %14 = arith.cmpi eq, %9, %13 : vector<64x128xi32>
    %c63_i32 = arith.constant 63 : i32
    %15 = vector.broadcast %c63_i32 : i32 to vector<64x128xi32>
    %16 = arith.cmpi ne, %9, %15 : vector<64x128xi32>
    %17 = arith.andi %14, %16 : vector<64x128xi1>
    %18 = arith.extui %17 : vector<64x128xi1> to vector<64x128xi32>
    %19 = arith.sitofp %18 : vector<64x128xi32> to vector<64x128xf32>
    %cst_6 = arith.constant dense<0.000000e+00> : vector<64x64xf32>
    %20 = tpu.matmul %19, %7, %cst_6 {dimension_numbers = #tpu.dot_dimension_numbers<[1], [0], [0], [1], [0, 0, 1, 1], [], []>} : vector<64x128xf32>, vector<128x64xf32>, vector<64x64xf32> -> vector<64x64xf32>
    %21 = arith.truncf %20 : vector<64x64xf32> to vector<64x64xbf16>
    %c0_7 = arith.constant 0 : index
    %c0_8 = arith.constant 0 : index
    %c0_9 = arith.constant 0 : index
    %22 = vector.load %arg3[%c0_7, %c0_8, %c0_9] : memref<3x64x128xbf16, #tpu.memory_space<vmem>>, vector<1x64x128xbf16>
    %23 = vector.shape_cast %22 : vector<1x64x128xbf16> to vector<64x128xbf16>
    %cst_10 = arith.constant dense<0.000000e+00> : vector<64x128xf32>
    %24 = tpu.matmul %21, %23, %cst_10 {dimension_numbers = #tpu.dot_dimension_numbers<[1], [0], [0], [1], [0, 0, 1, 1], [], []>} : vector<64x64xbf16>, vector<64x128xbf16>, vector<64x128xf32> -> vector<64x128xf32>
    %25 = tpu.iota {dimensions = array<i32: 0>} : vector<64x128xi32>
    %26 = tpu.iota {dimensions = array<i32: 1>} : vector<64x128xi32>
    %c2_i32_11 = arith.constant 2 : i32
    %27 = vector.broadcast %c2_i32_11 : i32 to vector<64x128xi32>
    %28 = arith.muli %27, %25 : vector<64x128xi32>
    %c0_i32 = arith.constant 0 : i32
    %29 = vector.broadcast %c0_i32 : i32 to vector<64x128xi32>
    %30 = arith.addi %28, %29 : vector<64x128xi32>
    %31 = arith.cmpi eq, %26, %30 : vector<64x128xi32>
    %32 = arith.extui %31 : vector<64x128xi1> to vector<64x128xi32>
    %33 = arith.sitofp %32 : vector<64x128xi32> to vector<64x128xf32>
    %cst_12 = arith.constant dense<0.000000e+00> : vector<64x64xf32>
    %34 = tpu.matmul %33, %7, %cst_12 {dimension_numbers = #tpu.dot_dimension_numbers<[1], [0], [0], [1], [0, 0, 1, 1], [], []>} : vector<64x128xf32>, vector<128x64xf32>, vector<64x64xf32> -> vector<64x64xf32>
    %35 = arith.truncf %34 : vector<64x64xf32> to vector<64x64xbf16>
    %c1 = arith.constant 1 : index
    %c0_13 = arith.constant 0 : index
    %c0_14 = arith.constant 0 : index
    %36 = vector.load %arg3[%c1, %c0_13, %c0_14] : memref<3x64x128xbf16, #tpu.memory_space<vmem>>, vector<1x64x128xbf16>
    %37 = vector.shape_cast %36 : vector<1x64x128xbf16> to vector<64x128xbf16>
    %cst_15 = arith.constant dense<0.000000e+00> : vector<64x128xf32>
    %38 = tpu.matmul %35, %37, %cst_15 {dimension_numbers = #tpu.dot_dimension_numbers<[1], [0], [0], [1], [0, 0, 1, 1], [], []>} : vector<64x64xbf16>, vector<64x128xbf16>, vector<64x128xf32> -> vector<64x128xf32>
    %39 = tpu.iota {dimensions = array<i32: 0>} : vector<64x128xi32>
    %40 = tpu.iota {dimensions = array<i32: 1>} : vector<64x128xi32>
    %c2_i32_16 = arith.constant 2 : i32
    %41 = vector.broadcast %c2_i32_16 : i32 to vector<64x128xi32>
    %42 = arith.muli %41, %39 : vector<64x128xi32>
    %c1_i32 = arith.constant 1 : i32
    %43 = vector.broadcast %c1_i32 : i32 to vector<64x128xi32>
    %44 = arith.addi %42, %43 : vector<64x128xi32>
    %45 = arith.cmpi eq, %40, %44 : vector<64x128xi32>
    %46 = arith.extui %45 : vector<64x128xi1> to vector<64x128xi32>
    %47 = arith.sitofp %46 : vector<64x128xi32> to vector<64x128xf32>
    %cst_17 = arith.constant dense<0.000000e+00> : vector<64x64xf32>
    %48 = tpu.matmul %47, %7, %cst_17 {dimension_numbers = #tpu.dot_dimension_numbers<[1], [0], [0], [1], [0, 0, 1, 1], [], []>} : vector<64x128xf32>, vector<128x64xf32>, vector<64x64xf32> -> vector<64x64xf32>
    %49 = arith.truncf %48 : vector<64x64xf32> to vector<64x64xbf16>
    %c2 = arith.constant 2 : index
    %c0_18 = arith.constant 0 : index
    %c0_19 = arith.constant 0 : index
    %50 = vector.load %arg3[%c2, %c0_18, %c0_19] : memref<3x64x128xbf16, #tpu.memory_space<vmem>>, vector<1x64x128xbf16>
    %51 = vector.shape_cast %50 : vector<1x64x128xbf16> to vector<64x128xbf16>
    %cst_20 = arith.constant dense<0.000000e+00> : vector<64x128xf32>
    %52 = tpu.matmul %49, %51, %cst_20 {dimension_numbers = #tpu.dot_dimension_numbers<[1], [0], [0], [1], [0, 0, 1, 1], [], []>} : vector<64x64xbf16>, vector<64x128xbf16>, vector<64x128xf32> -> vector<64x128xf32>
    %53 = arith.addf %24, %38 : vector<64x128xf32>
    %54 = arith.addf %53, %52 : vector<64x128xf32>
    %c0_21 = arith.constant 0 : index
    %c0_22 = arith.constant 0 : index
    %55 = vector.load %arg4[%c0_21, %c0_22] : memref<1x128xf32, #tpu.memory_space<vmem>>, vector<1x128xf32>
    %56 = vector.broadcast %55 : vector<1x128xf32> to vector<64x128xf32>
    %57 = arith.addf %54, %56 : vector<64x128xf32>
    %cst_23 = arith.constant 0.000000e+00 : f32
    %58 = vector.broadcast %cst_23 : f32 to vector<64x128xf32>
    %59 = arith.maximumf %57, %58 : vector<64x128xf32>
    %60 = tpu.iota {dimensions = array<i32: 0>} : vector<32x64xi32>
    %61 = tpu.iota {dimensions = array<i32: 1>} : vector<32x64xi32>
    %c2_i32_24 = arith.constant 2 : i32
    %62 = vector.broadcast %c2_i32_24 : i32 to vector<32x64xi32>
    %63 = arith.muli %62, %60 : vector<32x64xi32>
    %c-1_i32_25 = arith.constant -1 : i32
    %64 = vector.broadcast %c-1_i32_25 : i32 to vector<32x64xi32>
    %65 = arith.addi %63, %64 : vector<32x64xi32>
    %66 = arith.cmpi eq, %61, %65 : vector<32x64xi32>
    %c31_i32 = arith.constant 31 : i32
    %67 = vector.broadcast %c31_i32 : i32 to vector<32x64xi32>
    %68 = arith.cmpi ne, %61, %67 : vector<32x64xi32>
    %69 = arith.andi %66, %68 : vector<32x64xi1>
    %70 = arith.extui %69 : vector<32x64xi1> to vector<32x64xi32>
    %71 = arith.sitofp %70 : vector<32x64xi32> to vector<32x64xf32>
    %cst_26 = arith.constant dense<0.000000e+00> : vector<32x128xf32>
    %72 = tpu.matmul %71, %59, %cst_26 {dimension_numbers = #tpu.dot_dimension_numbers<[1], [0], [0], [1], [0, 0, 1, 1], [], []>} : vector<32x64xf32>, vector<64x128xf32>, vector<32x128xf32> -> vector<32x128xf32>
    %73 = arith.truncf %72 : vector<32x128xf32> to vector<32x128xbf16>
    %c0_27 = arith.constant 0 : index
    %c0_28 = arith.constant 0 : index
    %c0_29 = arith.constant 0 : index
    %74 = vector.load %arg5[%c0_27, %c0_28, %c0_29] : memref<3x128x256xbf16, #tpu.memory_space<vmem>>, vector<1x128x256xbf16>
    %75 = vector.shape_cast %74 : vector<1x128x256xbf16> to vector<128x256xbf16>
    %cst_30 = arith.constant dense<0.000000e+00> : vector<32x256xf32>
    %76 = tpu.matmul %73, %75, %cst_30 {dimension_numbers = #tpu.dot_dimension_numbers<[1], [0], [0], [1], [0, 0, 1, 1], [], []>} : vector<32x128xbf16>, vector<128x256xbf16>, vector<32x256xf32> -> vector<32x256xf32>
    %77 = tpu.iota {dimensions = array<i32: 0>} : vector<32x64xi32>
    %78 = tpu.iota {dimensions = array<i32: 1>} : vector<32x64xi32>
    %c2_i32_31 = arith.constant 2 : i32
    %79 = vector.broadcast %c2_i32_31 : i32 to vector<32x64xi32>
    %80 = arith.muli %79, %77 : vector<32x64xi32>
    %c0_i32_32 = arith.constant 0 : i32
    %81 = vector.broadcast %c0_i32_32 : i32 to vector<32x64xi32>
    %82 = arith.addi %80, %81 : vector<32x64xi32>
    %83 = arith.cmpi eq, %78, %82 : vector<32x64xi32>
    %84 = arith.extui %83 : vector<32x64xi1> to vector<32x64xi32>
    %85 = arith.sitofp %84 : vector<32x64xi32> to vector<32x64xf32>
    %cst_33 = arith.constant dense<0.000000e+00> : vector<32x128xf32>
    %86 = tpu.matmul %85, %59, %cst_33 {dimension_numbers = #tpu.dot_dimension_numbers<[1], [0], [0], [1], [0, 0, 1, 1], [], []>} : vector<32x64xf32>, vector<64x128xf32>, vector<32x128xf32> -> vector<32x128xf32>
    %87 = arith.truncf %86 : vector<32x128xf32> to vector<32x128xbf16>
    %c1_34 = arith.constant 1 : index
    %c0_35 = arith.constant 0 : index
    %c0_36 = arith.constant 0 : index
    %88 = vector.load %arg5[%c1_34, %c0_35, %c0_36] : memref<3x128x256xbf16, #tpu.memory_space<vmem>>, vector<1x128x256xbf16>
    %89 = vector.shape_cast %88 : vector<1x128x256xbf16> to vector<128x256xbf16>
    %cst_37 = arith.constant dense<0.000000e+00> : vector<32x256xf32>
    %90 = tpu.matmul %87, %89, %cst_37 {dimension_numbers = #tpu.dot_dimension_numbers<[1], [0], [0], [1], [0, 0, 1, 1], [], []>} : vector<32x128xbf16>, vector<128x256xbf16>, vector<32x256xf32> -> vector<32x256xf32>
    %91 = tpu.iota {dimensions = array<i32: 0>} : vector<32x64xi32>
    %92 = tpu.iota {dimensions = array<i32: 1>} : vector<32x64xi32>
    %c2_i32_38 = arith.constant 2 : i32
    %93 = vector.broadcast %c2_i32_38 : i32 to vector<32x64xi32>
    %94 = arith.muli %93, %91 : vector<32x64xi32>
    %c1_i32_39 = arith.constant 1 : i32
    %95 = vector.broadcast %c1_i32_39 : i32 to vector<32x64xi32>
    %96 = arith.addi %94, %95 : vector<32x64xi32>
    %97 = arith.cmpi eq, %92, %96 : vector<32x64xi32>
    %98 = arith.extui %97 : vector<32x64xi1> to vector<32x64xi32>
    %99 = arith.sitofp %98 : vector<32x64xi32> to vector<32x64xf32>
    %cst_40 = arith.constant dense<0.000000e+00> : vector<32x128xf32>
    %100 = tpu.matmul %99, %59, %cst_40 {dimension_numbers = #tpu.dot_dimension_numbers<[1], [0], [0], [1], [0, 0, 1, 1], [], []>} : vector<32x64xf32>, vector<64x128xf32>, vector<32x128xf32> -> vector<32x128xf32>
    %101 = arith.truncf %100 : vector<32x128xf32> to vector<32x128xbf16>
    %c2_41 = arith.constant 2 : index
    %c0_42 = arith.constant 0 : index
    %c0_43 = arith.constant 0 : index
    %102 = vector.load %arg5[%c2_41, %c0_42, %c0_43] : memref<3x128x256xbf16, #tpu.memory_space<vmem>>, vector<1x128x256xbf16>
    %103 = vector.shape_cast %102 : vector<1x128x256xbf16> to vector<128x256xbf16>
    %cst_44 = arith.constant dense<0.000000e+00> : vector<32x256xf32>
    %104 = tpu.matmul %101, %103, %cst_44 {dimension_numbers = #tpu.dot_dimension_numbers<[1], [0], [0], [1], [0, 0, 1, 1], [], []>} : vector<32x128xbf16>, vector<128x256xbf16>, vector<32x256xf32> -> vector<32x256xf32>
    %105 = arith.addf %76, %90 : vector<32x256xf32>
    %106 = arith.addf %105, %104 : vector<32x256xf32>
    %c0_45 = arith.constant 0 : index
    %c0_46 = arith.constant 0 : index
    %107 = vector.load %arg6[%c0_45, %c0_46] : memref<1x256xf32, #tpu.memory_space<vmem>>, vector<1x256xf32>
    %108 = vector.broadcast %107 : vector<1x256xf32> to vector<32x256xf32>
    %109 = arith.addf %106, %108 : vector<32x256xf32>
    %cst_47 = arith.constant 0.000000e+00 : f32
    %110 = vector.broadcast %cst_47 : f32 to vector<32x256xf32>
    %111 = arith.maximumf %109, %110 : vector<32x256xf32>
    %112 = tpu.iota {dimensions = array<i32: 0>} : vector<16x32xi32>
    %113 = tpu.iota {dimensions = array<i32: 1>} : vector<16x32xi32>
    %c2_i32_48 = arith.constant 2 : i32
    %114 = vector.broadcast %c2_i32_48 : i32 to vector<16x32xi32>
    %115 = arith.muli %114, %112 : vector<16x32xi32>
    %c-1_i32_49 = arith.constant -1 : i32
    %116 = vector.broadcast %c-1_i32_49 : i32 to vector<16x32xi32>
    %117 = arith.addi %115, %116 : vector<16x32xi32>
    %118 = arith.cmpi eq, %113, %117 : vector<16x32xi32>
    %c15_i32 = arith.constant 15 : i32
    %119 = vector.broadcast %c15_i32 : i32 to vector<16x32xi32>
    %120 = arith.cmpi ne, %113, %119 : vector<16x32xi32>
    %121 = arith.andi %118, %120 : vector<16x32xi1>
    %122 = arith.extui %121 : vector<16x32xi1> to vector<16x32xi32>
    %123 = arith.sitofp %122 : vector<16x32xi32> to vector<16x32xf32>
    %cst_50 = arith.constant dense<0.000000e+00> : vector<16x256xf32>
    %124 = tpu.matmul %123, %111, %cst_50 {dimension_numbers = #tpu.dot_dimension_numbers<[1], [0], [0], [1], [0, 0, 1, 1], [], []>} : vector<16x32xf32>, vector<32x256xf32>, vector<16x256xf32> -> vector<16x256xf32>
    %125 = arith.truncf %124 : vector<16x256xf32> to vector<16x256xbf16>
    %c0_51 = arith.constant 0 : index
    %c0_52 = arith.constant 0 : index
    %c0_53 = arith.constant 0 : index
    %126 = vector.load %arg7[%c0_51, %c0_52, %c0_53] : memref<3x256x512xbf16, #tpu.memory_space<vmem>>, vector<1x256x512xbf16>
    %127 = vector.shape_cast %126 : vector<1x256x512xbf16> to vector<256x512xbf16>
    %cst_54 = arith.constant dense<0.000000e+00> : vector<16x512xf32>
    %128 = tpu.matmul %125, %127, %cst_54 {dimension_numbers = #tpu.dot_dimension_numbers<[1], [0], [0], [1], [0, 0, 1, 1], [], []>} : vector<16x256xbf16>, vector<256x512xbf16>, vector<16x512xf32> -> vector<16x512xf32>
    %129 = tpu.iota {dimensions = array<i32: 0>} : vector<16x32xi32>
    %130 = tpu.iota {dimensions = array<i32: 1>} : vector<16x32xi32>
    %c2_i32_55 = arith.constant 2 : i32
    %131 = vector.broadcast %c2_i32_55 : i32 to vector<16x32xi32>
    %132 = arith.muli %131, %129 : vector<16x32xi32>
    %c0_i32_56 = arith.constant 0 : i32
    %133 = vector.broadcast %c0_i32_56 : i32 to vector<16x32xi32>
    %134 = arith.addi %132, %133 : vector<16x32xi32>
    %135 = arith.cmpi eq, %130, %134 : vector<16x32xi32>
    %136 = arith.extui %135 : vector<16x32xi1> to vector<16x32xi32>
    %137 = arith.sitofp %136 : vector<16x32xi32> to vector<16x32xf32>
    %cst_57 = arith.constant dense<0.000000e+00> : vector<16x256xf32>
    %138 = tpu.matmul %137, %111, %cst_57 {dimension_numbers = #tpu.dot_dimension_numbers<[1], [0], [0], [1], [0, 0, 1, 1], [], []>} : vector<16x32xf32>, vector<32x256xf32>, vector<16x256xf32> -> vector<16x256xf32>
    %139 = arith.truncf %138 : vector<16x256xf32> to vector<16x256xbf16>
    %c1_58 = arith.constant 1 : index
    %c0_59 = arith.constant 0 : index
    %c0_60 = arith.constant 0 : index
    %140 = vector.load %arg7[%c1_58, %c0_59, %c0_60] : memref<3x256x512xbf16, #tpu.memory_space<vmem>>, vector<1x256x512xbf16>
    %141 = vector.shape_cast %140 : vector<1x256x512xbf16> to vector<256x512xbf16>
    %cst_61 = arith.constant dense<0.000000e+00> : vector<16x512xf32>
    %142 = tpu.matmul %139, %141, %cst_61 {dimension_numbers = #tpu.dot_dimension_numbers<[1], [0], [0], [1], [0, 0, 1, 1], [], []>} : vector<16x256xbf16>, vector<256x512xbf16>, vector<16x512xf32> -> vector<16x512xf32>
    %143 = tpu.iota {dimensions = array<i32: 0>} : vector<16x32xi32>
    %144 = tpu.iota {dimensions = array<i32: 1>} : vector<16x32xi32>
    %c2_i32_62 = arith.constant 2 : i32
    %145 = vector.broadcast %c2_i32_62 : i32 to vector<16x32xi32>
    %146 = arith.muli %145, %143 : vector<16x32xi32>
    %c1_i32_63 = arith.constant 1 : i32
    %147 = vector.broadcast %c1_i32_63 : i32 to vector<16x32xi32>
    %148 = arith.addi %146, %147 : vector<16x32xi32>
    %149 = arith.cmpi eq, %144, %148 : vector<16x32xi32>
    %150 = arith.extui %149 : vector<16x32xi1> to vector<16x32xi32>
    %151 = arith.sitofp %150 : vector<16x32xi32> to vector<16x32xf32>
    %cst_64 = arith.constant dense<0.000000e+00> : vector<16x256xf32>
    %152 = tpu.matmul %151, %111, %cst_64 {dimension_numbers = #tpu.dot_dimension_numbers<[1], [0], [0], [1], [0, 0, 1, 1], [], []>} : vector<16x32xf32>, vector<32x256xf32>, vector<16x256xf32> -> vector<16x256xf32>
    %153 = arith.truncf %152 : vector<16x256xf32> to vector<16x256xbf16>
    %c2_65 = arith.constant 2 : index
    %c0_66 = arith.constant 0 : index
    %c0_67 = arith.constant 0 : index
    %154 = vector.load %arg7[%c2_65, %c0_66, %c0_67] : memref<3x256x512xbf16, #tpu.memory_space<vmem>>, vector<1x256x512xbf16>
    %155 = vector.shape_cast %154 : vector<1x256x512xbf16> to vector<256x512xbf16>
    %cst_68 = arith.constant dense<0.000000e+00> : vector<16x512xf32>
    %156 = tpu.matmul %153, %155, %cst_68 {dimension_numbers = #tpu.dot_dimension_numbers<[1], [0], [0], [1], [0, 0, 1, 1], [], []>} : vector<16x256xbf16>, vector<256x512xbf16>, vector<16x512xf32> -> vector<16x512xf32>
    %157 = arith.addf %128, %142 : vector<16x512xf32>
    %158 = arith.addf %157, %156 : vector<16x512xf32>
    %c0_69 = arith.constant 0 : index
    %c0_70 = arith.constant 0 : index
    %159 = vector.load %arg8[%c0_69, %c0_70] : memref<1x512xf32, #tpu.memory_space<vmem>>, vector<1x512xf32>
    %160 = vector.broadcast %159 : vector<1x512xf32> to vector<16x512xf32>
    %161 = arith.addf %158, %160 : vector<16x512xf32>
    %cst_71 = arith.constant 0.000000e+00 : f32
    %162 = vector.broadcast %cst_71 : f32 to vector<16x512xf32>
    %163 = arith.maximumf %161, %162 : vector<16x512xf32>
    %164 = tpu.iota {dimensions = array<i32: 0>} : vector<2x16xi32>
    %165 = tpu.iota {dimensions = array<i32: 1>} : vector<2x16xi32>
    %c8_i32 = arith.constant 8 : i32
    %166 = vector.broadcast %c8_i32 : i32 to vector<2x16xi32>
    %167 = arith.muli %164, %166 : vector<2x16xi32>
    %168 = arith.subi %165, %167 : vector<2x16xi32>
    %c0_i32_72 = arith.constant 0 : i32
    %169 = vector.broadcast %c0_i32_72 : i32 to vector<2x16xi32>
    %170 = arith.cmpi sge, %168, %169 : vector<2x16xi32>
    %c8_i32_73 = arith.constant 8 : i32
    %171 = vector.broadcast %c8_i32_73 : i32 to vector<2x16xi32>
    %172 = arith.cmpi slt, %168, %171 : vector<2x16xi32>
    %173 = arith.andi %170, %172 : vector<2x16xi1>
    %174 = arith.extui %173 : vector<2x16xi1> to vector<2x16xi32>
    %175 = arith.sitofp %174 : vector<2x16xi32> to vector<2x16xf32>
    %cst_74 = arith.constant 1.250000e-01 : f32
    %176 = vector.broadcast %cst_74 : f32 to vector<2x16xf32>
    %177 = arith.mulf %175, %176 : vector<2x16xf32>
    %cst_75 = arith.constant dense<0.000000e+00> : vector<2x512xf32>
    %178 = tpu.matmul %177, %163, %cst_75 {dimension_numbers = #tpu.dot_dimension_numbers<[1], [0], [0], [1], [0, 0, 1, 1], [], []>} : vector<2x16xf32>, vector<16x512xf32>, vector<2x512xf32> -> vector<2x512xf32>
    %179 = arith.truncf %178 : vector<2x512xf32> to vector<2x512xbf16>
    %c0_76 = arith.constant 0 : index
    %c0_77 = arith.constant 0 : index
    %180 = vector.load %arg9[%c0_76, %c0_77] : memref<512x512xbf16, #tpu.memory_space<vmem>>, vector<512x512xbf16>
    %cst_78 = arith.constant dense<0.000000e+00> : vector<2x512xf32>
    %181 = tpu.matmul %179, %180, %cst_78 {dimension_numbers = #tpu.dot_dimension_numbers<[1], [0], [0], [1], [0, 0, 1, 1], [], []>} : vector<2x512xbf16>, vector<512x512xbf16>, vector<2x512xf32> -> vector<2x512xf32>
    %c0_79 = arith.constant 0 : index
    %c0_80 = arith.constant 0 : index
    %182 = vector.load %arg10[%c0_79, %c0_80] : memref<1x512xf32, #tpu.memory_space<vmem>>, vector<1x512xf32>
    %183 = vector.broadcast %182 : vector<1x512xf32> to vector<2x512xf32>
    %184 = arith.addf %181, %183 : vector<2x512xf32>
    %c0_81 = arith.constant 0 : index
    %c0_82 = arith.constant 0 : index
    %185 = vector.load %arg11[%c0_81, %c0_82] : memref<2x512xf32, #tpu.memory_space<vmem>>, vector<2x512xf32>
    tpu.vector_store %arg11[%c0_81, %c0_82], %184 {strides = array<i32>} : memref<2x512xf32, #tpu.memory_space<vmem>>, vector<2x512xf32>,
    return
  }
}

</mosaic_0001>

<llo_original>
// kernel: simple_audio_encoder_forward.1
$region0: #{simple_audio_encoder_forward.1}
  #allocation0 [shape = 'u32[]', space=smem, size = 0x4, offset = 0x4, fixed_abs, tag = 'smem constant byte address 0x4 - core index']
  #allocation1 [shape = 'u32[72,128]{1,0:T(1,128)}', space=vmem, size = 0x9000, scoped, tag = 'internal scratch']
  %s0 = inlined_call_operand.vmem [shape: f32[128,3], index: 0, kind: input, shape index: {}]
  %s1 = inlined_call_operand.vmem [shape: f32[3,64], index: 1, kind: input, shape index: {}]
  %s2 = inlined_call_operand.vmem [shape: f32[1,64], index: 2, kind: input, shape index: {}]
  %s3 = inlined_call_operand.vmem [shape: bf16[3,64,128], index: 3, kind: input, shape index: {}]
  %s4 = inlined_call_operand.vmem [shape: f32[1,128], index: 4, kind: input, shape index: {}]
  %s5 = inlined_call_operand.vmem [shape: bf16[3,128,256], index: 5, kind: input, shape index: {}]
  %s6 = inlined_call_operand.vmem [shape: f32[1,256], index: 6, kind: input, shape index: {}]
  %s7 = inlined_call_operand.vmem [shape: bf16[3,256,512], index: 7, kind: input, shape index: {}]
  %s8 = inlined_call_operand.vmem [shape: f32[1,512], index: 8, kind: input, shape index: {}]
  %s9 = inlined_call_operand.vmem [shape: bf16[512,512], index: 9, kind: input, shape index: {}]
  %s10 = inlined_call_operand.vmem [shape: f32[1,512], index: 10, kind: input, shape index: {}]
  %s11 = inlined_call_operand.hbm [shape: f32[2,512], index: 11, kind: output, shape index: {}]
  %s12 = sld [smem:[#allocation0]]
  $region54: #{simple_audio_encoder_forward.1} parent=0
    _
  %s14 = ssub.s32 1, %s12
  %s15 = scalar_select 0, %s14, %s12
  $region1: #{simple_audio_encoder_forward.1} parent=0
    #allocation2 [shape = 'u8[4096]{0}', space=vmem, size = 0x1000, scoped, tag = 'output window, operand 0, single buffered']
    #allocation3 [shape = 's32[1]{0}', space=sflag, size = 0x4, scoped, tag = 'scoped memory for simple_audio_encoder_forward.1']
    %16 = vsyncpa [#allocation3], 0
    // Predicated region
    $region2: #{simple_audio_encoder_forward.1} parent=1 // pred_check
      _
    $region3: #{simple_audio_encoder_forward.1} parent=1 // pred_check_branch
      %18 = sbr.rel (0) target = $region5
    $region4: #{simple_audio_encoder_forward.1} parent=1 // pred_region
      _
    $region5: #{simple_audio_encoder_forward.1} parent=1 // pred_fallthru
      _
    // Predicated region
    $region6: #{simple_audio_encoder_forward.1} parent=1 // pred_check
      _
    $region7: #{simple_audio_encoder_forward.1} parent=1 // pred_check_branch
      %20 = sbr.rel (0) target = $region9
    $region8: #{simple_audio_encoder_forward.1} parent=1 // pred_region
      _
    $region9: #{simple_audio_encoder_forward.1} parent=1 // pred_fallthru
      _
    // Predicated region
    $region10: #{simple_audio_encoder_forward.1} parent=1 // pred_check
      _
    $region11: #{simple_audio_encoder_forward.1} parent=1 // pred_check_branch
      %22 = sbr.rel (0) target = $region13
    $region12: #{simple_audio_encoder_forward.1} parent=1 // pred_region
      _
    $region13: #{simple_audio_encoder_forward.1} parent=1 // pred_fallthru
      _
    // Predicated region
    $region14: #{simple_audio_encoder_forward.1} parent=1 // pred_check
      _
    $region15: #{simple_audio_encoder_forward.1} parent=1 // pred_check_branch
      %24 = sbr.rel (0) target = $region17
    $region16: #{simple_audio_encoder_forward.1} parent=1 // pred_region
      _
    $region17: #{simple_audio_encoder_forward.1} parent=1 // pred_fallthru
      _
    // Predicated region
    $region18: #{simple_audio_encoder_forward.1} parent=1 // pred_check
      _
    $region19: #{simple_audio_encoder_forward.1} parent=1 // pred_check_branch
      %26 = sbr.rel (0) target = $region21
    $region20: #{simple_audio_encoder_forward.1} parent=1 // pred_region
      _
    $region21: #{simple_audio_encoder_forward.1} parent=1 // pred_fallthru
      _
    // Predicated region
    $region22: #{simple_audio_encoder_forward.1} parent=1 // pred_check
      _
    $region23: #{simple_audio_encoder_forward.1} parent=1 // pred_check_branch
      %28 = sbr.rel (0) target = $region25
    $region24: #{simple_audio_encoder_forward.1} parent=1 // pred_region
      _
    $region25: #{simple_audio_encoder_forward.1} parent=1 // pred_fallthru
      _
    // Predicated region
    $region26: #{simple_audio_encoder_forward.1} parent=1 // pred_check
      _
    $region27: #{simple_audio_encoder_forward.1} parent=1 // pred_check_branch
      %30 = sbr.rel (0) target = $region29
    $region28: #{simple_audio_encoder_forward.1} parent=1 // pred_region
      _
    $region29: #{simple_audio_encoder_forward.1} parent=1 // pred_fallthru
      _
    // Predicated region
    $region30: #{simple_audio_encoder_forward.1} parent=1 // pred_check
      _
    $region31: #{simple_audio_encoder_forward.1} parent=1 // pred_check_branch
      %32 = sbr.rel (0) target = $region33
    $region32: #{simple_audio_encoder_forward.1} parent=1 // pred_region
      _
    $region33: #{simple_audio_encoder_forward.1} parent=1 // pred_fallthru
      _
    // Predicated region
    $region34: #{simple_audio_encoder_forward.1} parent=1 // pred_check
      _
    $region35: #{simple_audio_encoder_forward.1} parent=1 // pred_check_branch
      %34 = sbr.rel (0) target = $region37
    $region36: #{simple_audio_encoder_forward.1} parent=1 // pred_region
      _
    $region37: #{simple_audio_encoder_forward.1} parent=1 // pred_fallthru
      _
    // Predicated region
    $region38: #{simple_audio_encoder_forward.1} parent=1 // pred_check
      _
    $region39: #{simple_audio_encoder_forward.1} parent=1 // pred_check_branch
      %36 = sbr.rel (0) target = $region41
    $region40: #{simple_audio_encoder_forward.1} parent=1 // pred_region
      _
    $region41: #{simple_audio_encoder_forward.1} parent=1 // pred_fallthru
      _
    // Predicated region
    $region42: #{simple_audio_encoder_forward.1} parent=1 // pred_check
      _
    $region43: #{simple_audio_encoder_forward.1} parent=1 // pred_check_branch
      %38 = sbr.rel (0) target = $region45
    $region44: #{simple_audio_encoder_forward.1} parent=1 // pred_region
      _
    $region45: #{simple_audio_encoder_forward.1} parent=1 // pred_fallthru
      _
    %v40 = vld [vmem:[%s0] sm:$0xff]
    %v41 = vld [vmem:[%s0 + $0x8] sm:$0xff]
    %v42 = vld [vmem:[%s0 + $0x10] sm:$0xff]
    %v43 = vld [vmem:[%s0 + $0x18] sm:$0xff]
    %v44 = vld [vmem:[%s0 + $0x20] sm:$0xff]
    %v45 = vld [vmem:[%s0 + $0x28] sm:$0xff]
    %v46 = vld [vmem:[%s0 + $0x30] sm:$0xff]
    %v47 = vld [vmem:[%s0 + $0x38] sm:$0xff]
    %v48 = vld [vmem:[%s0 + $0x40] sm:$0xff]
    %v49 = vld [vmem:[%s0 + $0x48] sm:$0xff]
    %v50 = vld [vmem:[%s0 + $0x50] sm:$0xff]
    %v51 = vld [vmem:[%s0 + $0x58] sm:$0xff]
    %v52 = vld [vmem:[%s0 + $0x60] sm:$0xff]
    %v53 = vld [vmem:[%s0 + $0x68] sm:$0xff]
    %v54 = vld [vmem:[%s0 + $0x70] sm:$0xff]
    %v55 = vld [vmem:[%s0 + $0x78] sm:$0xff]
    %v56 = vld [vmem:[%s1] sm:$0x7]
    %v57 = vld [vmem:[%s2] sm:$0x1]
    %v59 = vperm.slane %v57, 0
    %vm61 = vcmask 23552
    %v63 = vsel %vm61, %v40, 0
    %v66 = vsel %vm61, %v41, 0
    %v69 = vsel %vm61, %v42, 0
    %v72 = vsel %vm61, %v43, 0
    %v75 = vsel %vm61, %v44, 0
    %v78 = vsel %vm61, %v45, 0
    %v81 = vsel %vm61, %v46, 0
    %v84 = vsel %vm61, %v47, 0
    %v87 = vsel %vm61, %v48, 0
    %v90 = vsel %vm61, %v49, 0
    %v93 = vsel %vm61, %v50, 0
    %v96 = vsel %vm61, %v51, 0
    %v99 = vsel %vm61, %v52, 0
    %v102 = vsel %vm61, %v53, 0
    %v105 = vsel %vm61, %v54, 0
    %v108 = vsel %vm61, %v55, 0
    %vm110 = vcmask 1042432
    %v112 = vsel %vm110, %v56, 0
    %114 = vmatpush.msra.mxu0 0.0
    %115 = vmatpush.msra.mxu0 0.0
    %116 = vmatpush.msra.mxu0 0.0
    %117 = vmatpush.msra.mxu0 0.0
    %118 = vmatpush.msra.mxu0 0.0
    %119 = vmatpush.msra.mxu0 0.0
    %120 = vmatpush.msra.mxu0 0.0
    %121 = vmatpush.msra.mxu0 0.0
    %122 = vmatpush.msra.mxu0 0.0
    %123 = vmatpush.msra.mxu0 0.0
    %124 = vmatpush.msra.mxu0 0.0
    %125 = vmatpush.msra.mxu0 0.0
    %126 = vmatpush.msra.mxu0 0.0
    %127 = vmatpush.msra.mxu0 0.0
    %128 = vmatpush.msra.mxu0 0.0
    %129 = vmatpush.msra.mxu0 %v112
    %130 = vmatmul.f32.gmra.mxu0 %v63
    %v131 = vpop.f32.mrf.mxu0
    %v132 = vadd.f32 %v59, %v131
    %133 = vmatmul.f32.gmra.mxu0 %v66
    %v134 = vpop.f32.mrf.mxu0
    %v135 = vadd.f32 %v59, %v134
    %136 = vmatmul.f32.gmra.mxu0 %v69
    %v137 = vpop.f32.mrf.mxu0
    %v138 = vadd.f32 %v59, %v137
    %139 = vmatmul.f32.gmra.mxu0 %v72
    %v140 = vpop.f32.mrf.mxu0
    %v141 = vadd.f32 %v59, %v140
    %142 = vmatmul.f32.gmra.mxu0 %v75
    %v143 = vpop.f32.mrf.mxu0
    %v144 = vadd.f32 %v59, %v143
    %145 = vmatmul.f32.gmra.mxu0 %v78
    %v146 = vpop.f32.mrf.mxu0
    %v147 = vadd.f32 %v59, %v146
    %148 = vmatmul.f32.gmra.mxu0 %v81
    %v149 = vpop.f32.mrf.mxu0
    %v150 = vadd.f32 %v59, %v149
    %151 = vmatmul.f32.gmra.mxu0 %v84
    %v152 = vpop.f32.mrf.mxu0
    %v153 = vadd.f32 %v59, %v152
    %154 = vmatmul.f32.gmra.mxu0 %v87
    %v155 = vpop.f32.mrf.mxu0
    %v156 = vadd.f32 %v59, %v155
    %157 = vmatmul.f32.gmra.mxu0 %v90
    %v158 = vpop.f32.mrf.mxu0
    %v159 = vadd.f32 %v59, %v158
    %160 = vmatmul.f32.gmra.mxu0 %v93
    %v161 = vpop.f32.mrf.mxu0
    %v162 = vadd.f32 %v59, %v161
    %163 = vmatmul.f32.gmra.mxu0 %v96
    %v164 = vpop.f32.mrf.mxu0
    %v165 = vadd.f32 %v59, %v164
    %166 = vmatmul.f32.gmra.mxu0 %v99
    %v167 = vpop.f32.mrf.mxu0
    %v168 = vadd.f32 %v59, %v167
    %169 = vmatmul.f32.gmra.mxu0 %v102
    %v170 = vpop.f32.mrf.mxu0
    %v171 = vadd.f32 %v59, %v170
    %172 = vmatmul.f32.gmra.mxu0 %v105
    %v173 = vpop.f32.mrf.mxu0
    %v174 = vadd.f32 %v59, %v173
    %175 = vmatmul.f32.gmra.mxu0 %v108
    %v176 = vpop.f32.mrf.mxu0
    %v177 = vadd.f32 %v59, %v176
    %178 = vdwg.mxu0
    %v179 = vmax.f32 %v132, 0.0
    %v180 = vmax.f32 %v135, 0.0
    %v181 = vmax.f32 %v138, 0.0
    %v182 = vmax.f32 %v141, 0.0
    %v183 = vmax.f32 %v144, 0.0
    %v184 = vmax.f32 %v147, 0.0
    %v185 = vmax.f32 %v150, 0.0
    %v186 = vmax.f32 %v153, 0.0
    %v187 = vmax.f32 %v156, 0.0
    %v188 = vmax.f32 %v159, 0.0
    %v189 = vmax.f32 %v162, 0.0
    %v190 = vmax.f32 %v165, 0.0
    %v191 = vmax.f32 %v168, 0.0
    %v192 = vmax.f32 %v171, 0.0
    %v193 = vmax.f32 %v174, 0.0
    %v194 = vmax.f32 %v177, 0.0
    %v195 = vlaneseq
    %v196 = vshrl.u32 %v195, 7
    %v197 = vadd.s32 %v196, 8
    %v198 = vadd.s32 %v196, 16
    %v199 = vadd.s32 %v196, 24
    %v200 = vadd.s32 %v196, 32
    %v201 = vadd.s32 %v196, 40
    %v202 = vadd.s32 %v196, 48
    %v203 = vadd.s32 %v196, 56
    %v204 = vlaneseq
    %v205 = vand.u32 %v204, 127
    %v206 = vmul.u32 %v196, 2
    %v207 = vmul.u32 %v197, 2
    %v208 = vmul.u32 %v198, 2
    %v209 = vmul.u32 %v199, 2
    %v210 = vmul.u32 %v200, 2
    %v211 = vmul.u32 %v201, 2
    %v212 = vmul.u32 %v202, 2
    %v213 = vmul.u32 %v203, 2
    %v214 = vadd.s32 %v206, 4294967295
    %v215 = vadd.s32 %v207, 4294967295
    %v216 = vadd.s32 %v208, 4294967295
    %v217 = vadd.s32 %v209, 4294967295
    %v218 = vadd.s32 %v210, 4294967295
    %v219 = vadd.s32 %v211, 4294967295
    %v220 = vadd.s32 %v212, 4294967295
    %v221 = vadd.s32 %v213, 4294967295
    %vm222 = vcmp.eq.s32.totalorder %v205, %v214
    %vm223 = vcmp.eq.s32.totalorder %v205, %v215
    %vm224 = vcmp.eq.s32.totalorder %v205, %v216
    %vm225 = vcmp.eq.s32.totalorder %v205, %v217
    %vm226 = vcmp.eq.s32.totalorder %v205, %v218
    %vm227 = vcmp.eq.s32.totalorder %v205, %v219
    %vm228 = vcmp.eq.s32.totalorder %v205, %v220
    %vm229 = vcmp.eq.s32.totalorder %v205, %v221
    %vm230 = vcmp.ne.s32.totalorder %v205, 63
    %vm231 = vmand %vm222, %vm230
    %vm232 = vmand %vm223, %vm230
    %vm233 = vmand %vm224, %vm230
    %vm234 = vmand %vm225, %vm230
    %vm235 = vmand %vm226, %vm230
    %vm236 = vmand %vm227, %vm230
    %vm237 = vmand %vm228, %vm230
    %vm238 = vmand %vm229, %vm230
    %v239 = vsel %vm231, 1, 0
    %v240 = vsel %vm232, 1, 0
    %v241 = vsel %vm233, 1, 0
    %v242 = vsel %vm234, 1, 0
    %v243 = vsel %vm235, 1, 0
    %v244 = vsel %vm236, 1, 0
    %v245 = vsel %vm237, 1, 0
    %v246 = vsel %vm238, 1, 0
    %v247 = vcvt.s32.f32 %v239
    %v248 = vcvt.s32.f32 %v240
    %v249 = vcvt.s32.f32 %v241
    %v250 = vcvt.s32.f32 %v242
    %v251 = vcvt.s32.f32 %v243
    %v252 = vcvt.s32.f32 %v244
    %v253 = vcvt.s32.f32 %v245
    %v254 = vcvt.s32.f32 %v246
    %255 = vmatpush.msra.mxu0 %v194
    %256 = vmatpush.msra.mxu0 %v193
    %257 = vmatpush.msra.mxu0 %v192
    %258 = vmatpush.msra.mxu0 %v191
    %259 = vmatpush.msra.mxu0 %v190
    %260 = vmatpush.msra.mxu0 %v189
    %261 = vmatpush.msra.mxu0 %v188
    %262 = vmatpush.msra.mxu0 %v187
    %263 = vmatpush.msra.mxu0 %v186
    %264 = vmatpush.msra.mxu0 %v185
    %265 = vmatpush.msra.mxu0 %v184
    %266 = vmatpush.msra.mxu0 %v183
    %267 = vmatpush.msra.mxu0 %v182
    %268 = vmatpush.msra.mxu0 %v181
    %269 = vmatpush.msra.mxu0 %v180
    %270 = vmatpush.msra.mxu0 %v179
    %271 = vmatmul.f32.gmra.mxu0 %v247
    %v272 = vpop.f32.mrf.mxu0
    %v273 = vadd.f32 0.0, %v272
    %274 = vmatmul.f32.gmra.mxu0 %v248
    %v275 = vpop.f32.mrf.mxu0
    %v276 = vadd.f32 0.0, %v275
    %277 = vmatmul.f32.gmra.mxu0 %v249
    %v278 = vpop.f32.mrf.mxu0
    %v279 = vadd.f32 0.0, %v278
    %280 = vmatmul.f32.gmra.mxu0 %v250
    %v281 = vpop.f32.mrf.mxu0
    %v282 = vadd.f32 0.0, %v281
    %283 = vmatmul.f32.gmra.mxu0 %v251
    %v284 = vpop.f32.mrf.mxu0
    %v285 = vadd.f32 0.0, %v284
    %286 = vmatmul.f32.gmra.mxu0 %v252
    %v287 = vpop.f32.mrf.mxu0
    %v288 = vadd.f32 0.0, %v287
    %289 = vmatmul.f32.gmra.mxu0 %v253
    %v290 = vpop.f32.mrf.mxu0
    %v291 = vadd.f32 0.0, %v290
    %292 = vmatmul.f32.gmra.mxu0 %v254
    %v293 = vpop.f32.mrf.mxu0
    %v294 = vadd.f32 0.0, %v293
    %295 = vdwg.mxu0
    %v296 = vpack.c.bf16 %v276, %v273
    %v297 = vpack.c.bf16 %v282, %v279
    %v298 = vpack.c.bf16 %v288, %v285
    %v299 = vpack.c.bf16 %v294, %v291
    %v300 = vld [vmem:[%s3] sm:$0xf]
    %v301 = vld [vmem:[%s3 + $0x4] sm:$0xf]
    %v302 = vld [vmem:[%s3 + $0x8] sm:$0xf]
    %v303 = vld [vmem:[%s3 + $0xc] sm:$0xf]
    %v304 = vld [vmem:[%s3 + $0x10] sm:$0xf]
    %v305 = vld [vmem:[%s3 + $0x14] sm:$0xf]
    %v306 = vld [vmem:[%s3 + $0x18] sm:$0xf]
    %v307 = vld [vmem:[%s3 + $0x1c] sm:$0xf]
    %vm308 = vcmp.eq.s32.totalorder %v205, %v206
    %vm309 = vcmp.eq.s32.totalorder %v205, %v207
    %vm310 = vcmp.eq.s32.totalorder %v205, %v208
    %vm311 = vcmp.eq.s32.totalorder %v205, %v209
    %vm312 = vcmp.eq.s32.totalorder %v205, %v210
    %vm313 = vcmp.eq.s32.totalorder %v205, %v211
    %vm314 = vcmp.eq.s32.totalorder %v205, %v212
    %vm315 = vcmp.eq.s32.totalorder %v205, %v213
    %v316 = vsel %vm308, 1, 0
    %v317 = vsel %vm309, 1, 0
    %v318 = vsel %vm310, 1, 0
    %v319 = vsel %vm311, 1, 0
    %v320 = vsel %vm312, 1, 0
    %v321 = vsel %vm313, 1, 0
    %v322 = vsel %vm314, 1, 0
    %v323 = vsel %vm315, 1, 0
    %v324 = vcvt.s32.f32 %v316
    %v325 = vcvt.s32.f32 %v317
    %v326 = vcvt.s32.f32 %v318
    %v327 = vcvt.s32.f32 %v319
    %v328 = vcvt.s32.f32 %v320
    %v329 = vcvt.s32.f32 %v321
    %v330 = vcvt.s32.f32 %v322
    %v331 = vcvt.s32.f32 %v323
    %332 = vmatpush.msra.mxu0 %v194
    %333 = vmatpush.msra.mxu0 %v193
    %334 = vmatpush.msra.mxu0 %v192
    %335 = vmatpush.msra.mxu0 %v191
    %336 = vmatpush.msra.mxu0 %v190
    %337 = vmatpush.msra.mxu0 %v189
    %338 = vmatpush.msra.mxu0 %v188
    %339 = vmatpush.msra.mxu0 %v187
    %340 = vmatpush.msra.mxu0 %v186
    %341 = vmatpush.msra.mxu0 %v185
    %342 = vmatpush.msra.mxu0 %v184
    %343 = vmatpush.msra.mxu0 %v183
    %344 = vmatpush.msra.mxu0 %v182
    %345 = vmatpush.msra.mxu0 %v181
    %346 = vmatpush.msra.mxu0 %v180
    %347 = vmatpush.msra.mxu0 %v179
    %348 = vmatmul.f32.gmra.mxu0 %v324
    %v349 = vpop.f32.mrf.mxu0
    %v350 = vadd.f32 0.0, %v349
    %351 = vmatmul.f32.gmra.mxu0 %v325
    %v352 = vpop.f32.mrf.mxu0
    %v353 = vadd.f32 0.0, %v352
    %354 = vmatmul.f32.gmra.mxu0 %v326
    %v355 = vpop.f32.mrf.mxu0
    %v356 = vadd.f32 0.0, %v355
    %357 = vmatmul.f32.gmra.mxu0 %v327
    %v358 = vpop.f32.mrf.mxu0
    %v359 = vadd.f32 0.0, %v358
    %360 = vmatmul.f32.gmra.mxu0 %v328
    %v361 = vpop.f32.mrf.mxu0
    %v362 = vadd.f32 0.0, %v361
    %363 = vmatmul.f32.gmra.mxu0 %v329
    %v364 = vpop.f32.mrf.mxu0
    %v365 = vadd.f32 0.0, %v364
    %366 = vmatmul.f32.gmra.mxu0 %v330
    %v367 = vpop.f32.mrf.mxu0
    %v368 = vadd.f32 0.0, %v367
    %369 = vmatmul.f32.gmra.mxu0 %v331
    %v370 = vpop.f32.mrf.mxu0
    %v371 = vadd.f32 0.0, %v370
    %372 = vdwg.mxu0
    %v373 = vpack.c.bf16 %v353, %v350
    %v374 = vpack.c.bf16 %v359, %v356
    %v375 = vpack.c.bf16 %v365, %v362
    %v376 = vpack.c.bf16 %v371, %v368
    %s377 = scalar_lea.vmem %s3, 32
    %v378 = vld [vmem:[%s377] sm:$0xf]
    %v379 = vld [vmem:[%s377 + $0x4] sm:$0xf]
    %v380 = vld [vmem:[%s377 + $0x8] sm:$0xf]
    %v381 = vld [vmem:[%s377 + $0xc] sm:$0xf]
    %v382 = vld [vmem:[%s377 + $0x10] sm:$0xf]
    %v383 = vld [vmem:[%s377 + $0x14] sm:$0xf]
    %v384 = vld [vmem:[%s377 + $0x18] sm:$0xf]
    %v385 = vld [vmem:[%s377 + $0x1c] sm:$0xf]
    %v394 = vunpack.c.l.b16 %v378
    %v395 = vunpack.c.l.b16 %v379
    %v396 = vunpack.c.l.b16 %v380
    %v397 = vunpack.c.l.b16 %v381
    %v398 = vunpack.c.l.b16 %v382
    %v399 = vunpack.c.l.b16 %v383
    %v400 = vunpack.c.l.b16 %v384
    %v401 = vunpack.c.l.b16 %v385
    %v402 = vpack.c.b16 %v395, %v394
    %v403 = vpack.c.b16 %v397, %v396
    %v404 = vpack.c.b16 %v399, %v398
    %v405 = vpack.c.b16 %v401, %v400
    %vm410 = vcmask 523264
    %v412 = vsel %vm410, %v373, 0
    %v415 = vsel %vm410, %v374, 0
    %v418 = vsel %vm410, %v375, 0
    %v421 = vsel %vm410, %v376, 0
    %423 = vmatpush.bf16.msra.mxu0 0
    %424 = vmatpush.bf16.msra.mxu0 0
    %425 = vmatpush.bf16.msra.mxu0 0
    %426 = vmatpush.bf16.msra.mxu0 0
    %427 = vmatpush.bf16.msra.mxu0 %v405
    %428 = vmatpush.bf16.msra.mxu0 %v404
    %429 = vmatpush.bf16.msra.mxu0 %v403
    %430 = vmatpush.bf16.msra.mxu0 %v402
    %431 = vmatmul.bf16.gmra.mxu0 %v412
    %v432 = vpop.f32.mrf.mxu0
    %v433 = vadd.f32 0.0, %v432
    %v434 = vpop.f32.mrf.mxu0
    %v435 = vadd.f32 0.0, %v434
    %436 = vmatmul.bf16.gmra.mxu0 %v415
    %v437 = vpop.f32.mrf.mxu0
    %v438 = vadd.f32 0.0, %v437
    %v439 = vpop.f32.mrf.mxu0
    %v440 = vadd.f32 0.0, %v439
    %441 = vmatmul.bf16.gmra.mxu0 %v418
    %v442 = vpop.f32.mrf.mxu0
    %v443 = vadd.f32 0.0, %v442
    %v444 = vpop.f32.mrf.mxu0
    %v445 = vadd.f32 0.0, %v444
    %446 = vmatmul.bf16.gmra.mxu0 %v421
    %v447 = vpop.f32.mrf.mxu0
    %v448 = vadd.f32 0.0, %v447
    %v449 = vpop.f32.mrf.mxu0
    %v450 = vadd.f32 0.0, %v449
    %451 = vdwg.mxu0
    %v452 = vadd.s32 %v206, 1
    %v453 = vadd.s32 %v207, 1
    %v454 = vadd.s32 %v208, 1
    %v455 = vadd.s32 %v209, 1
    %v456 = vadd.s32 %v210, 1
    %v457 = vadd.s32 %v211, 1
    %v458 = vadd.s32 %v212, 1
    %v459 = vadd.s32 %v213, 1
    %vm460 = vcmp.eq.s32.totalorder %v205, %v452
    %vm461 = vcmp.eq.s32.totalorder %v205, %v453
    %vm462 = vcmp.eq.s32.totalorder %v205, %v454
    %vm463 = vcmp.eq.s32.totalorder %v205, %v455
    %vm464 = vcmp.eq.s32.totalorder %v205, %v456
    %vm465 = vcmp.eq.s32.totalorder %v205, %v457
    %vm466 = vcmp.eq.s32.totalorder %v205, %v458
    %vm467 = vcmp.eq.s32.totalorder %v205, %v459
    %v468 = vsel %vm460, 1, 0
    %v469 = vsel %vm461, 1, 0
    %v470 = vsel %vm462, 1, 0
    %v471 = vsel %vm463, 1, 0
    %v472 = vsel %vm464, 1, 0
    %v473 = vsel %vm465, 1, 0
    %v474 = vsel %vm466, 1, 0
    %v475 = vsel %vm467, 1, 0
    %v476 = vcvt.s32.f32 %v468
    %v477 = vcvt.s32.f32 %v469
    %v478 = vcvt.s32.f32 %v470
    %v479 = vcvt.s32.f32 %v471
    %v480 = vcvt.s32.f32 %v472
    %v481 = vcvt.s32.f32 %v473
    %v482 = vcvt.s32.f32 %v474
    %v483 = vcvt.s32.f32 %v475
    %484 = vmatpush.msra.mxu0 %v194
    %485 = vmatpush.msra.mxu0 %v193
    %486 = vmatpush.msra.mxu0 %v192
    %487 = vmatpush.msra.mxu0 %v191
    %488 = vmatpush.msra.mxu0 %v190
    %489 = vmatpush.msra.mxu0 %v189
    %490 = vmatpush.msra.mxu0 %v188
    %491 = vmatpush.msra.mxu0 %v187
    %492 = vmatpush.msra.mxu0 %v186
    %493 = vmatpush.msra.mxu0 %v185
    %494 = vmatpush.msra.mxu0 %v184
    %495 = vmatpush.msra.mxu0 %v183
    %496 = vmatpush.msra.mxu0 %v182
    %497 = vmatpush.msra.mxu0 %v181
    %498 = vmatpush.msra.mxu0 %v180
    %499 = vmatpush.msra.mxu0 %v179
    %500 = vmatmul.f32.gmra.mxu0 %v476
    %v501 = vpop.f32.mrf.mxu0
    %v502 = vadd.f32 0.0, %v501
    %503 = vmatmul.f32.gmra.mxu0 %v477
    %v504 = vpop.f32.mrf.mxu0
    %v505 = vadd.f32 0.0, %v504
    %506 = vmatmul.f32.gmra.mxu0 %v478
    %v507 = vpop.f32.mrf.mxu0
    %v508 = vadd.f32 0.0, %v507
    %509 = vmatmul.f32.gmra.mxu0 %v479
    %v510 = vpop.f32.mrf.mxu0
    %v511 = vadd.f32 0.0, %v510
    %512 = vmatmul.f32.gmra.mxu0 %v480
    %v513 = vpop.f32.mrf.mxu0
    %v514 = vadd.f32 0.0, %v513
    %515 = vmatmul.f32.gmra.mxu0 %v481
    %v516 = vpop.f32.mrf.mxu0
    %v517 = vadd.f32 0.0, %v516
    %518 = vmatmul.f32.gmra.mxu0 %v482
    %v519 = vpop.f32.mrf.mxu0
    %v520 = vadd.f32 0.0, %v519
    %521 = vmatmul.f32.gmra.mxu0 %v483
    %v522 = vpop.f32.mrf.mxu0
    %v523 = vadd.f32 0.0, %v522
    %524 = vdwg.mxu0
    %v525 = vpack.c.bf16 %v505, %v502
    %v526 = vpack.c.bf16 %v511, %v508
    %v527 = vpack.c.bf16 %v517, %v514
    %v528 = vpack.c.bf16 %v523, %v520
    %s529 = scalar_lea.vmem %s3, 64
    %v530 = vld [vmem:[%s529] sm:$0xf]
    %v531 = vld [vmem:[%s529 + $0x4] sm:$0xf]
    %v532 = vld [vmem:[%s529 + $0x8] sm:$0xf]
    %v533 = vld [vmem:[%s529 + $0xc] sm:$0xf]
    %v534 = vld [vmem:[%s529 + $0x10] sm:$0xf]
    %v535 = vld [vmem:[%s529 + $0x14] sm:$0xf]
    %v536 = vld [vmem:[%s529 + $0x18] sm:$0xf]
    %v537 = vld [vmem:[%s529 + $0x1c] sm:$0xf]
    %v546 = vunpack.c.l.b16 %v530
    %v547 = vunpack.c.l.b16 %v531
    %v548 = vunpack.c.l.b16 %v532
    %v549 = vunpack.c.l.b16 %v533
    %v550 = vunpack.c.l.b16 %v534
    %v551 = vunpack.c.l.b16 %v535
    %v552 = vunpack.c.l.b16 %v536
    %v553 = vunpack.c.l.b16 %v537
    %v554 = vpack.c.b16 %v547, %v546
    %v555 = vpack.c.b16 %v549, %v548
    %v556 = vpack.c.b16 %v551, %v550
    %v557 = vpack.c.b16 %v553, %v552
    %v563 = vsel %vm410, %v525, 0
    %v566 = vsel %vm410, %v526, 0
    %v569 = vsel %vm410, %v527, 0
    %v572 = vsel %vm410, %v528, 0
    %574 = vmatpush.bf16.msra.mxu0 0
    %575 = vmatpush.bf16.msra.mxu0 0
    %576 = vmatpush.bf16.msra.mxu0 0
    %577 = vmatpush.bf16.msra.mxu0 0
    %578 = vmatpush.bf16.msra.mxu0 %v557
    %579 = vmatpush.bf16.msra.mxu0 %v556
    %580 = vmatpush.bf16.msra.mxu0 %v555
    %581 = vmatpush.bf16.msra.mxu0 %v554
    %582 = vmatmul.bf16.gmra.mxu0 %v563
    %v583 = vpop.f32.mrf.mxu0
    %v584 = vadd.f32 0.0, %v583
    %v585 = vpop.f32.mrf.mxu0
    %v586 = vadd.f32 0.0, %v585
    %587 = vmatmul.bf16.gmra.mxu0 %v566
    %v588 = vpop.f32.mrf.mxu0
    %v589 = vadd.f32 0.0, %v588
    %v590 = vpop.f32.mrf.mxu0
    %v591 = vadd.f32 0.0, %v590
    %592 = vmatmul.bf16.gmra.mxu0 %v569
    %v593 = vpop.f32.mrf.mxu0
    %v594 = vadd.f32 0.0, %v593
    %v595 = vpop.f32.mrf.mxu0
    %v596 = vadd.f32 0.0, %v595
    %597 = vmatmul.bf16.gmra.mxu0 %v572
    %v598 = vpop.f32.mrf.mxu0
    %v599 = vadd.f32 0.0, %v598
    %v600 = vpop.f32.mrf.mxu0
    %v601 = vadd.f32 0.0, %v600
    %602 = vdwg.mxu0
    %v611 = vunpack.c.l.b16 %v300
    %v612 = vunpack.c.l.b16 %v301
    %v613 = vunpack.c.l.b16 %v302
    %v614 = vunpack.c.l.b16 %v303
    %v615 = vunpack.c.l.b16 %v304
    %v616 = vunpack.c.l.b16 %v305
    %v617 = vunpack.c.l.b16 %v306
    %v618 = vunpack.c.l.b16 %v307
    %v619 = vpack.c.b16 %v612, %v611
    %v620 = vpack.c.b16 %v614, %v613
    %v621 = vpack.c.b16 %v616, %v615
    %v622 = vpack.c.b16 %v618, %v617
    %v628 = vsel %vm410, %v296, 0
    %v631 = vsel %vm410, %v297, 0
    %v634 = vsel %vm410, %v298, 0
    %v637 = vsel %vm410, %v299, 0
    %639 = vmatpush.bf16.msra.mxu0 0
    %640 = vmatpush.bf16.msra.mxu0 0
    %641 = vmatpush.bf16.msra.mxu0 0
    %642 = vmatpush.bf16.msra.mxu0 0
    %643 = vmatpush.bf16.msra.mxu0 %v622
    %644 = vmatpush.bf16.msra.mxu0 %v621
    %645 = vmatpush.bf16.msra.mxu0 %v620
    %646 = vmatpush.bf16.msra.mxu0 %v619
    %647 = vmatmul.bf16.gmra.mxu0 %v628
    %v648 = vpop.f32.mrf.mxu0
    %v649 = vadd.f32 %v433, %v648
    %v650 = vpop.f32.mrf.mxu0
    %v651 = vadd.f32 %v435, %v650
    %652 = vmatmul.bf16.gmra.mxu0 %v631
    %v653 = vpop.f32.mrf.mxu0
    %v654 = vadd.f32 %v438, %v653
    %v655 = vpop.f32.mrf.mxu0
    %v656 = vadd.f32 %v440, %v655
    %657 = vmatmul.bf16.gmra.mxu0 %v634
    %v658 = vpop.f32.mrf.mxu0
    %v659 = vadd.f32 %v443, %v658
    %v660 = vpop.f32.mrf.mxu0
    %v661 = vadd.f32 %v445, %v660
    %662 = vmatmul.bf16.gmra.mxu0 %v637
    %v663 = vpop.f32.mrf.mxu0
    %v664 = vadd.f32 %v448, %v663
    %v665 = vpop.f32.mrf.mxu0
    %v666 = vadd.f32 %v450, %v665
    %667 = vdwg.mxu0
    %v668 = vadd.f32 %v649, %v584
    %v669 = vadd.f32 %v651, %v586
    %v670 = vadd.f32 %v654, %v589
    %v671 = vadd.f32 %v656, %v591
    %v672 = vadd.f32 %v659, %v594
    %v673 = vadd.f32 %v661, %v596
    %v674 = vadd.f32 %v664, %v599
    %v675 = vadd.f32 %v666, %v601
    %v676 = vld [vmem:[%s4] sm:$0x1]
    %v678 = vperm.slane %v676, 0
    %v680 = vadd.f32 %v668, %v678
    %v681 = vadd.f32 %v669, %v678
    %v682 = vadd.f32 %v670, %v678
    %v683 = vadd.f32 %v671, %v678
    %v684 = vadd.f32 %v672, %v678
    %v685 = vadd.f32 %v673, %v678
    %v686 = vadd.f32 %v674, %v678
    %v687 = vadd.f32 %v675, %v678
    %v688 = vmax.f32 %v680, 0.0
    %v689 = vmax.f32 %v681, 0.0
    %v690 = vmax.f32 %v682, 0.0
    %v691 = vmax.f32 %v683, 0.0
    %v692 = vmax.f32 %v684, 0.0
    %v693 = vmax.f32 %v685, 0.0
    %v694 = vmax.f32 %v686, 0.0
    %v695 = vmax.f32 %v687, 0.0
    %vm696 = vcmp.ne.s32.totalorder %v205, 31
    %vm697 = vmand %vm222, %vm696
    %vm698 = vmand %vm223, %vm696
    %vm699 = vmand %vm224, %vm696
    %vm700 = vmand %vm225, %vm696
    %v701 = vsel %vm697, 1, 0
    %v702 = vsel %vm698, 1, 0
    %v703 = vsel %vm699, 1, 0
    %v704 = vsel %vm700, 1, 0
    %v705 = vcvt.s32.f32 %v701
    %v706 = vcvt.s32.f32 %v702
    %v707 = vcvt.s32.f32 %v703
    %v708 = vcvt.s32.f32 %v704
    %v710 = vsel %vm410, %v705, 0
    %v713 = vsel %vm410, %v706, 0
    %v716 = vsel %vm410, %v707, 0
    %v719 = vsel %vm410, %v708, 0
    %721 = vmatpush.msra.mxu0 0.0
    %722 = vmatpush.msra.mxu0 0.0
    %723 = vmatpush.msra.mxu0 0.0
    %724 = vmatpush.msra.mxu0 0.0
    %725 = vmatpush.msra.mxu0 0.0
    %726 = vmatpush.msra.mxu0 0.0
    %727 = vmatpush.msra.mxu0 0.0
    %728 = vmatpush.msra.mxu0 0.0
    %729 = vmatpush.msra.mxu0 %v695
    %730 = vmatpush.msra.mxu0 %v694
    %731 = vmatpush.msra.mxu0 %v693
    %732 = vmatpush.msra.mxu0 %v692
    %733 = vmatpush.msra.mxu0 %v691
    %734 = vmatpush.msra.mxu0 %v690
    %735 = vmatpush.msra.mxu0 %v689
    %736 = vmatpush.msra.mxu0 %v688
    %737 = vmatmul.f32.gmra.mxu0 %v710
    %v738 = vpop.f32.mrf.mxu0
    %v739 = vadd.f32 0.0, %v738
    %740 = vmatmul.f32.gmra.mxu0 %v713
    %v741 = vpop.f32.mrf.mxu0
    %v742 = vadd.f32 0.0, %v741
    %743 = vmatmul.f32.gmra.mxu0 %v716
    %v744 = vpop.f32.mrf.mxu0
    %v745 = vadd.f32 0.0, %v744
    %746 = vmatmul.f32.gmra.mxu0 %v719
    %v747 = vpop.f32.mrf.mxu0
    %v748 = vadd.f32 0.0, %v747
    %749 = vdwg.mxu0
    %v750 = vpack.c.bf16 %v742, %v739
    %v751 = vpack.c.bf16 %v748, %v745
    %v752 = vld [vmem:[%s5] sm:$0xff]
    %v753 = vld [vmem:[%s5 + $0x8] sm:$0xff]
    %v754 = vld [vmem:[%s5 + $0x10] sm:$0xff]
    %v755 = vld [vmem:[%s5 + $0x18] sm:$0xff]
    %v756 = vld [vmem:[%s5 + $0x20] sm:$0xff]
    %v757 = vld [vmem:[%s5 + $0x28] sm:$0xff]
    %v758 = vld [vmem:[%s5 + $0x30] sm:$0xff]
    %v759 = vld [vmem:[%s5 + $0x38] sm:$0xff]
    %v760 = vld [vmem:[%s5 + $0x40] sm:$0xff]
    %v761 = vld [vmem:[%s5 + $0x48] sm:$0xff]
    %v762 = vld [vmem:[%s5 + $0x50] sm:$0xff]
    %v763 = vld [vmem:[%s5 + $0x58] sm:$0xff]
    %v764 = vld [vmem:[%s5 + $0x60] sm:$0xff]
    %v765 = vld [vmem:[%s5 + $0x68] sm:$0xff]
    %v766 = vld [vmem:[%s5 + $0x70] sm:$0xff]
    %v767 = vld [vmem:[%s5 + $0x78] sm:$0xff]
    %v769 = vsel %vm410, %v324, 0
    %v772 = vsel %vm410, %v325, 0
    %v775 = vsel %vm410, %v326, 0
    %v778 = vsel %vm410, %v327, 0
    %780 = vmatpush.msra.mxu0 0.0
    %781 = vmatpush.msra.mxu0 0.0
    %782 = vmatpush.msra.mxu0 0.0
    %783 = vmatpush.msra.mxu0 0.0
    %784 = vmatpush.msra.mxu0 0.0
    %785 = vmatpush.msra.mxu0 0.0
    %786 = vmatpush.msra.mxu0 0.0
    %787 = vmatpush.msra.mxu0 0.0
    %788 = vmatpush.msra.mxu0 %v695
    %789 = vmatpush.msra.mxu0 %v694
    %790 = vmatpush.msra.mxu0 %v693
    %791 = vmatpush.msra.mxu0 %v692
    %792 = vmatpush.msra.mxu0 %v691
    %793 = vmatpush.msra.mxu0 %v690
    %794 = vmatpush.msra.mxu0 %v689
    %795 = vmatpush.msra.mxu0 %v688
    %796 = vmatmul.f32.gmra.mxu0 %v769
    %v797 = vpop.f32.mrf.mxu0
    %v798 = vadd.f32 0.0, %v797
    %799 = vmatmul.f32.gmra.mxu0 %v772
    %v800 = vpop.f32.mrf.mxu0
    %v801 = vadd.f32 0.0, %v800
    %802 = vmatmul.f32.gmra.mxu0 %v775
    %v803 = vpop.f32.mrf.mxu0
    %v804 = vadd.f32 0.0, %v803
    %805 = vmatmul.f32.gmra.mxu0 %v778
    %v806 = vpop.f32.mrf.mxu0
    %v807 = vadd.f32 0.0, %v806
    %808 = vdwg.mxu0
    %v809 = vpack.c.bf16 %v801, %v798
    %v810 = vpack.c.bf16 %v807, %v804
    %s811 = scalar_lea.vmem %s5, 128
    %v812 = vld [vmem:[%s811] sm:$0xff]
    %v813 = vld [vmem:[%s811 + $0x8] sm:$0xff]
    %v814 = vld [vmem:[%s811 + $0x10] sm:$0xff]
    %v815 = vld [vmem:[%s811 + $0x18] sm:$0xff]
    %v816 = vld [vmem:[%s811 + $0x20] sm:$0xff]
    %v817 = vld [vmem:[%s811 + $0x28] sm:$0xff]
    %v818 = vld [vmem:[%s811 + $0x30] sm:$0xff]
    %v819 = vld [vmem:[%s811 + $0x38] sm:$0xff]
    %v820 = vld [vmem:[%s811 + $0x40] sm:$0xff]
    %v821 = vld [vmem:[%s811 + $0x48] sm:$0xff]
    %v822 = vld [vmem:[%s811 + $0x50] sm:$0xff]
    %v823 = vld [vmem:[%s811 + $0x58] sm:$0xff]
    %v824 = vld [vmem:[%s811 + $0x60] sm:$0xff]
    %v825 = vld [vmem:[%s811 + $0x68] sm:$0xff]
    %v826 = vld [vmem:[%s811 + $0x70] sm:$0xff]
    %v827 = vld [vmem:[%s811 + $0x78] sm:$0xff]
    %v844 = vunpack.c.l.b16 %v812
    %v845 = vunpack.c.h.b16 %v812
    %v846 = vunpack.c.l.b16 %v813
    %v847 = vunpack.c.h.b16 %v813
    %v848 = vunpack.c.l.b16 %v814
    %v849 = vunpack.c.h.b16 %v814
    %v850 = vunpack.c.l.b16 %v815
    %v851 = vunpack.c.h.b16 %v815
    %v852 = vunpack.c.l.b16 %v816
    %v853 = vunpack.c.h.b16 %v816
    %v854 = vunpack.c.l.b16 %v817
    %v855 = vunpack.c.h.b16 %v817
    %v856 = vunpack.c.l.b16 %v818
    %v857 = vunpack.c.h.b16 %v818
    %v858 = vunpack.c.l.b16 %v819
    %v859 = vunpack.c.h.b16 %v819
    %v860 = vunpack.c.l.b16 %v820
    %v861 = vunpack.c.h.b16 %v820
    %v862 = vunpack.c.l.b16 %v821
    %v863 = vunpack.c.h.b16 %v821
    %v864 = vunpack.c.l.b16 %v822
    %v865 = vunpack.c.h.b16 %v822
    %v866 = vunpack.c.l.b16 %v823
    %v867 = vunpack.c.h.b16 %v823
    %v868 = vunpack.c.l.b16 %v824
    %v869 = vunpack.c.h.b16 %v824
    %v870 = vunpack.c.l.b16 %v825
    %v871 = vunpack.c.h.b16 %v825
    %v872 = vunpack.c.l.b16 %v826
    %v873 = vunpack.c.h.b16 %v826
    %v874 = vunpack.c.l.b16 %v827
    %v875 = vunpack.c.h.b16 %v827
    %v876 = vpack.c.b16 %v846, %v844
    %v877 = vpack.c.b16 %v847, %v845
    %v878 = vpack.c.b16 %v850, %v848
    %v879 = vpack.c.b16 %v851, %v849
    %v880 = vpack.c.b16 %v854, %v852
    %v881 = vpack.c.b16 %v855, %v853
    %v882 = vpack.c.b16 %v858, %v856
    %v883 = vpack.c.b16 %v859, %v857
    %v884 = vpack.c.b16 %v862, %v860
    %v885 = vpack.c.b16 %v863, %v861
    %v886 = vpack.c.b16 %v866, %v864
    %v887 = vpack.c.b16 %v867, %v865
    %v888 = vpack.c.b16 %v870, %v868
    %v889 = vpack.c.b16 %v871, %v869
    %v890 = vpack.c.b16 %v874, %v872
    %v891 = vpack.c.b16 %v875, %v873
    %908 = vmatpush.bf16.msra.mxu0 %v890
    %909 = vmatpush.bf16.msra.mxu0 %v888
    %910 = vmatpush.bf16.msra.mxu0 %v886
    %911 = vmatpush.bf16.msra.mxu0 %v884
    %912 = vmatpush.bf16.msra.mxu0 %v882
    %913 = vmatpush.bf16.msra.mxu0 %v880
    %914 = vmatpush.bf16.msra.mxu0 %v878
    %915 = vmatpush.bf16.msra.mxu0 %v876
    %916 = vmatmul.bf16.gmra.mxu0 %v809
    %v917 = vpop.f32.mrf.mxu0
    %v918 = vadd.f32 0.0, %v917
    %v919 = vpop.f32.mrf.mxu0
    %v920 = vadd.f32 0.0, %v919
    %921 = vmatmul.bf16.gmra.mxu0 %v810
    %v922 = vpop.f32.mrf.mxu0
    %v923 = vadd.f32 0.0, %v922
    %v924 = vpop.f32.mrf.mxu0
    %v925 = vadd.f32 0.0, %v924
    %926 = vdwg.mxu0
    %927 = vmatpush.bf16.msra.mxu0 %v891
    %928 = vmatpush.bf16.msra.mxu0 %v889
    %929 = vmatpush.bf16.msra.mxu0 %v887
    %930 = vmatpush.bf16.msra.mxu0 %v885
    %931 = vmatpush.bf16.msra.mxu0 %v883
    %932 = vmatpush.bf16.msra.mxu0 %v881
    %933 = vmatpush.bf16.msra.mxu0 %v879
    %934 = vmatpush.bf16.msra.mxu0 %v877
    %935 = vmatmul.bf16.gmra.mxu0 %v809
    %v936 = vpop.f32.mrf.mxu0
    %v937 = vadd.f32 0.0, %v936
    %v938 = vpop.f32.mrf.mxu0
    %v939 = vadd.f32 0.0, %v938
    %940 = vmatmul.bf16.gmra.mxu0 %v810
    %v941 = vpop.f32.mrf.mxu0
    %v942 = vadd.f32 0.0, %v941
    %v943 = vpop.f32.mrf.mxu0
    %v944 = vadd.f32 0.0, %v943
    %945 = vdwg.mxu0
    %v947 = vsel %vm410, %v476, 0
    %v950 = vsel %vm410, %v477, 0
    %v953 = vsel %vm410, %v478, 0
    %v956 = vsel %vm410, %v479, 0
    %958 = vmatpush.msra.mxu0 0.0
    %959 = vmatpush.msra.mxu0 0.0
    %960 = vmatpush.msra.mxu0 0.0
    %961 = vmatpush.msra.mxu0 0.0
    %962 = vmatpush.msra.mxu0 0.0
    %963 = vmatpush.msra.mxu0 0.0
    %964 = vmatpush.msra.mxu0 0.0
    %965 = vmatpush.msra.mxu0 0.0
    %966 = vmatpush.msra.mxu0 %v695
    %967 = vmatpush.msra.mxu0 %v694
    %968 = vmatpush.msra.mxu0 %v693
    %969 = vmatpush.msra.mxu0 %v692
    %970 = vmatpush.msra.mxu0 %v691
    %971 = vmatpush.msra.mxu0 %v690
    %972 = vmatpush.msra.mxu0 %v689
    %973 = vmatpush.msra.mxu0 %v688
    %974 = vmatmul.f32.gmra.mxu0 %v947
    %v975 = vpop.f32.mrf.mxu0
    %v976 = vadd.f32 0.0, %v975
    %977 = vmatmul.f32.gmra.mxu0 %v950
    %v978 = vpop.f32.mrf.mxu0
    %v979 = vadd.f32 0.0, %v978
    %980 = vmatmul.f32.gmra.mxu0 %v953
    %v981 = vpop.f32.mrf.mxu0
    %v982 = vadd.f32 0.0, %v981
    %983 = vmatmul.f32.gmra.mxu0 %v956
    %v984 = vpop.f32.mrf.mxu0
    %v985 = vadd.f32 0.0, %v984
    %986 = vdwg.mxu0
    %v987 = vpack.c.bf16 %v979, %v976
    %v988 = vpack.c.bf16 %v985, %v982
    %s989 = scalar_lea.vmem %s5, 256
    %v990 = vld [vmem:[%s989] sm:$0xff]
    %v991 = vld [vmem:[%s989 + $0x8] sm:$0xff]
    %v992 = vld [vmem:[%s989 + $0x10] sm:$0xff]
    %v993 = vld [vmem:[%s989 + $0x18] sm:$0xff]
    %v994 = vld [vmem:[%s989 + $0x20] sm:$0xff]
    %v995 = vld [vmem:[%s989 + $0x28] sm:$0xff]
    %v996 = vld [vmem:[%s989 + $0x30] sm:$0xff]
    %v997 = vld [vmem:[%s989 + $0x38] sm:$0xff]
    %v998 = vld [vmem:[%s989 + $0x40] sm:$0xff]
    %v999 = vld [vmem:[%s989 + $0x48] sm:$0xff]
    %v1000 = vld [vmem:[%s989 + $0x50] sm:$0xff]
    %v1001 = vld [vmem:[%s989 + $0x58] sm:$0xff]
    %v1002 = vld [vmem:[%s989 + $0x60] sm:$0xff]
    %v1003 = vld [vmem:[%s989 + $0x68] sm:$0xff]
    %v1004 = vld [vmem:[%s989 + $0x70] sm:$0xff]
    %v1005 = vld [vmem:[%s989 + $0x78] sm:$0xff]
    %v1022 = vunpack.c.l.b16 %v990
    %v1023 = vunpack.c.h.b16 %v990
    %v1024 = vunpack.c.l.b16 %v991
    %v1025 = vunpack.c.h.b16 %v991
    %v1026 = vunpack.c.l.b16 %v992
    %v1027 = vunpack.c.h.b16 %v992
    %v1028 = vunpack.c.l.b16 %v993
    %v1029 = vunpack.c.h.b16 %v993
    %v1030 = vunpack.c.l.b16 %v994
    %v1031 = vunpack.c.h.b16 %v994
    %v1032 = vunpack.c.l.b16 %v995
    %v1033 = vunpack.c.h.b16 %v995
    %v1034 = vunpack.c.l.b16 %v996
    %v1035 = vunpack.c.h.b16 %v996
    %v1036 = vunpack.c.l.b16 %v997
    %v1037 = vunpack.c.h.b16 %v997
    %v1038 = vunpack.c.l.b16 %v998
    %v1039 = vunpack.c.h.b16 %v998
    %v1040 = vunpack.c.l.b16 %v999
    %v1041 = vunpack.c.h.b16 %v999
    %v1042 = vunpack.c.l.b16 %v1000
    %v1043 = vunpack.c.h.b16 %v1000
    %v1044 = vunpack.c.l.b16 %v1001
    %v1045 = vunpack.c.h.b16 %v1001
    %v1046 = vunpack.c.l.b16 %v1002
    %v1047 = vunpack.c.h.b16 %v1002
    %v1048 = vunpack.c.l.b16 %v1003
    %v1049 = vunpack.c.h.b16 %v1003
    %v1050 = vunpack.c.l.b16 %v1004
    %v1051 = vunpack.c.h.b16 %v1004
    %v1052 = vunpack.c.l.b16 %v1005
    %v1053 = vunpack.c.h.b16 %v1005
    %v1054 = vpack.c.b16 %v1024, %v1022
    %v1055 = vpack.c.b16 %v1025, %v1023
    %v1056 = vpack.c.b16 %v1028, %v1026
    %v1057 = vpack.c.b16 %v1029, %v1027
    %v1058 = vpack.c.b16 %v1032, %v1030
    %v1059 = vpack.c.b16 %v1033, %v1031
    %v1060 = vpack.c.b16 %v1036, %v1034
    %v1061 = vpack.c.b16 %v1037, %v1035
    %v1062 = vpack.c.b16 %v1040, %v1038
    %v1063 = vpack.c.b16 %v1041, %v1039
    %v1064 = vpack.c.b16 %v1044, %v1042
    %v1065 = vpack.c.b16 %v1045, %v1043
    %v1066 = vpack.c.b16 %v1048, %v1046
    %v1067 = vpack.c.b16 %v1049, %v1047
    %v1068 = vpack.c.b16 %v1052, %v1050
    %v1069 = vpack.c.b16 %v1053, %v1051
    %1086 = vmatpush.bf16.msra.mxu0 %v1068
    %1087 = vmatpush.bf16.msra.mxu0 %v1066
    %1088 = vmatpush.bf16.msra.mxu0 %v1064
    %1089 = vmatpush.bf16.msra.mxu0 %v1062
    %1090 = vmatpush.bf16.msra.mxu0 %v1060
    %1091 = vmatpush.bf16.msra.mxu0 %v1058
    %1092 = vmatpush.bf16.msra.mxu0 %v1056
    %1093 = vmatpush.bf16.msra.mxu0 %v1054
    %1094 = vmatmul.bf16.gmra.mxu0 %v987
    %v1095 = vpop.f32.mrf.mxu0
    %v1096 = vadd.f32 0.0, %v1095
    %v1097 = vpop.f32.mrf.mxu0
    %v1098 = vadd.f32 0.0, %v1097
    %1099 = vmatmul.bf16.gmra.mxu0 %v988
    %v1100 = vpop.f32.mrf.mxu0
    %v1101 = vadd.f32 0.0, %v1100
    %v1102 = vpop.f32.mrf.mxu0
    %v1103 = vadd.f32 0.0, %v1102
    %1104 = vdwg.mxu0
    %1105 = vmatpush.bf16.msra.mxu0 %v1069
    %1106 = vmatpush.bf16.msra.mxu0 %v1067
    %1107 = vmatpush.bf16.msra.mxu0 %v1065
    %1108 = vmatpush.bf16.msra.mxu0 %v1063
    %1109 = vmatpush.bf16.msra.mxu0 %v1061
    %1110 = vmatpush.bf16.msra.mxu0 %v1059
    %1111 = vmatpush.bf16.msra.mxu0 %v1057
    %1112 = vmatpush.bf16.msra.mxu0 %v1055
    %1113 = vmatmul.bf16.gmra.mxu0 %v987
    %v1114 = vpop.f32.mrf.mxu0
    %v1115 = vadd.f32 0.0, %v1114
    %v1116 = vpop.f32.mrf.mxu0
    %v1117 = vadd.f32 0.0, %v1116
    %1118 = vmatmul.bf16.gmra.mxu0 %v988
    %v1119 = vpop.f32.mrf.mxu0
    %v1120 = vadd.f32 0.0, %v1119
    %v1121 = vpop.f32.mrf.mxu0
    %v1122 = vadd.f32 0.0, %v1121
    %1123 = vdwg.mxu0
    %v1140 = vunpack.c.l.b16 %v752
    %v1141 = vunpack.c.h.b16 %v752
    %v1142 = vunpack.c.l.b16 %v753
    %v1143 = vunpack.c.h.b16 %v753
    %v1144 = vunpack.c.l.b16 %v754
    %v1145 = vunpack.c.h.b16 %v754
    %v1146 = vunpack.c.l.b16 %v755
    %v1147 = vunpack.c.h.b16 %v755
    %v1148 = vunpack.c.l.b16 %v756
    %v1149 = vunpack.c.h.b16 %v756
    %v1150 = vunpack.c.l.b16 %v757
    %v1151 = vunpack.c.h.b16 %v757
    %v1152 = vunpack.c.l.b16 %v758
    %v1153 = vunpack.c.h.b16 %v758
    %v1154 = vunpack.c.l.b16 %v759
    %v1155 = vunpack.c.h.b16 %v759
    %v1156 = vunpack.c.l.b16 %v760
    %v1157 = vunpack.c.h.b16 %v760
    %v1158 = vunpack.c.l.b16 %v761
    %v1159 = vunpack.c.h.b16 %v761
    %v1160 = vunpack.c.l.b16 %v762
    %v1161 = vunpack.c.h.b16 %v762
    %v1162 = vunpack.c.l.b16 %v763
    %v1163 = vunpack.c.h.b16 %v763
    %v1164 = vunpack.c.l.b16 %v764
    %v1165 = vunpack.c.h.b16 %v764
    %v1166 = vunpack.c.l.b16 %v765
    %v1167 = vunpack.c.h.b16 %v765
    %v1168 = vunpack.c.l.b16 %v766
    %v1169 = vunpack.c.h.b16 %v766
    %v1170 = vunpack.c.l.b16 %v767
    %v1171 = vunpack.c.h.b16 %v767
    %v1172 = vpack.c.b16 %v1142, %v1140
    %v1173 = vpack.c.b16 %v1143, %v1141
    %v1174 = vpack.c.b16 %v1146, %v1144
    %v1175 = vpack.c.b16 %v1147, %v1145
    %v1176 = vpack.c.b16 %v1150, %v1148
    %v1177 = vpack.c.b16 %v1151, %v1149
    %v1178 = vpack.c.b16 %v1154, %v1152
    %v1179 = vpack.c.b16 %v1155, %v1153
    %v1180 = vpack.c.b16 %v1158, %v1156
    %v1181 = vpack.c.b16 %v1159, %v1157
    %v1182 = vpack.c.b16 %v1162, %v1160
    %v1183 = vpack.c.b16 %v1163, %v1161
    %v1184 = vpack.c.b16 %v1166, %v1164
    %v1185 = vpack.c.b16 %v1167, %v1165
    %v1186 = vpack.c.b16 %v1170, %v1168
    %v1187 = vpack.c.b16 %v1171, %v1169
    %1204 = vmatpush.bf16.msra.mxu0 %v1186
    %1205 = vmatpush.bf16.msra.mxu0 %v1184
    %1206 = vmatpush.bf16.msra.mxu0 %v1182
    %1207 = vmatpush.bf16.msra.mxu0 %v1180
    %1208 = vmatpush.bf16.msra.mxu0 %v1178
    %1209 = vmatpush.bf16.msra.mxu0 %v1176
    %1210 = vmatpush.bf16.msra.mxu0 %v1174
    %1211 = vmatpush.bf16.msra.mxu0 %v1172
    %1212 = vmatmul.bf16.gmra.mxu0 %v750
    %v1213 = vpop.f32.mrf.mxu0
    %v1214 = vadd.f32 %v918, %v1213
    %v1215 = vpop.f32.mrf.mxu0
    %v1216 = vadd.f32 %v920, %v1215
    %1217 = vmatmul.bf16.gmra.mxu0 %v751
    %v1218 = vpop.f32.mrf.mxu0
    %v1219 = vadd.f32 %v923, %v1218
    %v1220 = vpop.f32.mrf.mxu0
    %v1221 = vadd.f32 %v925, %v1220
    %1222 = vdwg.mxu0
    %1223 = vmatpush.bf16.msra.mxu0 %v1187
    %1224 = vmatpush.bf16.msra.mxu0 %v1185
    %1225 = vmatpush.bf16.msra.mxu0 %v1183
    %1226 = vmatpush.bf16.msra.mxu0 %v1181
    %1227 = vmatpush.bf16.msra.mxu0 %v1179
    %1228 = vmatpush.bf16.msra.mxu0 %v1177
    %1229 = vmatpush.bf16.msra.mxu0 %v1175
    %1230 = vmatpush.bf16.msra.mxu0 %v1173
    %1231 = vmatmul.bf16.gmra.mxu0 %v750
    %v1232 = vpop.f32.mrf.mxu0
    %v1233 = vadd.f32 %v937, %v1232
    %v1234 = vpop.f32.mrf.mxu0
    %v1235 = vadd.f32 %v939, %v1234
    %1236 = vmatmul.bf16.gmra.mxu0 %v751
    %v1237 = vpop.f32.mrf.mxu0
    %v1238 = vadd.f32 %v942, %v1237
    %v1239 = vpop.f32.mrf.mxu0
    %v1240 = vadd.f32 %v944, %v1239
    %1241 = vdwg.mxu0
    %v1242 = vadd.f32 %v1214, %v1096
    %v1243 = vadd.f32 %v1233, %v1115
    %v1244 = vadd.f32 %v1216, %v1098
    %v1245 = vadd.f32 %v1235, %v1117
    %v1246 = vadd.f32 %v1219, %v1101
    %v1247 = vadd.f32 %v1238, %v1120
    %v1248 = vadd.f32 %v1221, %v1103
    %v1249 = vadd.f32 %v1240, %v1122
    %v1250 = vld [vmem:[%s6] sm:$0x3]
    %v1252 = vperm.slane %v1250, 0
    %v1253 = vperm.slane %v1250, 1
    %v1256 = vadd.f32 %v1242, %v1252
    %v1257 = vadd.f32 %v1243, %v1253
    %v1258 = vadd.f32 %v1244, %v1252
    %v1259 = vadd.f32 %v1245, %v1253
    %v1260 = vadd.f32 %v1246, %v1252
    %v1261 = vadd.f32 %v1247, %v1253
    %v1262 = vadd.f32 %v1248, %v1252
    %v1263 = vadd.f32 %v1249, %v1253
    %v1264 = vmax.f32 %v1256, 0.0
    %v1265 = vmax.f32 %v1257, 0.0
    %v1266 = vmax.f32 %v1258, 0.0
    %v1267 = vmax.f32 %v1259, 0.0
    %v1268 = vmax.f32 %v1260, 0.0
    %v1269 = vmax.f32 %v1261, 0.0
    %v1270 = vmax.f32 %v1262, 0.0
    %v1271 = vmax.f32 %v1263, 0.0
    %vm1272 = vcmp.ne.s32.totalorder %v205, 15
    %vm1273 = vmand %vm222, %vm1272
    %vm1274 = vmand %vm223, %vm1272
    %v1275 = vsel %vm1273, 1, 0
    %v1276 = vsel %vm1274, 1, 0
    %v1277 = vcvt.s32.f32 %v1275
    %v1278 = vcvt.s32.f32 %v1276
    %vm1279 = vcmask 261120
    %v1281 = vsel %vm1279, %v1277, 0
    %v1284 = vsel %vm1279, %v1278, 0
    %1286 = vmatpush.msra.mxu0 0.0
    %1287 = vmatpush.msra.mxu0 0.0
    %1288 = vmatpush.msra.mxu0 0.0
    %1289 = vmatpush.msra.mxu0 0.0
    %1290 = vmatpush.msra.mxu0 0.0
    %1291 = vmatpush.msra.mxu0 0.0
    %1292 = vmatpush.msra.mxu0 0.0
    %1293 = vmatpush.msra.mxu0 0.0
    %1294 = vmatpush.msra.mxu0 0.0
    %1295 = vmatpush.msra.mxu0 0.0
    %1296 = vmatpush.msra.mxu0 0.0
    %1297 = vmatpush.msra.mxu0 0.0
    %1298 = vmatpush.msra.mxu0 %v1270
    %1299 = vmatpush.msra.mxu0 %v1268
    %1300 = vmatpush.msra.mxu0 %v1266
    %1301 = vmatpush.msra.mxu0 %v1264
    %1302 = vmatmul.f32.gmra.mxu0 %v1281
    %v1303 = vpop.f32.mrf.mxu0
    %v1304 = vadd.f32 0.0, %v1303
    %1305 = vmatmul.f32.gmra.mxu0 %v1284
    %v1306 = vpop.f32.mrf.mxu0
    %v1307 = vadd.f32 0.0, %v1306
    %1308 = vdwg.mxu0
    %1309 = vmatpush.msra.mxu0 0.0
    %1310 = vmatpush.msra.mxu0 0.0
    %1311 = vmatpush.msra.mxu0 0.0
    %1312 = vmatpush.msra.mxu0 0.0
    %1313 = vmatpush.msra.mxu0 0.0
    %1314 = vmatpush.msra.mxu0 0.0
    %1315 = vmatpush.msra.mxu0 0.0
    %1316 = vmatpush.msra.mxu0 0.0
    %1317 = vmatpush.msra.mxu0 0.0
    %1318 = vmatpush.msra.mxu0 0.0
    %1319 = vmatpush.msra.mxu0 0.0
    %1320 = vmatpush.msra.mxu0 0.0
    %1321 = vmatpush.msra.mxu0 %v1271
    %1322 = vmatpush.msra.mxu0 %v1269
    %1323 = vmatpush.msra.mxu0 %v1267
    %1324 = vmatpush.msra.mxu0 %v1265
    %1325 = vmatmul.f32.gmra.mxu0 %v1281
    %v1326 = vpop.f32.mrf.mxu0
    %v1327 = vadd.f32 0.0, %v1326
    %1328 = vmatmul.f32.gmra.mxu0 %v1284
    %v1329 = vpop.f32.mrf.mxu0
    %v1330 = vadd.f32 0.0, %v1329
    %1331 = vdwg.mxu0
    %v1332 = vpack.c.bf16 %v1307, %v1304
    %v1333 = vpack.c.bf16 %v1330, %v1327
    %v1334 = vld [vmem:[%s7] sm:$0xff]
    %v1335 = vld [vmem:[%s7 + $0x8] sm:$0xff]
    %v1336 = vld [vmem:[%s7 + $0x10] sm:$0xff]
    %v1337 = vld [vmem:[%s7 + $0x18] sm:$0xff]
    %v1338 = vld [vmem:[%s7 + $0x20] sm:$0xff]
    %v1339 = vld [vmem:[%s7 + $0x28] sm:$0xff]
    %v1340 = vld [vmem:[%s7 + $0x30] sm:$0xff]
    %v1341 = vld [vmem:[%s7 + $0x38] sm:$0xff]
    %v1342 = vld [vmem:[%s7 + $0x40] sm:$0xff]
    %v1343 = vld [vmem:[%s7 + $0x48] sm:$0xff]
    %v1344 = vld [vmem:[%s7 + $0x50] sm:$0xff]
    %v1345 = vld [vmem:[%s7 + $0x58] sm:$0xff]
    %v1346 = vld [vmem:[%s7 + $0x60] sm:$0xff]
    %v1347 = vld [vmem:[%s7 + $0x68] sm:$0xff]
    %v1348 = vld [vmem:[%s7 + $0x70] sm:$0xff]
    %v1349 = vld [vmem:[%s7 + $0x78] sm:$0xff]
    %v1350 = vld [vmem:[%s7 + $0x80] sm:$0xff]
    %v1351 = vld [vmem:[%s7 + $0x88] sm:$0xff]
    %v1352 = vld [vmem:[%s7 + $0x90] sm:$0xff]
    %v1353 = vld [vmem:[%s7 + $0x98] sm:$0xff]
    %v1354 = vld [vmem:[%s7 + $0xa0] sm:$0xff]
    %v1355 = vld [vmem:[%s7 + $0xa8] sm:$0xff]
    %v1356 = vld [vmem:[%s7 + $0xb0] sm:$0xff]
    %v1357 = vld [vmem:[%s7 + $0xb8] sm:$0xff]
    %v1358 = vld [vmem:[%s7 + $0xc0] sm:$0xff]
    %v1359 = vld [vmem:[%s7 + $0xc8] sm:$0xff]
    %v1360 = vld [vmem:[%s7 + $0xd0] sm:$0xff]
    %v1361 = vld [vmem:[%s7 + $0xd8] sm:$0xff]
    %v1362 = vld [vmem:[%s7 + $0xe0] sm:$0xff]
    %v1363 = vld [vmem:[%s7 + $0xe8] sm:$0xff]
    %v1364 = vld [vmem:[%s7 + $0xf0] sm:$0xff]
    %v1365 = vld [vmem:[%s7 + $0xf8] sm:$0xff]
    %v1366 = vld [vmem:[%s7 + $0x100] sm:$0xff]
    %v1367 = vld [vmem:[%s7 + $0x108] sm:$0xff]
    %v1368 = vld [vmem:[%s7 + $0x110] sm:$0xff]
    %v1369 = vld [vmem:[%s7 + $0x118] sm:$0xff]
    %v1370 = vld [vmem:[%s7 + $0x120] sm:$0xff]
    %v1371 = vld [vmem:[%s7 + $0x128] sm:$0xff]
    %v1372 = vld [vmem:[%s7 + $0x130] sm:$0xff]
    %v1373 = vld [vmem:[%s7 + $0x138] sm:$0xff]
    %v1374 = vld [vmem:[%s7 + $0x140] sm:$0xff]
    %v1375 = vld [vmem:[%s7 + $0x148] sm:$0xff]
    %v1376 = vld [vmem:[%s7 + $0x150] sm:$0xff]
    %v1377 = vld [vmem:[%s7 + $0x158] sm:$0xff]
    %v1378 = vld [vmem:[%s7 + $0x160] sm:$0xff]
    %v1379 = vld [vmem:[%s7 + $0x168] sm:$0xff]
    %v1380 = vld [vmem:[%s7 + $0x170] sm:$0xff]
    %v1381 = vld [vmem:[%s7 + $0x178] sm:$0xff]
    %v1382 = vld [vmem:[%s7 + $0x180] sm:$0xff]
    %v1383 = vld [vmem:[%s7 + $0x188] sm:$0xff]
    %v1384 = vld [vmem:[%s7 + $0x190] sm:$0xff]
    %v1385 = vld [vmem:[%s7 + $0x198] sm:$0xff]
    %v1386 = vld [vmem:[%s7 + $0x1a0] sm:$0xff]
    %v1387 = vld [vmem:[%s7 + $0x1a8] sm:$0xff]
    %v1388 = vld [vmem:[%s7 + $0x1b0] sm:$0xff]
    %v1389 = vld [vmem:[%s7 + $0x1b8] sm:$0xff]
    %v1390 = vld [vmem:[%s7 + $0x1c0] sm:$0xff]
    %v1391 = vld [vmem:[%s7 + $0x1c8] sm:$0xff]
    %v1392 = vld [vmem:[%s7 + $0x1d0] sm:$0xff]
    %v1393 = vld [vmem:[%s7 + $0x1d8] sm:$0xff]
    %v1394 = vld [vmem:[%s7 + $0x1e0] sm:$0xff]
    %v1395 = vld [vmem:[%s7 + $0x1e8] sm:$0xff]
    %v1396 = vld [vmem:[%s7 + $0x1f0] sm:$0xff]
    %v1397 = vld [vmem:[%s7 + $0x1f8] sm:$0xff]
    %v1398 = vsel %vm1279, %v324, 0
    %v1400 = vsel %vm1279, %v325, 0
    %1402 = vmatpush.msra.mxu0 0.0
    %1403 = vmatpush.msra.mxu0 0.0
    %1404 = vmatpush.msra.mxu0 0.0
    %1405 = vmatpush.msra.mxu0 0.0
    %1406 = vmatpush.msra.mxu0 0.0
    %1407 = vmatpush.msra.mxu0 0.0
    %1408 = vmatpush.msra.mxu0 0.0
    %1409 = vmatpush.msra.mxu0 0.0
    %1410 = vmatpush.msra.mxu0 0.0
    %1411 = vmatpush.msra.mxu0 0.0
    %1412 = vmatpush.msra.mxu0 0.0
    %1413 = vmatpush.msra.mxu0 0.0
    %1414 = vmatpush.msra.mxu0 %v1270
    %1415 = vmatpush.msra.mxu0 %v1268
    %1416 = vmatpush.msra.mxu0 %v1266
    %1417 = vmatpush.msra.mxu0 %v1264
    %1418 = vmatmul.f32.gmra.mxu0 %v1398
    %v1419 = vpop.f32.mrf.mxu0
    %v1420 = vadd.f32 0.0, %v1419
    %1421 = vmatmul.f32.gmra.mxu0 %v1400
    %v1422 = vpop.f32.mrf.mxu0
    %v1423 = vadd.f32 0.0, %v1422
    %1424 = vdwg.mxu0
    %1425 = vmatpush.msra.mxu0 0.0
    %1426 = vmatpush.msra.mxu0 0.0
    %1427 = vmatpush.msra.mxu0 0.0
    %1428 = vmatpush.msra.mxu0 0.0
    %1429 = vmatpush.msra.mxu0 0.0
    %1430 = vmatpush.msra.mxu0 0.0
    %1431 = vmatpush.msra.mxu0 0.0
    %1432 = vmatpush.msra.mxu0 0.0
    %1433 = vmatpush.msra.mxu0 0.0
    %1434 = vmatpush.msra.mxu0 0.0
    %1435 = vmatpush.msra.mxu0 0.0
    %1436 = vmatpush.msra.mxu0 0.0
    %1437 = vmatpush.msra.mxu0 %v1271
    %1438 = vmatpush.msra.mxu0 %v1269
    %1439 = vmatpush.msra.mxu0 %v1267
    %1440 = vmatpush.msra.mxu0 %v1265
    %1441 = vmatmul.f32.gmra.mxu0 %v1398
    %v1442 = vpop.f32.mrf.mxu0
    %v1443 = vadd.f32 0.0, %v1442
    %1444 = vmatmul.f32.gmra.mxu0 %v1400
    %v1445 = vpop.f32.mrf.mxu0
    %v1446 = vadd.f32 0.0, %v1445
    %1447 = vdwg.mxu0
    %v1448 = vpack.c.bf16 %v1423, %v1420
    %v1449 = vpack.c.bf16 %v1446, %v1443
    %s1450 = scalar_lea.vmem %s7, 512
    %v1451 = vld [vmem:[%s1450] sm:$0xff]
    %v1452 = vld [vmem:[%s1450 + $0x8] sm:$0xff]
    %v1453 = vld [vmem:[%s1450 + $0x10] sm:$0xff]
    %v1454 = vld [vmem:[%s1450 + $0x18] sm:$0xff]
    %v1455 = vld [vmem:[%s1450 + $0x20] sm:$0xff]
    %v1456 = vld [vmem:[%s1450 + $0x28] sm:$0xff]
    %v1457 = vld [vmem:[%s1450 + $0x30] sm:$0xff]
    %v1458 = vld [vmem:[%s1450 + $0x38] sm:$0xff]
    %v1459 = vld [vmem:[%s1450 + $0x40] sm:$0xff]
    %v1460 = vld [vmem:[%s1450 + $0x48] sm:$0xff]
    %v1461 = vld [vmem:[%s1450 + $0x50] sm:$0xff]
    %v1462 = vld [vmem:[%s1450 + $0x58] sm:$0xff]
    %v1463 = vld [vmem:[%s1450 + $0x60] sm:$0xff]
    %v1464 = vld [vmem:[%s1450 + $0x68] sm:$0xff]
    %v1465 = vld [vmem:[%s1450 + $0x70] sm:$0xff]
    %v1466 = vld [vmem:[%s1450 + $0x78] sm:$0xff]
    %v1467 = vld [vmem:[%s1450 + $0x80] sm:$0xff]
    %v1468 = vld [vmem:[%s1450 + $0x88] sm:$0xff]
    %v1469 = vld [vmem:[%s1450 + $0x90] sm:$0xff]
    %v1470 = vld [vmem:[%s1450 + $0x98] sm:$0xff]
    %v1471 = vld [vmem:[%s1450 + $0xa0] sm:$0xff]
    %v1472 = vld [vmem:[%s1450 + $0xa8] sm:$0xff]
    %v1473 = vld [vmem:[%s1450 + $0xb0] sm:$0xff]
    %v1474 = vld [vmem:[%s1450 + $0xb8] sm:$0xff]
    %v1475 = vld [vmem:[%s1450 + $0xc0] sm:$0xff]
    %v1476 = vld [vmem:[%s1450 + $0xc8] sm:$0xff]
    %v1477 = vld [vmem:[%s1450 + $0xd0] sm:$0xff]
    %v1478 = vld [vmem:[%s1450 + $0xd8] sm:$0xff]
    %v1479 = vld [vmem:[%s1450 + $0xe0] sm:$0xff]
    %v1480 = vld [vmem:[%s1450 + $0xe8] sm:$0xff]
    %v1481 = vld [vmem:[%s1450 + $0xf0] sm:$0xff]
    %v1482 = vld [vmem:[%s1450 + $0xf8] sm:$0xff]
    %v1483 = vld [vmem:[%s1450 + $0x100] sm:$0xff]
    %v1484 = vld [vmem:[%s1450 + $0x108] sm:$0xff]
    %v1485 = vld [vmem:[%s1450 + $0x110] sm:$0xff]
    %v1486 = vld [vmem:[%s1450 + $0x118] sm:$0xff]
    %v1487 = vld [vmem:[%s1450 + $0x120] sm:$0xff]
    %v1488 = vld [vmem:[%s1450 + $0x128] sm:$0xff]
    %v1489 = vld [vmem:[%s1450 + $0x130] sm:$0xff]
    %v1490 = vld [vmem:[%s1450 + $0x138] sm:$0xff]
    %v1491 = vld [vmem:[%s1450 + $0x140] sm:$0xff]
    %v1492 = vld [vmem:[%s1450 + $0x148] sm:$0xff]
    %v1493 = vld [vmem:[%s1450 + $0x150] sm:$0xff]
    %v1494 = vld [vmem:[%s1450 + $0x158] sm:$0xff]
    %v1495 = vld [vmem:[%s1450 + $0x160] sm:$0xff]
    %v1496 = vld [vmem:[%s1450 + $0x168] sm:$0xff]
    %v1497 = vld [vmem:[%s1450 + $0x170] sm:$0xff]
    %v1498 = vld [vmem:[%s1450 + $0x178] sm:$0xff]
    %v1499 = vld [vmem:[%s1450 + $0x180] sm:$0xff]
    %v1500 = vld [vmem:[%s1450 + $0x188] sm:$0xff]
    %v1501 = vld [vmem:[%s1450 + $0x190] sm:$0xff]
    %v1502 = vld [vmem:[%s1450 + $0x198] sm:$0xff]
    %v1503 = vld [vmem:[%s1450 + $0x1a0] sm:$0xff]
    %v1504 = vld [vmem:[%s1450 + $0x1a8] sm:$0xff]
    %v1505 = vld [vmem:[%s1450 + $0x1b0] sm:$0xff]
    %v1506 = vld [vmem:[%s1450 + $0x1b8] sm:$0xff]
    %v1507 = vld [vmem:[%s1450 + $0x1c0] sm:$0xff]
    %v1508 = vld [vmem:[%s1450 + $0x1c8] sm:$0xff]
    %v1509 = vld [vmem:[%s1450 + $0x1d0] sm:$0xff]
    %v1510 = vld [vmem:[%s1450 + $0x1d8] sm:$0xff]
    %v1511 = vld [vmem:[%s1450 + $0x1e0] sm:$0xff]
    %v1512 = vld [vmem:[%s1450 + $0x1e8] sm:$0xff]
    %v1513 = vld [vmem:[%s1450 + $0x1f0] sm:$0xff]
    %v1514 = vld [vmem:[%s1450 + $0x1f8] sm:$0xff]
    %v1579 = vunpack.c.l.b16 %v1451
    %v1580 = vunpack.c.h.b16 %v1451
    %v1581 = vunpack.c.l.b16 %v1452
    %v1582 = vunpack.c.h.b16 %v1452
    %v1583 = vunpack.c.l.b16 %v1453
    %v1584 = vunpack.c.h.b16 %v1453
    %v1585 = vunpack.c.l.b16 %v1454
    %v1586 = vunpack.c.h.b16 %v1454
    %v1587 = vunpack.c.l.b16 %v1455
    %v1588 = vunpack.c.h.b16 %v1455
    %v1589 = vunpack.c.l.b16 %v1456
    %v1590 = vunpack.c.h.b16 %v1456
    %v1591 = vunpack.c.l.b16 %v1457
    %v1592 = vunpack.c.h.b16 %v1457
    %v1593 = vunpack.c.l.b16 %v1458
    %v1594 = vunpack.c.h.b16 %v1458
    %v1595 = vunpack.c.l.b16 %v1459
    %v1596 = vunpack.c.h.b16 %v1459
    %v1597 = vunpack.c.l.b16 %v1460
    %v1598 = vunpack.c.h.b16 %v1460
    %v1599 = vunpack.c.l.b16 %v1461
    %v1600 = vunpack.c.h.b16 %v1461
    %v1601 = vunpack.c.l.b16 %v1462
    %v1602 = vunpack.c.h.b16 %v1462
    %v1603 = vunpack.c.l.b16 %v1463
    %v1604 = vunpack.c.h.b16 %v1463
    %v1605 = vunpack.c.l.b16 %v1464
    %v1606 = vunpack.c.h.b16 %v1464
    %v1607 = vunpack.c.l.b16 %v1465
    %v1608 = vunpack.c.h.b16 %v1465
    %v1609 = vunpack.c.l.b16 %v1466
    %v1610 = vunpack.c.h.b16 %v1466
    %v1611 = vunpack.c.l.b16 %v1467
    %v1612 = vunpack.c.h.b16 %v1467
    %v1613 = vunpack.c.l.b16 %v1468
    %v1614 = vunpack.c.h.b16 %v1468
    %v1615 = vunpack.c.l.b16 %v1469
    %v1616 = vunpack.c.h.b16 %v1469
    %v1617 = vunpack.c.l.b16 %v1470
    %v1618 = vunpack.c.h.b16 %v1470
    %v1619 = vunpack.c.l.b16 %v1471
    %v1620 = vunpack.c.h.b16 %v1471
    %v1621 = vunpack.c.l.b16 %v1472
    %v1622 = vunpack.c.h.b16 %v1472
    %v1623 = vunpack.c.l.b16 %v1473
    %v1624 = vunpack.c.h.b16 %v1473
    %v1625 = vunpack.c.l.b16 %v1474
    %v1626 = vunpack.c.h.b16 %v1474
    %v1627 = vunpack.c.l.b16 %v1475
    %v1628 = vunpack.c.h.b16 %v1475
    %v1629 = vunpack.c.l.b16 %v1476
    %v1630 = vunpack.c.h.b16 %v1476
    %v1631 = vunpack.c.l.b16 %v1477
    %v1632 = vunpack.c.h.b16 %v1477
    %v1633 = vunpack.c.l.b16 %v1478
    %v1634 = vunpack.c.h.b16 %v1478
    %v1635 = vunpack.c.l.b16 %v1479
    %v1636 = vunpack.c.h.b16 %v1479
    %v1637 = vunpack.c.l.b16 %v1480
    %v1638 = vunpack.c.h.b16 %v1480
    %v1639 = vunpack.c.l.b16 %v1481
    %v1640 = vunpack.c.h.b16 %v1481
    %v1641 = vunpack.c.l.b16 %v1482
    %v1642 = vunpack.c.h.b16 %v1482
    %v1643 = vunpack.c.l.b16 %v1483
    %v1644 = vunpack.c.h.b16 %v1483
    %v1645 = vunpack.c.l.b16 %v1484
    %v1646 = vunpack.c.h.b16 %v1484
    %v1647 = vunpack.c.l.b16 %v1485
    %v1648 = vunpack.c.h.b16 %v1485
    %v1649 = vunpack.c.l.b16 %v1486
    %v1650 = vunpack.c.h.b16 %v1486
    %v1651 = vunpack.c.l.b16 %v1487
    %v1652 = vunpack.c.h.b16 %v1487
    %v1653 = vunpack.c.l.b16 %v1488
    %v1654 = vunpack.c.h.b16 %v1488
    %v1655 = vunpack.c.l.b16 %v1489
    %v1656 = vunpack.c.h.b16 %v1489
    %v1657 = vunpack.c.l.b16 %v1490
    %v1658 = vunpack.c.h.b16 %v1490
    %v1659 = vunpack.c.l.b16 %v1491
    %v1660 = vunpack.c.h.b16 %v1491
    %v1661 = vunpack.c.l.b16 %v1492
    %v1662 = vunpack.c.h.b16 %v1492
    %v1663 = vunpack.c.l.b16 %v1493
    %v1664 = vunpack.c.h.b16 %v1493
    %v1665 = vunpack.c.l.b16 %v1494
    %v1666 = vunpack.c.h.b16 %v1494
    %v1667 = vunpack.c.l.b16 %v1495
    %v1668 = vunpack.c.h.b16 %v1495
    %v1669 = vunpack.c.l.b16 %v1496
    %v1670 = vunpack.c.h.b16 %v1496
    %v1671 = vunpack.c.l.b16 %v1497
    %v1672 = vunpack.c.h.b16 %v1497
    %v1673 = vunpack.c.l.b16 %v1498
    %v1674 = vunpack.c.h.b16 %v1498
    %v1675 = vunpack.c.l.b16 %v1499
    %v1676 = vunpack.c.h.b16 %v1499
    %v1677 = vunpack.c.l.b16 %v1500
    %v1678 = vunpack.c.h.b16 %v1500
    %v1679 = vunpack.c.l.b16 %v1501
    %v1680 = vunpack.c.h.b16 %v1501
    %v1681 = vunpack.c.l.b16 %v1502
    %v1682 = vunpack.c.h.b16 %v1502
    %v1683 = vunpack.c.l.b16 %v1503
    %v1684 = vunpack.c.h.b16 %v1503
    %v1685 = vunpack.c.l.b16 %v1504
    %v1686 = vunpack.c.h.b16 %v1504
    %v1687 = vunpack.c.l.b16 %v1505
    %v1688 = vunpack.c.h.b16 %v1505
    %v1689 = vunpack.c.l.b16 %v1506
    %v1690 = vunpack.c.h.b16 %v1506
    %v1691 = vunpack.c.l.b16 %v1507
    %v1692 = vunpack.c.h.b16 %v1507
    %v1693 = vunpack.c.l.b16 %v1508
    %v1694 = vunpack.c.h.b16 %v1508
    %v1695 = vunpack.c.l.b16 %v1509
    %v1696 = vunpack.c.h.b16 %v1509
    %v1697 = vunpack.c.l.b16 %v1510
    %v1698 = vunpack.c.h.b16 %v1510
    %v1699 = vunpack.c.l.b16 %v1511
    %v1700 = vunpack.c.h.b16 %v1511
    %v1701 = vunpack.c.l.b16 %v1512
    %v1702 = vunpack.c.h.b16 %v1512
    %v1703 = vunpack.c.l.b16 %v1513
    %v1704 = vunpack.c.h.b16 %v1513
    %v1705 = vunpack.c.l.b16 %v1514
    %v1706 = vunpack.c.h.b16 %v1514
    %v1707 = vpack.c.b16 %v1583, %v1579
    %v1708 = vpack.c.b16 %v1584, %v1580
    %v1709 = vpack.c.b16 %v1585, %v1581
    %v1710 = vpack.c.b16 %v1586, %v1582
    %v1711 = vpack.c.b16 %v1591, %v1587
    %v1712 = vpack.c.b16 %v1592, %v1588
    %v1713 = vpack.c.b16 %v1593, %v1589
    %v1714 = vpack.c.b16 %v1594, %v1590
    %v1715 = vpack.c.b16 %v1599, %v1595
    %v1716 = vpack.c.b16 %v1600, %v1596
    %v1717 = vpack.c.b16 %v1601, %v1597
    %v1718 = vpack.c.b16 %v1602, %v1598
    %v1719 = vpack.c.b16 %v1607, %v1603
    %v1720 = vpack.c.b16 %v1608, %v1604
    %v1721 = vpack.c.b16 %v1609, %v1605
    %v1722 = vpack.c.b16 %v1610, %v1606
    %v1723 = vpack.c.b16 %v1615, %v1611
    %v1724 = vpack.c.b16 %v1616, %v1612
    %v1725 = vpack.c.b16 %v1617, %v1613
    %v1726 = vpack.c.b16 %v1618, %v1614
    %v1727 = vpack.c.b16 %v1623, %v1619
    %v1728 = vpack.c.b16 %v1624, %v1620
    %v1729 = vpack.c.b16 %v1625, %v1621
    %v1730 = vpack.c.b16 %v1626, %v1622
    %v1731 = vpack.c.b16 %v1631, %v1627
    %v1732 = vpack.c.b16 %v1632, %v1628
    %v1733 = vpack.c.b16 %v1633, %v1629
    %v1734 = vpack.c.b16 %v1634, %v1630
    %v1735 = vpack.c.b16 %v1639, %v1635
    %v1736 = vpack.c.b16 %v1640, %v1636
    %v1737 = vpack.c.b16 %v1641, %v1637
    %v1738 = vpack.c.b16 %v1642, %v1638
    %v1739 = vpack.c.b16 %v1647, %v1643
    %v1740 = vpack.c.b16 %v1648, %v1644
    %v1741 = vpack.c.b16 %v1649, %v1645
    %v1742 = vpack.c.b16 %v1650, %v1646
    %v1743 = vpack.c.b16 %v1655, %v1651
    %v1744 = vpack.c.b16 %v1656, %v1652
    %v1745 = vpack.c.b16 %v1657, %v1653
    %v1746 = vpack.c.b16 %v1658, %v1654
    %v1747 = vpack.c.b16 %v1663, %v1659
    %v1748 = vpack.c.b16 %v1664, %v1660
    %v1749 = vpack.c.b16 %v1665, %v1661
    %v1750 = vpack.c.b16 %v1666, %v1662
    %v1751 = vpack.c.b16 %v1671, %v1667
    %v1752 = vpack.c.b16 %v1672, %v1668
    %v1753 = vpack.c.b16 %v1673, %v1669
    %v1754 = vpack.c.b16 %v1674, %v1670
    %v1755 = vpack.c.b16 %v1679, %v1675
    %v1756 = vpack.c.b16 %v1680, %v1676
    %v1757 = vpack.c.b16 %v1681, %v1677
    %v1758 = vpack.c.b16 %v1682, %v1678
    %v1759 = vpack.c.b16 %v1687, %v1683
    %v1760 = vpack.c.b16 %v1688, %v1684
    %v1761 = vpack.c.b16 %v1689, %v1685
    %v1762 = vpack.c.b16 %v1690, %v1686
    %v1763 = vpack.c.b16 %v1695, %v1691
    %v1764 = vpack.c.b16 %v1696, %v1692
    %v1765 = vpack.c.b16 %v1697, %v1693
    %v1766 = vpack.c.b16 %v1698, %v1694
    %v1767 = vpack.c.b16 %v1703, %v1699
    %v1768 = vpack.c.b16 %v1704, %v1700
    %v1769 = vpack.c.b16 %v1705, %v1701
    %v1770 = vpack.c.b16 %v1706, %v1702
    %1835 = vmatpush.bf16.msra.mxu0 %v1735
    %1836 = vmatpush.bf16.msra.mxu0 %v1731
    %1837 = vmatpush.bf16.msra.mxu0 %v1727
    %1838 = vmatpush.bf16.msra.mxu0 %v1723
    %1839 = vmatpush.bf16.msra.mxu0 %v1719
    %1840 = vmatpush.bf16.msra.mxu0 %v1715
    %1841 = vmatpush.bf16.msra.mxu0 %v1711
    %1842 = vmatpush.bf16.msra.mxu0 %v1707
    %1843 = vmatmul.bf16.gmra.mxu0 %v1448
    %v1844 = vpop.f32.mrf.mxu0
    %v1845 = vadd.f32 0.0, %v1844
    %v1846 = vpop.f32.mrf.mxu0
    %v1847 = vadd.f32 0.0, %v1846
    %1848 = vdwg.mxu0
    %1849 = vmatpush.bf16.msra.mxu0 %v1767
    %1850 = vmatpush.bf16.msra.mxu0 %v1763
    %1851 = vmatpush.bf16.msra.mxu0 %v1759
    %1852 = vmatpush.bf16.msra.mxu0 %v1755
    %1853 = vmatpush.bf16.msra.mxu0 %v1751
    %1854 = vmatpush.bf16.msra.mxu0 %v1747
    %1855 = vmatpush.bf16.msra.mxu0 %v1743
    %1856 = vmatpush.bf16.msra.mxu0 %v1739
    %1857 = vmatmul.bf16.gmra.mxu0 %v1449
    %v1858 = vpop.f32.mrf.mxu0
    %v1859 = vadd.f32 %v1845, %v1858
    %v1860 = vpop.f32.mrf.mxu0
    %v1861 = vadd.f32 %v1847, %v1860
    %1862 = vdwg.mxu0
    %1863 = vmatpush.bf16.msra.mxu0 %v1736
    %1864 = vmatpush.bf16.msra.mxu0 %v1732
    %1865 = vmatpush.bf16.msra.mxu0 %v1728
    %1866 = vmatpush.bf16.msra.mxu0 %v1724
    %1867 = vmatpush.bf16.msra.mxu0 %v1720
    %1868 = vmatpush.bf16.msra.mxu0 %v1716
    %1869 = vmatpush.bf16.msra.mxu0 %v1712
    %1870 = vmatpush.bf16.msra.mxu0 %v1708
    %1871 = vmatmul.bf16.gmra.mxu0 %v1448
    %v1872 = vpop.f32.mrf.mxu0
    %v1873 = vadd.f32 0.0, %v1872
    %v1874 = vpop.f32.mrf.mxu0
    %v1875 = vadd.f32 0.0, %v1874
    %1876 = vdwg.mxu0
    %1877 = vmatpush.bf16.msra.mxu0 %v1768
    %1878 = vmatpush.bf16.msra.mxu0 %v1764
    %1879 = vmatpush.bf16.msra.mxu0 %v1760
    %1880 = vmatpush.bf16.msra.mxu0 %v1756
    %1881 = vmatpush.bf16.msra.mxu0 %v1752
    %1882 = vmatpush.bf16.msra.mxu0 %v1748
    %1883 = vmatpush.bf16.msra.mxu0 %v1744
    %1884 = vmatpush.bf16.msra.mxu0 %v1740
    %1885 = vmatmul.bf16.gmra.mxu0 %v1449
    %v1886 = vpop.f32.mrf.mxu0
    %v1887 = vadd.f32 %v1873, %v1886
    %v1888 = vpop.f32.mrf.mxu0
    %v1889 = vadd.f32 %v1875, %v1888
    %1890 = vdwg.mxu0
    %1891 = vmatpush.bf16.msra.mxu0 %v1737
    %1892 = vmatpush.bf16.msra.mxu0 %v1733
    %1893 = vmatpush.bf16.msra.mxu0 %v1729
    %1894 = vmatpush.bf16.msra.mxu0 %v1725
    %1895 = vmatpush.bf16.msra.mxu0 %v1721
    %1896 = vmatpush.bf16.msra.mxu0 %v1717
    %1897 = vmatpush.bf16.msra.mxu0 %v1713
    %1898 = vmatpush.bf16.msra.mxu0 %v1709
    %1899 = vmatmul.bf16.gmra.mxu0 %v1448
    %v1900 = vpop.f32.mrf.mxu0
    %v1901 = vadd.f32 0.0, %v1900
    %v1902 = vpop.f32.mrf.mxu0
    %v1903 = vadd.f32 0.0, %v1902
    %1904 = vdwg.mxu0
    %1905 = vmatpush.bf16.msra.mxu0 %v1769
    %1906 = vmatpush.bf16.msra.mxu0 %v1765
    %1907 = vmatpush.bf16.msra.mxu0 %v1761
    %1908 = vmatpush.bf16.msra.mxu0 %v1757
    %1909 = vmatpush.bf16.msra.mxu0 %v1753
    %1910 = vmatpush.bf16.msra.mxu0 %v1749
    %1911 = vmatpush.bf16.msra.mxu0 %v1745
    %1912 = vmatpush.bf16.msra.mxu0 %v1741
    %1913 = vmatmul.bf16.gmra.mxu0 %v1449
    %v1914 = vpop.f32.mrf.mxu0
    %v1915 = vadd.f32 %v1901, %v1914
    %v1916 = vpop.f32.mrf.mxu0
    %v1917 = vadd.f32 %v1903, %v1916
    %1918 = vdwg.mxu0
    %1919 = vmatpush.bf16.msra.mxu0 %v1738
    %1920 = vmatpush.bf16.msra.mxu0 %v1734
    %1921 = vmatpush.bf16.msra.mxu0 %v1730
    %1922 = vmatpush.bf16.msra.mxu0 %v1726
    %1923 = vmatpush.bf16.msra.mxu0 %v1722
    %1924 = vmatpush.bf16.msra.mxu0 %v1718
    %1925 = vmatpush.bf16.msra.mxu0 %v1714
    %1926 = vmatpush.bf16.msra.mxu0 %v1710
    %1927 = vmatmul.bf16.gmra.mxu0 %v1448
    %v1928 = vpop.f32.mrf.mxu0
    %v1929 = vadd.f32 0.0, %v1928
    %v1930 = vpop.f32.mrf.mxu0
    %v1931 = vadd.f32 0.0, %v1930
    %1932 = vdwg.mxu0
    %1933 = vmatpush.bf16.msra.mxu0 %v1770
    %1934 = vmatpush.bf16.msra.mxu0 %v1766
    %1935 = vmatpush.bf16.msra.mxu0 %v1762
    %1936 = vmatpush.bf16.msra.mxu0 %v1758
    %1937 = vmatpush.bf16.msra.mxu0 %v1754
    %1938 = vmatpush.bf16.msra.mxu0 %v1750
    %1939 = vmatpush.bf16.msra.mxu0 %v1746
    %1940 = vmatpush.bf16.msra.mxu0 %v1742
    %1941 = vmatmul.bf16.gmra.mxu0 %v1449
    %v1942 = vpop.f32.mrf.mxu0
    %v1943 = vadd.f32 %v1929, %v1942
    %v1944 = vpop.f32.mrf.mxu0
    %v1945 = vadd.f32 %v1931, %v1944
    %1946 = vdwg.mxu0
    %v1947 = vsel %vm1279, %v476, 0
    %v1949 = vsel %vm1279, %v477, 0
    %1951 = vmatpush.msra.mxu0 0.0
    %1952 = vmatpush.msra.mxu0 0.0
    %1953 = vmatpush.msra.mxu0 0.0
    %1954 = vmatpush.msra.mxu0 0.0
    %1955 = vmatpush.msra.mxu0 0.0
    %1956 = vmatpush.msra.mxu0 0.0
    %1957 = vmatpush.msra.mxu0 0.0
    %1958 = vmatpush.msra.mxu0 0.0
    %1959 = vmatpush.msra.mxu0 0.0
    %1960 = vmatpush.msra.mxu0 0.0
    %1961 = vmatpush.msra.mxu0 0.0
    %1962 = vmatpush.msra.mxu0 0.0
    %1963 = vmatpush.msra.mxu0 %v1270
    %1964 = vmatpush.msra.mxu0 %v1268
    %1965 = vmatpush.msra.mxu0 %v1266
    %1966 = vmatpush.msra.mxu0 %v1264
    %1967 = vmatmul.f32.gmra.mxu0 %v1947
    %v1968 = vpop.f32.mrf.mxu0
    %v1969 = vadd.f32 0.0, %v1968
    %1970 = vmatmul.f32.gmra.mxu0 %v1949
    %v1971 = vpop.f32.mrf.mxu0
    %v1972 = vadd.f32 0.0, %v1971
    %1973 = vdwg.mxu0
    %1974 = vmatpush.msra.mxu0 0.0
    %1975 = vmatpush.msra.mxu0 0.0
    %1976 = vmatpush.msra.mxu0 0.0
    %1977 = vmatpush.msra.mxu0 0.0
    %1978 = vmatpush.msra.mxu0 0.0
    %1979 = vmatpush.msra.mxu0 0.0
    %1980 = vmatpush.msra.mxu0 0.0
    %1981 = vmatpush.msra.mxu0 0.0
    %1982 = vmatpush.msra.mxu0 0.0
    %1983 = vmatpush.msra.mxu0 0.0
    %1984 = vmatpush.msra.mxu0 0.0
    %1985 = vmatpush.msra.mxu0 0.0
    %1986 = vmatpush.msra.mxu0 %v1271
    %1987 = vmatpush.msra.mxu0 %v1269
    %1988 = vmatpush.msra.mxu0 %v1267
    %1989 = vmatpush.msra.mxu0 %v1265
    %1990 = vmatmul.f32.gmra.mxu0 %v1947
    %v1991 = vpop.f32.mrf.mxu0
    %v1992 = vadd.f32 0.0, %v1991
    %1993 = vmatmul.f32.gmra.mxu0 %v1949
    %v1994 = vpop.f32.mrf.mxu0
    %v1995 = vadd.f32 0.0, %v1994
    %1996 = vdwg.mxu0
    %v1997 = vpack.c.bf16 %v1972, %v1969
    %v1998 = vpack.c.bf16 %v1995, %v1992
    %s1999 = scalar_lea.vmem %s7, 1024
    %v2000 = vld [vmem:[%s1999] sm:$0xff]
    %v2001 = vld [vmem:[%s1999 + $0x8] sm:$0xff]
    %v2002 = vld [vmem:[%s1999 + $0x10] sm:$0xff]
    %v2003 = vld [vmem:[%s1999 + $0x18] sm:$0xff]
    %v2004 = vld [vmem:[%s1999 + $0x20] sm:$0xff]
    %v2005 = vld [vmem:[%s1999 + $0x28] sm:$0xff]
    %v2006 = vld [vmem:[%s1999 + $0x30] sm:$0xff]
    %v2007 = vld [vmem:[%s1999 + $0x38] sm:$0xff]
    %v2008 = vld [vmem:[%s1999 + $0x40] sm:$0xff]
    %v2009 = vld [vmem:[%s1999 + $0x48] sm:$0xff]
    %v2010 = vld [vmem:[%s1999 + $0x50] sm:$0xff]
    %v2011 = vld [vmem:[%s1999 + $0x58] sm:$0xff]
    %v2012 = vld [vmem:[%s1999 + $0x60] sm:$0xff]
    %v2013 = vld [vmem:[%s1999 + $0x68] sm:$0xff]
    %v2014 = vld [vmem:[%s1999 + $0x70] sm:$0xff]
    %v2015 = vld [vmem:[%s1999 + $0x78] sm:$0xff]
    %v2016 = vld [vmem:[%s1999 + $0x80] sm:$0xff]
    %v2017 = vld [vmem:[%s1999 + $0x88] sm:$0xff]
    %v2018 = vld [vmem:[%s1999 + $0x90] sm:$0xff]
    %v2019 = vld [vmem:[%s1999 + $0x98] sm:$0xff]
    %v2020 = vld [vmem:[%s1999 + $0xa0] sm:$0xff]
    %v2021 = vld [vmem:[%s1999 + $0xa8] sm:$0xff]
    %v2022 = vld [vmem:[%s1999 + $0xb0] sm:$0xff]
    %v2023 = vld [vmem:[%s1999 + $0xb8] sm:$0xff]
    %v2024 = vld [vmem:[%s1999 + $0xc0] sm:$0xff]
    %v2025 = vld [vmem:[%s1999 + $0xc8] sm:$0xff]
    %v2026 = vld [vmem:[%s1999 + $0xd0] sm:$0xff]
    %v2027 = vld [vmem:[%s1999 + $0xd8] sm:$0xff]
    %v2028 = vld [vmem:[%s1999 + $0xe0] sm:$0xff]
    %v2029 = vld [vmem:[%s1999 + $0xe8] sm:$0xff]
    %v2030 = vld [vmem:[%s1999 + $0xf0] sm:$0xff]
    %v2031 = vld [vmem:[%s1999 + $0xf8] sm:$0xff]
    %v2032 = vld [vmem:[%s1999 + $0x100] sm:$0xff]
    %v2033 = vld [vmem:[%s1999 + $0x108] sm:$0xff]
    %v2034 = vld [vmem:[%s1999 + $0x110] sm:$0xff]
    %v2035 = vld [vmem:[%s1999 + $0x118] sm:$0xff]
    %v2036 = vld [vmem:[%s1999 + $0x120] sm:$0xff]
    %v2037 = vld [vmem:[%s1999 + $0x128] sm:$0xff]
    %v2038 = vld [vmem:[%s1999 + $0x130] sm:$0xff]
    %v2039 = vld [vmem:[%s1999 + $0x138] sm:$0xff]
    %v2040 = vld [vmem:[%s1999 + $0x140] sm:$0xff]
    %v2041 = vld [vmem:[%s1999 + $0x148] sm:$0xff]
    %v2042 = vld [vmem:[%s1999 + $0x150] sm:$0xff]
    %v2043 = vld [vmem:[%s1999 + $0x158] sm:$0xff]
    %v2044 = vld [vmem:[%s1999 + $0x160] sm:$0xff]
    %v2045 = vld [vmem:[%s1999 + $0x168] sm:$0xff]
    %v2046 = vld [vmem:[%s1999 + $0x170] sm:$0xff]
    %v2047 = vld [vmem:[%s1999 + $0x178] sm:$0xff]
    %v2048 = vld [vmem:[%s1999 + $0x180] sm:$0xff]
    %v2049 = vld [vmem:[%s1999 + $0x188] sm:$0xff]
    %v2050 = vld [vmem:[%s1999 + $0x190] sm:$0xff]
    %v2051 = vld [vmem:[%s1999 + $0x198] sm:$0xff]
    %v2052 = vld [vmem:[%s1999 + $0x1a0] sm:$0xff]
    %v2053 = vld [vmem:[%s1999 + $0x1a8] sm:$0xff]
    %v2054 = vld [vmem:[%s1999 + $0x1b0] sm:$0xff]
    %v2055 = vld [vmem:[%s1999 + $0x1b8] sm:$0xff]
    %v2056 = vld [vmem:[%s1999 + $0x1c0] sm:$0xff]
    %v2057 = vld [vmem:[%s1999 + $0x1c8] sm:$0xff]
    %v2058 = vld [vmem:[%s1999 + $0x1d0] sm:$0xff]
    %v2059 = vld [vmem:[%s1999 + $0x1d8] sm:$0xff]
    %v2060 = vld [vmem:[%s1999 + $0x1e0] sm:$0xff]
    %v2061 = vld [vmem:[%s1999 + $0x1e8] sm:$0xff]
    %v2062 = vld [vmem:[%s1999 + $0x1f0] sm:$0xff]
    %v2063 = vld [vmem:[%s1999 + $0x1f8] sm:$0xff]
    %v2128 = vunpack.c.l.b16 %v2000
    %v2129 = vunpack.c.h.b16 %v2000
    %v2130 = vunpack.c.l.b16 %v2001
    %v2131 = vunpack.c.h.b16 %v2001
    %v2132 = vunpack.c.l.b16 %v2002
    %v2133 = vunpack.c.h.b16 %v2002
    %v2134 = vunpack.c.l.b16 %v2003
    %v2135 = vunpack.c.h.b16 %v2003
    %v2136 = vunpack.c.l.b16 %v2004
    %v2137 = vunpack.c.h.b16 %v2004
    %v2138 = vunpack.c.l.b16 %v2005
    %v2139 = vunpack.c.h.b16 %v2005
    %v2140 = vunpack.c.l.b16 %v2006
    %v2141 = vunpack.c.h.b16 %v2006
    %v2142 = vunpack.c.l.b16 %v2007
    %v2143 = vunpack.c.h.b16 %v2007
    %v2144 = vunpack.c.l.b16 %v2008
    %v2145 = vunpack.c.h.b16 %v2008
    %v2146 = vunpack.c.l.b16 %v2009
    %v2147 = vunpack.c.h.b16 %v2009
    %v2148 = vunpack.c.l.b16 %v2010
    %v2149 = vunpack.c.h.b16 %v2010
    %v2150 = vunpack.c.l.b16 %v2011
    %v2151 = vunpack.c.h.b16 %v2011
    %v2152 = vunpack.c.l.b16 %v2012
    %v2153 = vunpack.c.h.b16 %v2012
    %v2154 = vunpack.c.l.b16 %v2013
    %v2155 = vunpack.c.h.b16 %v2013
    %v2156 = vunpack.c.l.b16 %v2014
    %v2157 = vunpack.c.h.b16 %v2014
    %v2158 = vunpack.c.l.b16 %v2015
    %v2159 = vunpack.c.h.b16 %v2015
    %v2160 = vunpack.c.l.b16 %v2016
    %v2161 = vunpack.c.h.b16 %v2016
    %v2162 = vunpack.c.l.b16 %v2017
    %v2163 = vunpack.c.h.b16 %v2017
    %v2164 = vunpack.c.l.b16 %v2018
    %v2165 = vunpack.c.h.b16 %v2018
    %v2166 = vunpack.c.l.b16 %v2019
    %v2167 = vunpack.c.h.b16 %v2019
    %v2168 = vunpack.c.l.b16 %v2020
    %v2169 = vunpack.c.h.b16 %v2020
    %v2170 = vunpack.c.l.b16 %v2021
    %v2171 = vunpack.c.h.b16 %v2021
    %v2172 = vunpack.c.l.b16 %v2022
    %v2173 = vunpack.c.h.b16 %v2022
    %v2174 = vunpack.c.l.b16 %v2023
    %v2175 = vunpack.c.h.b16 %v2023
    %v2176 = vunpack.c.l.b16 %v2024
    %v2177 = vunpack.c.h.b16 %v2024
    %v2178 = vunpack.c.l.b16 %v2025
    %v2179 = vunpack.c.h.b16 %v2025
    %v2180 = vunpack.c.l.b16 %v2026
    %v2181 = vunpack.c.h.b16 %v2026
    %v2182 = vunpack.c.l.b16 %v2027
    %v2183 = vunpack.c.h.b16 %v2027
    %v2184 = vunpack.c.l.b16 %v2028
    %v2185 = vunpack.c.h.b16 %v2028
    %v2186 = vunpack.c.l.b16 %v2029
    %v2187 = vunpack.c.h.b16 %v2029
    %v2188 = vunpack.c.l.b16 %v2030
    %v2189 = vunpack.c.h.b16 %v2030
    %v2190 = vunpack.c.l.b16 %v2031
    %v2191 = vunpack.c.h.b16 %v2031
    %v2192 = vunpack.c.l.b16 %v2032
    %v2193 = vunpack.c.h.b16 %v2032
    %v2194 = vunpack.c.l.b16 %v2033
    %v2195 = vunpack.c.h.b16 %v2033
    %v2196 = vunpack.c.l.b16 %v2034
    %v2197 = vunpack.c.h.b16 %v2034
    %v2198 = vunpack.c.l.b16 %v2035
    %v2199 = vunpack.c.h.b16 %v2035
    %v2200 = vunpack.c.l.b16 %v2036
    %v2201 = vunpack.c.h.b16 %v2036
    %v2202 = vunpack.c.l.b16 %v2037
    %v2203 = vunpack.c.h.b16 %v2037
    %v2204 = vunpack.c.l.b16 %v2038
    %v2205 = vunpack.c.h.b16 %v2038
    %v2206 = vunpack.c.l.b16 %v2039
    %v2207 = vunpack.c.h.b16 %v2039
    %v2208 = vunpack.c.l.b16 %v2040
    %v2209 = vunpack.c.h.b16 %v2040
    %v2210 = vunpack.c.l.b16 %v2041
    %v2211 = vunpack.c.h.b16 %v2041
    %v2212 = vunpack.c.l.b16 %v2042
    %v2213 = vunpack.c.h.b16 %v2042
    %v2214 = vunpack.c.l.b16 %v2043
    %v2215 = vunpack.c.h.b16 %v2043
    %v2216 = vunpack.c.l.b16 %v2044
    %v2217 = vunpack.c.h.b16 %v2044
    %v2218 = vunpack.c.l.b16 %v2045
    %v2219 = vunpack.c.h.b16 %v2045
    %v2220 = vunpack.c.l.b16 %v2046
    %v2221 = vunpack.c.h.b16 %v2046
    %v2222 = vunpack.c.l.b16 %v2047
    %v2223 = vunpack.c.h.b16 %v2047
    %v2224 = vunpack.c.l.b16 %v2048
    %v2225 = vunpack.c.h.b16 %v2048
    %v2226 = vunpack.c.l.b16 %v2049
    %v2227 = vunpack.c.h.b16 %v2049
    %v2228 = vunpack.c.l.b16 %v2050
    %v2229 = vunpack.c.h.b16 %v2050
    %v2230 = vunpack.c.l.b16 %v2051
    %v2231 = vunpack.c.h.b16 %v2051
    %v2232 = vunpack.c.l.b16 %v2052
    %v2233 = vunpack.c.h.b16 %v2052
    %v2234 = vunpack.c.l.b16 %v2053
    %v2235 = vunpack.c.h.b16 %v2053
    %v2236 = vunpack.c.l.b16 %v2054
    %v2237 = vunpack.c.h.b16 %v2054
    %v2238 = vunpack.c.l.b16 %v2055
    %v2239 = vunpack.c.h.b16 %v2055
    %v2240 = vunpack.c.l.b16 %v2056
    %v2241 = vunpack.c.h.b16 %v2056
    %v2242 = vunpack.c.l.b16 %v2057
    %v2243 = vunpack.c.h.b16 %v2057
    %v2244 = vunpack.c.l.b16 %v2058
    %v2245 = vunpack.c.h.b16 %v2058
    %v2246 = vunpack.c.l.b16 %v2059
    %v2247 = vunpack.c.h.b16 %v2059
    %v2248 = vunpack.c.l.b16 %v2060
    %v2249 = vunpack.c.h.b16 %v2060
    %v2250 = vunpack.c.l.b16 %v2061
    %v2251 = vunpack.c.h.b16 %v2061
    %v2252 = vunpack.c.l.b16 %v2062
    %v2253 = vunpack.c.h.b16 %v2062
    %v2254 = vunpack.c.l.b16 %v2063
    %v2255 = vunpack.c.h.b16 %v2063
    %v2256 = vpack.c.b16 %v2132, %v2128
    %v2257 = vpack.c.b16 %v2133, %v2129
    %v2258 = vpack.c.b16 %v2134, %v2130
    %v2259 = vpack.c.b16 %v2135, %v2131
    %v2260 = vpack.c.b16 %v2140, %v2136
    %v2261 = vpack.c.b16 %v2141, %v2137
    %v2262 = vpack.c.b16 %v2142, %v2138
    %v2263 = vpack.c.b16 %v2143, %v2139
    %v2264 = vpack.c.b16 %v2148, %v2144
    %v2265 = vpack.c.b16 %v2149, %v2145
    %v2266 = vpack.c.b16 %v2150, %v2146
    %v2267 = vpack.c.b16 %v2151, %v2147
    %v2268 = vpack.c.b16 %v2156, %v2152
    %v2269 = vpack.c.b16 %v2157, %v2153
    %v2270 = vpack.c.b16 %v2158, %v2154
    %v2271 = vpack.c.b16 %v2159, %v2155
    %v2272 = vpack.c.b16 %v2164, %v2160
    %v2273 = vpack.c.b16 %v2165, %v2161
    %v2274 = vpack.c.b16 %v2166, %v2162
    %v2275 = vpack.c.b16 %v2167, %v2163
    %v2276 = vpack.c.b16 %v2172, %v2168
    %v2277 = vpack.c.b16 %v2173, %v2169
    %v2278 = vpack.c.b16 %v2174, %v2170
    %v2279 = vpack.c.b16 %v2175, %v2171
    %v2280 = vpack.c.b16 %v2180, %v2176
    %v2281 = vpack.c.b16 %v2181, %v2177
    %v2282 = vpack.c.b16 %v2182, %v2178
    %v2283 = vpack.c.b16 %v2183, %v2179
    %v2284 = vpack.c.b16 %v2188, %v2184
    %v2285 = vpack.c.b16 %v2189, %v2185
    %v2286 = vpack.c.b16 %v2190, %v2186
    %v2287 = vpack.c.b16 %v2191, %v2187
    %v2288 = vpack.c.b16 %v2196, %v2192
    %v2289 = vpack.c.b16 %v2197, %v2193
    %v2290 = vpack.c.b16 %v2198, %v2194
    %v2291 = vpack.c.b16 %v2199, %v2195
    %v2292 = vpack.c.b16 %v2204, %v2200
    %v2293 = vpack.c.b16 %v2205, %v2201
    %v2294 = vpack.c.b16 %v2206, %v2202
    %v2295 = vpack.c.b16 %v2207, %v2203
    %v2296 = vpack.c.b16 %v2212, %v2208
    %v2297 = vpack.c.b16 %v2213, %v2209
    %v2298 = vpack.c.b16 %v2214, %v2210
    %v2299 = vpack.c.b16 %v2215, %v2211
    %v2300 = vpack.c.b16 %v2220, %v2216
    %v2301 = vpack.c.b16 %v2221, %v2217
    %v2302 = vpack.c.b16 %v2222, %v2218
    %v2303 = vpack.c.b16 %v2223, %v2219
    %v2304 = vpack.c.b16 %v2228, %v2224
    %v2305 = vpack.c.b16 %v2229, %v2225
    %v2306 = vpack.c.b16 %v2230, %v2226
    %v2307 = vpack.c.b16 %v2231, %v2227
    %v2308 = vpack.c.b16 %v2236, %v2232
    %v2309 = vpack.c.b16 %v2237, %v2233
    %v2310 = vpack.c.b16 %v2238, %v2234
    %v2311 = vpack.c.b16 %v2239, %v2235
    %v2312 = vpack.c.b16 %v2244, %v2240
    %v2313 = vpack.c.b16 %v2245, %v2241
    %v2314 = vpack.c.b16 %v2246, %v2242
    %v2315 = vpack.c.b16 %v2247, %v2243
    %v2316 = vpack.c.b16 %v2252, %v2248
    %v2317 = vpack.c.b16 %v2253, %v2249
    %v2318 = vpack.c.b16 %v2254, %v2250
    %v2319 = vpack.c.b16 %v2255, %v2251
    %2384 = vmatpush.bf16.msra.mxu0 %v2284
    %2385 = vmatpush.bf16.msra.mxu0 %v2280
    %2386 = vmatpush.bf16.msra.mxu0 %v2276
    %2387 = vmatpush.bf16.msra.mxu0 %v2272
    %2388 = vmatpush.bf16.msra.mxu0 %v2268
    %2389 = vmatpush.bf16.msra.mxu0 %v2264
    %2390 = vmatpush.bf16.msra.mxu0 %v2260
    %2391 = vmatpush.bf16.msra.mxu0 %v2256
    %2392 = vmatmul.bf16.gmra.mxu0 %v1997
    %v2393 = vpop.f32.mrf.mxu0
    %v2394 = vadd.f32 0.0, %v2393
    %v2395 = vpop.f32.mrf.mxu0
    %v2396 = vadd.f32 0.0, %v2395
    %2397 = vdwg.mxu0
    %2398 = vmatpush.bf16.msra.mxu0 %v2316
    %2399 = vmatpush.bf16.msra.mxu0 %v2312
    %2400 = vmatpush.bf16.msra.mxu0 %v2308
    %2401 = vmatpush.bf16.msra.mxu0 %v2304
    %2402 = vmatpush.bf16.msra.mxu0 %v2300
    %2403 = vmatpush.bf16.msra.mxu0 %v2296
    %2404 = vmatpush.bf16.msra.mxu0 %v2292
    %2405 = vmatpush.bf16.msra.mxu0 %v2288
    %2406 = vmatmul.bf16.gmra.mxu0 %v1998
    %v2407 = vpop.f32.mrf.mxu0
    %v2408 = vadd.f32 %v2394, %v2407
    %v2409 = vpop.f32.mrf.mxu0
    %v2410 = vadd.f32 %v2396, %v2409
    %2411 = vdwg.mxu0
    %2412 = vmatpush.bf16.msra.mxu0 %v2285
    %2413 = vmatpush.bf16.msra.mxu0 %v2281
    %2414 = vmatpush.bf16.msra.mxu0 %v2277
    %2415 = vmatpush.bf16.msra.mxu0 %v2273
    %2416 = vmatpush.bf16.msra.mxu0 %v2269
    %2417 = vmatpush.bf16.msra.mxu0 %v2265
    %2418 = vmatpush.bf16.msra.mxu0 %v2261
    %2419 = vmatpush.bf16.msra.mxu0 %v2257
    %2420 = vmatmul.bf16.gmra.mxu0 %v1997
    %v2421 = vpop.f32.mrf.mxu0
    %v2422 = vadd.f32 0.0, %v2421
    %v2423 = vpop.f32.mrf.mxu0
    %v2424 = vadd.f32 0.0, %v2423
    %2425 = vdwg.mxu0
    %2426 = vmatpush.bf16.msra.mxu0 %v2317
    %2427 = vmatpush.bf16.msra.mxu0 %v2313
    %2428 = vmatpush.bf16.msra.mxu0 %v2309
    %2429 = vmatpush.bf16.msra.mxu0 %v2305
    %2430 = vmatpush.bf16.msra.mxu0 %v2301
    %2431 = vmatpush.bf16.msra.mxu0 %v2297
    %2432 = vmatpush.bf16.msra.mxu0 %v2293
    %2433 = vmatpush.bf16.msra.mxu0 %v2289
    %2434 = vmatmul.bf16.gmra.mxu0 %v1998
    %v2435 = vpop.f32.mrf.mxu0
    %v2436 = vadd.f32 %v2422, %v2435
    %v2437 = vpop.f32.mrf.mxu0
    %v2438 = vadd.f32 %v2424, %v2437
    %2439 = vdwg.mxu0
    %2440 = vmatpush.bf16.msra.mxu0 %v2286
    %2441 = vmatpush.bf16.msra.mxu0 %v2282
    %2442 = vmatpush.bf16.msra.mxu0 %v2278
    %2443 = vmatpush.bf16.msra.mxu0 %v2274
    %2444 = vmatpush.bf16.msra.mxu0 %v2270
    %2445 = vmatpush.bf16.msra.mxu0 %v2266
    %2446 = vmatpush.bf16.msra.mxu0 %v2262
    %2447 = vmatpush.bf16.msra.mxu0 %v2258
    %2448 = vmatmul.bf16.gmra.mxu0 %v1997
    %v2449 = vpop.f32.mrf.mxu0
    %v2450 = vadd.f32 0.0, %v2449
    %v2451 = vpop.f32.mrf.mxu0
    %v2452 = vadd.f32 0.0, %v2451
    %2453 = vdwg.mxu0
    %2454 = vmatpush.bf16.msra.mxu0 %v2318
    %2455 = vmatpush.bf16.msra.mxu0 %v2314
    %2456 = vmatpush.bf16.msra.mxu0 %v2310
    %2457 = vmatpush.bf16.msra.mxu0 %v2306
    %2458 = vmatpush.bf16.msra.mxu0 %v2302
    %2459 = vmatpush.bf16.msra.mxu0 %v2298
    %2460 = vmatpush.bf16.msra.mxu0 %v2294
    %2461 = vmatpush.bf16.msra.mxu0 %v2290
    %2462 = vmatmul.bf16.gmra.mxu0 %v1998
    %v2463 = vpop.f32.mrf.mxu0
    %v2464 = vadd.f32 %v2450, %v2463
    %v2465 = vpop.f32.mrf.mxu0
    %v2466 = vadd.f32 %v2452, %v2465
    %2467 = vdwg.mxu0
    %2468 = vmatpush.bf16.msra.mxu0 %v2287
    %2469 = vmatpush.bf16.msra.mxu0 %v2283
    %2470 = vmatpush.bf16.msra.mxu0 %v2279
    %2471 = vmatpush.bf16.msra.mxu0 %v2275
    %2472 = vmatpush.bf16.msra.mxu0 %v2271
    %2473 = vmatpush.bf16.msra.mxu0 %v2267
    %2474 = vmatpush.bf16.msra.mxu0 %v2263
    %2475 = vmatpush.bf16.msra.mxu0 %v2259
    %2476 = vmatmul.bf16.gmra.mxu0 %v1997
    %v2477 = vpop.f32.mrf.mxu0
    %v2478 = vadd.f32 0.0, %v2477
    %v2479 = vpop.f32.mrf.mxu0
    %v2480 = vadd.f32 0.0, %v2479
    %2481 = vdwg.mxu0
    %2482 = vmatpush.bf16.msra.mxu0 %v2319
    %2483 = vmatpush.bf16.msra.mxu0 %v2315
    %2484 = vmatpush.bf16.msra.mxu0 %v2311
    %2485 = vmatpush.bf16.msra.mxu0 %v2307
    %2486 = vmatpush.bf16.msra.mxu0 %v2303
    %2487 = vmatpush.bf16.msra.mxu0 %v2299
    %2488 = vmatpush.bf16.msra.mxu0 %v2295
    %2489 = vmatpush.bf16.msra.mxu0 %v2291
    %2490 = vmatmul.bf16.gmra.mxu0 %v1998
    %v2491 = vpop.f32.mrf.mxu0
    %v2492 = vadd.f32 %v2478, %v2491
    %v2493 = vpop.f32.mrf.mxu0
    %v2494 = vadd.f32 %v2480, %v2493
    %2495 = vdwg.mxu0
    %v2560 = vunpack.c.l.b16 %v1334
    %v2561 = vunpack.c.h.b16 %v1334
    %v2562 = vunpack.c.l.b16 %v1335
    %v2563 = vunpack.c.h.b16 %v1335
    %v2564 = vunpack.c.l.b16 %v1336
    %v2565 = vunpack.c.h.b16 %v1336
    %v2566 = vunpack.c.l.b16 %v1337
    %v2567 = vunpack.c.h.b16 %v1337
    %v2568 = vunpack.c.l.b16 %v1338
    %v2569 = vunpack.c.h.b16 %v1338
    %v2570 = vunpack.c.l.b16 %v1339
    %v2571 = vunpack.c.h.b16 %v1339
    %v2572 = vunpack.c.l.b16 %v1340
    %v2573 = vunpack.c.h.b16 %v1340
    %v2574 = vunpack.c.l.b16 %v1341
    %v2575 = vunpack.c.h.b16 %v1341
    %v2576 = vunpack.c.l.b16 %v1342
    %v2577 = vunpack.c.h.b16 %v1342
    %v2578 = vunpack.c.l.b16 %v1343
    %v2579 = vunpack.c.h.b16 %v1343
    %v2580 = vunpack.c.l.b16 %v1344
    %v2581 = vunpack.c.h.b16 %v1344
    %v2582 = vunpack.c.l.b16 %v1345
    %v2583 = vunpack.c.h.b16 %v1345
    %v2584 = vunpack.c.l.b16 %v1346
    %v2585 = vunpack.c.h.b16 %v1346
    %v2586 = vunpack.c.l.b16 %v1347
    %v2587 = vunpack.c.h.b16 %v1347
    %v2588 = vunpack.c.l.b16 %v1348
    %v2589 = vunpack.c.h.b16 %v1348
    %v2590 = vunpack.c.l.b16 %v1349
    %v2591 = vunpack.c.h.b16 %v1349
    %v2592 = vunpack.c.l.b16 %v1350
    %v2593 = vunpack.c.h.b16 %v1350
    %v2594 = vunpack.c.l.b16 %v1351
    %v2595 = vunpack.c.h.b16 %v1351
    %v2596 = vunpack.c.l.b16 %v1352
    %v2597 = vunpack.c.h.b16 %v1352
    %v2598 = vunpack.c.l.b16 %v1353
    %v2599 = vunpack.c.h.b16 %v1353
    %v2600 = vunpack.c.l.b16 %v1354
    %v2601 = vunpack.c.h.b16 %v1354
    %v2602 = vunpack.c.l.b16 %v1355
    %v2603 = vunpack.c.h.b16 %v1355
    %v2604 = vunpack.c.l.b16 %v1356
    %v2605 = vunpack.c.h.b16 %v1356
    %v2606 = vunpack.c.l.b16 %v1357
    %v2607 = vunpack.c.h.b16 %v1357
    %v2608 = vunpack.c.l.b16 %v1358
    %v2609 = vunpack.c.h.b16 %v1358
    %v2610 = vunpack.c.l.b16 %v1359
    %v2611 = vunpack.c.h.b16 %v1359
    %v2612 = vunpack.c.l.b16 %v1360
    %v2613 = vunpack.c.h.b16 %v1360
    %v2614 = vunpack.c.l.b16 %v1361
    %v2615 = vunpack.c.h.b16 %v1361
    %v2616 = vunpack.c.l.b16 %v1362
    %v2617 = vunpack.c.h.b16 %v1362
    %v2618 = vunpack.c.l.b16 %v1363
    %v2619 = vunpack.c.h.b16 %v1363
    %v2620 = vunpack.c.l.b16 %v1364
    %v2621 = vunpack.c.h.b16 %v1364
    %v2622 = vunpack.c.l.b16 %v1365
    %v2623 = vunpack.c.h.b16 %v1365
    %v2624 = vunpack.c.l.b16 %v1366
    %v2625 = vunpack.c.h.b16 %v1366
    %v2626 = vunpack.c.l.b16 %v1367
    %v2627 = vunpack.c.h.b16 %v1367
    %v2628 = vunpack.c.l.b16 %v1368
    %v2629 = vunpack.c.h.b16 %v1368
    %v2630 = vunpack.c.l.b16 %v1369
    %v2631 = vunpack.c.h.b16 %v1369
    %v2632 = vunpack.c.l.b16 %v1370
    %v2633 = vunpack.c.h.b16 %v1370
    %v2634 = vunpack.c.l.b16 %v1371
    %v2635 = vunpack.c.h.b16 %v1371
    %v2636 = vunpack.c.l.b16 %v1372
    %v2637 = vunpack.c.h.b16 %v1372
    %v2638 = vunpack.c.l.b16 %v1373
    %v2639 = vunpack.c.h.b16 %v1373
    %v2640 = vunpack.c.l.b16 %v1374
    %v2641 = vunpack.c.h.b16 %v1374
    %v2642 = vunpack.c.l.b16 %v1375
    %v2643 = vunpack.c.h.b16 %v1375
    %v2644 = vunpack.c.l.b16 %v1376
    %v2645 = vunpack.c.h.b16 %v1376
    %v2646 = vunpack.c.l.b16 %v1377
    %v2647 = vunpack.c.h.b16 %v1377
    %v2648 = vunpack.c.l.b16 %v1378
    %v2649 = vunpack.c.h.b16 %v1378
    %v2650 = vunpack.c.l.b16 %v1379
    %v2651 = vunpack.c.h.b16 %v1379
    %v2652 = vunpack.c.l.b16 %v1380
    %v2653 = vunpack.c.h.b16 %v1380
    %v2654 = vunpack.c.l.b16 %v1381
    %v2655 = vunpack.c.h.b16 %v1381
    %v2656 = vunpack.c.l.b16 %v1382
    %v2657 = vunpack.c.h.b16 %v1382
    %v2658 = vunpack.c.l.b16 %v1383
    %v2659 = vunpack.c.h.b16 %v1383
    %v2660 = vunpack.c.l.b16 %v1384
    %v2661 = vunpack.c.h.b16 %v1384
    %v2662 = vunpack.c.l.b16 %v1385
    %v2663 = vunpack.c.h.b16 %v1385
    %v2664 = vunpack.c.l.b16 %v1386
    %v2665 = vunpack.c.h.b16 %v1386
    %v2666 = vunpack.c.l.b16 %v1387
    %v2667 = vunpack.c.h.b16 %v1387
    %v2668 = vunpack.c.l.b16 %v1388
    %v2669 = vunpack.c.h.b16 %v1388
    %v2670 = vunpack.c.l.b16 %v1389
    %v2671 = vunpack.c.h.b16 %v1389
    %v2672 = vunpack.c.l.b16 %v1390
    %v2673 = vunpack.c.h.b16 %v1390
    %v2674 = vunpack.c.l.b16 %v1391
    %v2675 = vunpack.c.h.b16 %v1391
    %v2676 = vunpack.c.l.b16 %v1392
    %v2677 = vunpack.c.h.b16 %v1392
    %v2678 = vunpack.c.l.b16 %v1393
    %v2679 = vunpack.c.h.b16 %v1393
    %v2680 = vunpack.c.l.b16 %v1394
    %v2681 = vunpack.c.h.b16 %v1394
    %v2682 = vunpack.c.l.b16 %v1395
    %v2683 = vunpack.c.h.b16 %v1395
    %v2684 = vunpack.c.l.b16 %v1396
    %v2685 = vunpack.c.h.b16 %v1396
    %v2686 = vunpack.c.l.b16 %v1397
    %v2687 = vunpack.c.h.b16 %v1397
    %v2688 = vpack.c.b16 %v2564, %v2560
    %v2689 = vpack.c.b16 %v2565, %v2561
    %v2690 = vpack.c.b16 %v2566, %v2562
    %v2691 = vpack.c.b16 %v2567, %v2563
    %v2692 = vpack.c.b16 %v2572, %v2568
    %v2693 = vpack.c.b16 %v2573, %v2569
    %v2694 = vpack.c.b16 %v2574, %v2570
    %v2695 = vpack.c.b16 %v2575, %v2571
    %v2696 = vpack.c.b16 %v2580, %v2576
    %v2697 = vpack.c.b16 %v2581, %v2577
    %v2698 = vpack.c.b16 %v2582, %v2578
    %v2699 = vpack.c.b16 %v2583, %v2579
    %v2700 = vpack.c.b16 %v2588, %v2584
    %v2701 = vpack.c.b16 %v2589, %v2585
    %v2702 = vpack.c.b16 %v2590, %v2586
    %v2703 = vpack.c.b16 %v2591, %v2587
    %v2704 = vpack.c.b16 %v2596, %v2592
    %v2705 = vpack.c.b16 %v2597, %v2593
    %v2706 = vpack.c.b16 %v2598, %v2594
    %v2707 = vpack.c.b16 %v2599, %v2595
    %v2708 = vpack.c.b16 %v2604, %v2600
    %v2709 = vpack.c.b16 %v2605, %v2601
    %v2710 = vpack.c.b16 %v2606, %v2602
    %v2711 = vpack.c.b16 %v2607, %v2603
    %v2712 = vpack.c.b16 %v2612, %v2608
    %v2713 = vpack.c.b16 %v2613, %v2609
    %v2714 = vpack.c.b16 %v2614, %v2610
    %v2715 = vpack.c.b16 %v2615, %v2611
    %v2716 = vpack.c.b16 %v2620, %v2616
    %v2717 = vpack.c.b16 %v2621, %v2617
    %v2718 = vpack.c.b16 %v2622, %v2618
    %v2719 = vpack.c.b16 %v2623, %v2619
    %v2720 = vpack.c.b16 %v2628, %v2624
    %v2721 = vpack.c.b16 %v2629, %v2625
    %v2722 = vpack.c.b16 %v2630, %v2626
    %v2723 = vpack.c.b16 %v2631, %v2627
    %v2724 = vpack.c.b16 %v2636, %v2632
    %v2725 = vpack.c.b16 %v2637, %v2633
    %v2726 = vpack.c.b16 %v2638, %v2634
    %v2727 = vpack.c.b16 %v2639, %v2635
    %v2728 = vpack.c.b16 %v2644, %v2640
    %v2729 = vpack.c.b16 %v2645, %v2641
    %v2730 = vpack.c.b16 %v2646, %v2642
    %v2731 = vpack.c.b16 %v2647, %v2643
    %v2732 = vpack.c.b16 %v2652, %v2648
    %v2733 = vpack.c.b16 %v2653, %v2649
    %v2734 = vpack.c.b16 %v2654, %v2650
    %v2735 = vpack.c.b16 %v2655, %v2651
    %v2736 = vpack.c.b16 %v2660, %v2656
    %v2737 = vpack.c.b16 %v2661, %v2657
    %v2738 = vpack.c.b16 %v2662, %v2658
    %v2739 = vpack.c.b16 %v2663, %v2659
    %v2740 = vpack.c.b16 %v2668, %v2664
    %v2741 = vpack.c.b16 %v2669, %v2665
    %v2742 = vpack.c.b16 %v2670, %v2666
    %v2743 = vpack.c.b16 %v2671, %v2667
    %v2744 = vpack.c.b16 %v2676, %v2672
    %v2745 = vpack.c.b16 %v2677, %v2673
    %v2746 = vpack.c.b16 %v2678, %v2674
    %v2747 = vpack.c.b16 %v2679, %v2675
    %v2748 = vpack.c.b16 %v2684, %v2680
    %v2749 = vpack.c.b16 %v2685, %v2681
    %v2750 = vpack.c.b16 %v2686, %v2682
    %v2751 = vpack.c.b16 %v2687, %v2683
    %2816 = vmatpush.bf16.msra.mxu0 %v2716
    %2817 = vmatpush.bf16.msra.mxu0 %v2712
    %2818 = vmatpush.bf16.msra.mxu0 %v2708
    %2819 = vmatpush.bf16.msra.mxu0 %v2704
    %2820 = vmatpush.bf16.msra.mxu0 %v2700
    %2821 = vmatpush.bf16.msra.mxu0 %v2696
    %2822 = vmatpush.bf16.msra.mxu0 %v2692
    %2823 = vmatpush.bf16.msra.mxu0 %v2688
    %2824 = vmatmul.bf16.gmra.mxu0 %v1332
    %v2825 = vpop.f32.mrf.mxu0
    %v2826 = vadd.f32 %v1859, %v2825
    %v2827 = vpop.f32.mrf.mxu0
    %v2828 = vadd.f32 %v1861, %v2827
    %2829 = vdwg.mxu0
    %2830 = vmatpush.bf16.msra.mxu0 %v2748
    %2831 = vmatpush.bf16.msra.mxu0 %v2744
    %2832 = vmatpush.bf16.msra.mxu0 %v2740
    %2833 = vmatpush.bf16.msra.mxu0 %v2736
    %2834 = vmatpush.bf16.msra.mxu0 %v2732
    %2835 = vmatpush.bf16.msra.mxu0 %v2728
    %2836 = vmatpush.bf16.msra.mxu0 %v2724
    %2837 = vmatpush.bf16.msra.mxu0 %v2720
    %2838 = vmatmul.bf16.gmra.mxu0 %v1333
    %v2839 = vpop.f32.mrf.mxu0
    %v2840 = vadd.f32 %v2826, %v2839
    %v2841 = vpop.f32.mrf.mxu0
    %v2842 = vadd.f32 %v2828, %v2841
    %2843 = vdwg.mxu0
    %2844 = vmatpush.bf16.msra.mxu0 %v2717
    %2845 = vmatpush.bf16.msra.mxu0 %v2713
    %2846 = vmatpush.bf16.msra.mxu0 %v2709
    %2847 = vmatpush.bf16.msra.mxu0 %v2705
    %2848 = vmatpush.bf16.msra.mxu0 %v2701
    %2849 = vmatpush.bf16.msra.mxu0 %v2697
    %2850 = vmatpush.bf16.msra.mxu0 %v2693
    %2851 = vmatpush.bf16.msra.mxu0 %v2689
    %2852 = vmatmul.bf16.gmra.mxu0 %v1332
    %v2853 = vpop.f32.mrf.mxu0
    %v2854 = vadd.f32 %v1887, %v2853
    %v2855 = vpop.f32.mrf.mxu0
    %v2856 = vadd.f32 %v1889, %v2855
    %2857 = vdwg.mxu0
    %2858 = vmatpush.bf16.msra.mxu0 %v2749
    %2859 = vmatpush.bf16.msra.mxu0 %v2745
    %2860 = vmatpush.bf16.msra.mxu0 %v2741
    %2861 = vmatpush.bf16.msra.mxu0 %v2737
    %2862 = vmatpush.bf16.msra.mxu0 %v2733
    %2863 = vmatpush.bf16.msra.mxu0 %v2729
    %2864 = vmatpush.bf16.msra.mxu0 %v2725
    %2865 = vmatpush.bf16.msra.mxu0 %v2721
    %2866 = vmatmul.bf16.gmra.mxu0 %v1333
    %v2867 = vpop.f32.mrf.mxu0
    %v2868 = vadd.f32 %v2854, %v2867
    %v2869 = vpop.f32.mrf.mxu0
    %v2870 = vadd.f32 %v2856, %v2869
    %2871 = vdwg.mxu0
    %2872 = vmatpush.bf16.msra.mxu0 %v2718
    %2873 = vmatpush.bf16.msra.mxu0 %v2714
    %2874 = vmatpush.bf16.msra.mxu0 %v2710
    %2875 = vmatpush.bf16.msra.mxu0 %v2706
    %2876 = vmatpush.bf16.msra.mxu0 %v2702
    %2877 = vmatpush.bf16.msra.mxu0 %v2698
    %2878 = vmatpush.bf16.msra.mxu0 %v2694
    %2879 = vmatpush.bf16.msra.mxu0 %v2690
    %2880 = vmatmul.bf16.gmra.mxu0 %v1332
    %v2881 = vpop.f32.mrf.mxu0
    %v2882 = vadd.f32 %v1915, %v2881
    %v2883 = vpop.f32.mrf.mxu0
    %v2884 = vadd.f32 %v1917, %v2883
    %2885 = vdwg.mxu0
    %2886 = vmatpush.bf16.msra.mxu0 %v2750
    %2887 = vmatpush.bf16.msra.mxu0 %v2746
    %2888 = vmatpush.bf16.msra.mxu0 %v2742
    %2889 = vmatpush.bf16.msra.mxu0 %v2738
    %2890 = vmatpush.bf16.msra.mxu0 %v2734
    %2891 = vmatpush.bf16.msra.mxu0 %v2730
    %2892 = vmatpush.bf16.msra.mxu0 %v2726
    %2893 = vmatpush.bf16.msra.mxu0 %v2722
    %2894 = vmatmul.bf16.gmra.mxu0 %v1333
    %v2895 = vpop.f32.mrf.mxu0
    %v2896 = vadd.f32 %v2882, %v2895
    %v2897 = vpop.f32.mrf.mxu0
    %v2898 = vadd.f32 %v2884, %v2897
    %2899 = vdwg.mxu0
    %2900 = vmatpush.bf16.msra.mxu0 %v2719
    %2901 = vmatpush.bf16.msra.mxu0 %v2715
    %2902 = vmatpush.bf16.msra.mxu0 %v2711
    %2903 = vmatpush.bf16.msra.mxu0 %v2707
    %2904 = vmatpush.bf16.msra.mxu0 %v2703
    %2905 = vmatpush.bf16.msra.mxu0 %v2699
    %2906 = vmatpush.bf16.msra.mxu0 %v2695
    %2907 = vmatpush.bf16.msra.mxu0 %v2691
    %2908 = vmatmul.bf16.gmra.mxu0 %v1332
    %v2909 = vpop.f32.mrf.mxu0
    %v2910 = vadd.f32 %v1943, %v2909
    %v2911 = vpop.f32.mrf.mxu0
    %v2912 = vadd.f32 %v1945, %v2911
    %2913 = vdwg.mxu0
    %2914 = vmatpush.bf16.msra.mxu0 %v2751
    %2915 = vmatpush.bf16.msra.mxu0 %v2747
    %2916 = vmatpush.bf16.msra.mxu0 %v2743
    %2917 = vmatpush.bf16.msra.mxu0 %v2739
    %2918 = vmatpush.bf16.msra.mxu0 %v2735
    %2919 = vmatpush.bf16.msra.mxu0 %v2731
    %2920 = vmatpush.bf16.msra.mxu0 %v2727
    %2921 = vmatpush.bf16.msra.mxu0 %v2723
    %2922 = vmatmul.bf16.gmra.mxu0 %v1333
    %v2923 = vpop.f32.mrf.mxu0
    %v2924 = vadd.f32 %v2910, %v2923
    %v2925 = vpop.f32.mrf.mxu0
    %v2926 = vadd.f32 %v2912, %v2925
    %2927 = vdwg.mxu0
    %v2928 = vadd.f32 %v2840, %v2408
    %v2929 = vadd.f32 %v2868, %v2436
    %v2930 = vadd.f32 %v2896, %v2464
    %v2931 = vadd.f32 %v2924, %v2492
    %v2932 = vadd.f32 %v2842, %v2410
    %v2933 = vadd.f32 %v2870, %v2438
    %v2934 = vadd.f32 %v2898, %v2466
    %v2935 = vadd.f32 %v2926, %v2494
    %v2936 = vld [vmem:[%s8] sm:$0xf]
    %v2938 = vperm.slane %v2936, 0
    %v2939 = vperm.slane %v2936, 1
    %v2940 = vperm.slane %v2936, 2
    %v2941 = vperm.slane %v2936, 3
    %v2946 = vadd.f32 %v2928, %v2938
    %v2947 = vadd.f32 %v2929, %v2939
    %v2948 = vadd.f32 %v2930, %v2940
    %v2949 = vadd.f32 %v2931, %v2941
    %v2950 = vadd.f32 %v2932, %v2938
    %v2951 = vadd.f32 %v2933, %v2939
    %v2952 = vadd.f32 %v2934, %v2940
    %v2953 = vadd.f32 %v2935, %v2941
    %v2954 = vmax.f32 %v2946, 0.0
    %v2955 = vmax.f32 %v2947, 0.0
    %v2956 = vmax.f32 %v2948, 0.0
    %v2957 = vmax.f32 %v2949, 0.0
    %v2958 = vmax.f32 %v2950, 0.0
    %v2959 = vmax.f32 %v2951, 0.0
    %v2960 = vmax.f32 %v2952, 0.0
    %v2961 = vmax.f32 %v2953, 0.0
    %v2962 = vmul.u32 %v196, 8
    %v2963 = vsub.s32 %v205, %v2962
    %vm2964 = vcmp.ge.s32.totalorder %v2963, 0
    %vm2965 = vcmp.lt.s32.totalorder %v2963, 8
    %vm2966 = vmand %vm2964, %vm2965
    %v2967 = vsel %vm2966, 1, 0
    %v2968 = vcvt.s32.f32 %v2967
    %v2969 = vmul.f32 %v2968, 0.125
    %vm2970 = vcmask 130048
    %v2972 = vsel %vm2970, %v2969, 0
    %2974 = vmatpush.msra.mxu0 0.0
    %2975 = vmatpush.msra.mxu0 0.0
    %2976 = vmatpush.msra.mxu0 0.0
    %2977 = vmatpush.msra.mxu0 0.0
    %2978 = vmatpush.msra.mxu0 0.0
    %2979 = vmatpush.msra.mxu0 0.0
    %2980 = vmatpush.msra.mxu0 0.0
    %2981 = vmatpush.msra.mxu0 0.0
    %2982 = vmatpush.msra.mxu0 0.0
    %2983 = vmatpush.msra.mxu0 0.0
    %2984 = vmatpush.msra.mxu0 0.0
    %2985 = vmatpush.msra.mxu0 0.0
    %2986 = vmatpush.msra.mxu0 0.0
    %2987 = vmatpush.msra.mxu0 0.0
    %2988 = vmatpush.msra.mxu0 %v2958
    %2989 = vmatpush.msra.mxu0 %v2954
    %2990 = vmatmul.f32.gmra.mxu0 %v2972
    %v2991 = vpop.f32.mrf.mxu0
    %v2992 = vadd.f32 0.0, %v2991
    %2993 = vdwg.mxu0
    %2994 = vmatpush.msra.mxu0 0.0
    %2995 = vmatpush.msra.mxu0 0.0
    %2996 = vmatpush.msra.mxu0 0.0
    %2997 = vmatpush.msra.mxu0 0.0
    %2998 = vmatpush.msra.mxu0 0.0
    %2999 = vmatpush.msra.mxu0 0.0
    %3000 = vmatpush.msra.mxu0 0.0
    %3001 = vmatpush.msra.mxu0 0.0
    %3002 = vmatpush.msra.mxu0 0.0
    %3003 = vmatpush.msra.mxu0 0.0
    %3004 = vmatpush.msra.mxu0 0.0
    %3005 = vmatpush.msra.mxu0 0.0
    %3006 = vmatpush.msra.mxu0 0.0
    %3007 = vmatpush.msra.mxu0 0.0
    %3008 = vmatpush.msra.mxu0 %v2959
    %3009 = vmatpush.msra.mxu0 %v2955
    %3010 = vmatmul.f32.gmra.mxu0 %v2972
    %v3011 = vpop.f32.mrf.mxu0
    %v3012 = vadd.f32 0.0, %v3011
    %3013 = vdwg.mxu0
    %3014 = vmatpush.msra.mxu0 0.0
    %3015 = vmatpush.msra.mxu0 0.0
    %3016 = vmatpush.msra.mxu0 0.0
    %3017 = vmatpush.msra.mxu0 0.0
    %3018 = vmatpush.msra.mxu0 0.0
    %3019 = vmatpush.msra.mxu0 0.0
    %3020 = vmatpush.msra.mxu0 0.0
    %3021 = vmatpush.msra.mxu0 0.0
    %3022 = vmatpush.msra.mxu0 0.0
    %3023 = vmatpush.msra.mxu0 0.0
    %3024 = vmatpush.msra.mxu0 0.0
    %3025 = vmatpush.msra.mxu0 0.0
    %3026 = vmatpush.msra.mxu0 0.0
    %3027 = vmatpush.msra.mxu0 0.0
    %3028 = vmatpush.msra.mxu0 %v2960
    %3029 = vmatpush.msra.mxu0 %v2956
    %3030 = vmatmul.f32.gmra.mxu0 %v2972
    %v3031 = vpop.f32.mrf.mxu0
    %v3032 = vadd.f32 0.0, %v3031
    %3033 = vdwg.mxu0
    %3034 = vmatpush.msra.mxu0 0.0
    %3035 = vmatpush.msra.mxu0 0.0
    %3036 = vmatpush.msra.mxu0 0.0
    %3037 = vmatpush.msra.mxu0 0.0
    %3038 = vmatpush.msra.mxu0 0.0
    %3039 = vmatpush.msra.mxu0 0.0
    %3040 = vmatpush.msra.mxu0 0.0
    %3041 = vmatpush.msra.mxu0 0.0
    %3042 = vmatpush.msra.mxu0 0.0
    %3043 = vmatpush.msra.mxu0 0.0
    %3044 = vmatpush.msra.mxu0 0.0
    %3045 = vmatpush.msra.mxu0 0.0
    %3046 = vmatpush.msra.mxu0 0.0
    %3047 = vmatpush.msra.mxu0 0.0
    %3048 = vmatpush.msra.mxu0 %v2961
    %3049 = vmatpush.msra.mxu0 %v2957
    %3050 = vmatmul.f32.gmra.mxu0 %v2972
    %v3051 = vpop.f32.mrf.mxu0
    %v3052 = vadd.f32 0.0, %v3051
    %3053 = vdwg.mxu0
    %v3054 = vpack.c.bf16 %v2992, %v2992
    %v3055 = vpack.c.bf16 %v3012, %v3012
    %v3056 = vpack.c.bf16 %v3032, %v3032
    %v3057 = vpack.c.bf16 %v3052, %v3052
    %v3058 = vld [vmem:[%s9] sm:$0xff]
    %v3059 = vld [vmem:[%s9 + $0x8] sm:$0xff]
    %v3060 = vld [vmem:[%s9 + $0x10] sm:$0xff]
    %v3061 = vld [vmem:[%s9 + $0x18] sm:$0xff]
    %v3062 = vld [vmem:[%s9 + $0x20] sm:$0xff]
    %v3063 = vld [vmem:[%s9 + $0x28] sm:$0xff]
    %v3064 = vld [vmem:[%s9 + $0x30] sm:$0xff]
    %v3065 = vld [vmem:[%s9 + $0x38] sm:$0xff]
    %v3066 = vld [vmem:[%s9 + $0x40] sm:$0xff]
    %v3067 = vld [vmem:[%s9 + $0x48] sm:$0xff]
    %v3068 = vld [vmem:[%s9 + $0x50] sm:$0xff]
    %v3069 = vld [vmem:[%s9 + $0x58] sm:$0xff]
    %v3070 = vld [vmem:[%s9 + $0x60] sm:$0xff]
    %v3071 = vld [vmem:[%s9 + $0x68] sm:$0xff]
    %v3072 = vld [vmem:[%s9 + $0x70] sm:$0xff]
    %v3073 = vld [vmem:[%s9 + $0x78] sm:$0xff]
    %v3074 = vld [vmem:[%s9 + $0x80] sm:$0xff]
    %v3075 = vld [vmem:[%s9 + $0x88] sm:$0xff]
    %v3076 = vld [vmem:[%s9 + $0x90] sm:$0xff]
    %v3077 = vld [vmem:[%s9 + $0x98] sm:$0xff]
    %v3078 = vld [vmem:[%s9 + $0xa0] sm:$0xff]
    %v3079 = vld [vmem:[%s9 + $0xa8] sm:$0xff]
    %v3080 = vld [vmem:[%s9 + $0xb0] sm:$0xff]
    %v3081 = vld [vmem:[%s9 + $0xb8] sm:$0xff]
    %v3082 = vld [vmem:[%s9 + $0xc0] sm:$0xff]
    %v3083 = vld [vmem:[%s9 + $0xc8] sm:$0xff]
    %v3084 = vld [vmem:[%s9 + $0xd0] sm:$0xff]
    %v3085 = vld [vmem:[%s9 + $0xd8] sm:$0xff]
    %v3086 = vld [vmem:[%s9 + $0xe0] sm:$0xff]
    %v3087 = vld [vmem:[%s9 + $0xe8] sm:$0xff]
    %v3088 = vld [vmem:[%s9 + $0xf0] sm:$0xff]
    %v3089 = vld [vmem:[%s9 + $0xf8] sm:$0xff]
    %v3090 = vld [vmem:[%s9 + $0x100] sm:$0xff]
    %v3091 = vld [vmem:[%s9 + $0x108] sm:$0xff]
    %v3092 = vld [vmem:[%s9 + $0x110] sm:$0xff]
    %v3093 = vld [vmem:[%s9 + $0x118] sm:$0xff]
    %v3094 = vld [vmem:[%s9 + $0x120] sm:$0xff]
    %v3095 = vld [vmem:[%s9 + $0x128] sm:$0xff]
    %v3096 = vld [vmem:[%s9 + $0x130] sm:$0xff]
    %v3097 = vld [vmem:[%s9 + $0x138] sm:$0xff]
    %v3098 = vld [vmem:[%s9 + $0x140] sm:$0xff]
    %v3099 = vld [vmem:[%s9 + $0x148] sm:$0xff]
    %v3100 = vld [vmem:[%s9 + $0x150] sm:$0xff]
    %v3101 = vld [vmem:[%s9 + $0x158] sm:$0xff]
    %v3102 = vld [vmem:[%s9 + $0x160] sm:$0xff]
    %v3103 = vld [vmem:[%s9 + $0x168] sm:$0xff]
    %v3104 = vld [vmem:[%s9 + $0x170] sm:$0xff]
    %v3105 = vld [vmem:[%s9 + $0x178] sm:$0xff]
    %v3106 = vld [vmem:[%s9 + $0x180] sm:$0xff]
    %v3107 = vld [vmem:[%s9 + $0x188] sm:$0xff]
    %v3108 = vld [vmem:[%s9 + $0x190] sm:$0xff]
    %v3109 = vld [vmem:[%s9 + $0x198] sm:$0xff]
    %v3110 = vld [vmem:[%s9 + $0x1a0] sm:$0xff]
    %v3111 = vld [vmem:[%s9 + $0x1a8] sm:$0xff]
    %v3112 = vld [vmem:[%s9 + $0x1b0] sm:$0xff]
    %v3113 = vld [vmem:[%s9 + $0x1b8] sm:$0xff]
    %v3114 = vld [vmem:[%s9 + $0x1c0] sm:$0xff]
    %v3115 = vld [vmem:[%s9 + $0x1c8] sm:$0xff]
    %v3116 = vld [vmem:[%s9 + $0x1d0] sm:$0xff]
    %v3117 = vld [vmem:[%s9 + $0x1d8] sm:$0xff]
    %v3118 = vld [vmem:[%s9 + $0x1e0] sm:$0xff]
    %v3119 = vld [vmem:[%s9 + $0x1e8] sm:$0xff]
    %v3120 = vld [vmem:[%s9 + $0x1f0] sm:$0xff]
    %v3121 = vld [vmem:[%s9 + $0x1f8] sm:$0xff]
    %v3122 = vld [vmem:[%s9 + $0x200] sm:$0xff]
    %v3123 = vld [vmem:[%s9 + $0x208] sm:$0xff]
    %v3124 = vld [vmem:[%s9 + $0x210] sm:$0xff]
    %v3125 = vld [vmem:[%s9 + $0x218] sm:$0xff]
    %v3126 = vld [vmem:[%s9 + $0x220] sm:$0xff]
    %v3127 = vld [vmem:[%s9 + $0x228] sm:$0xff]
    %v3128 = vld [vmem:[%s9 + $0x230] sm:$0xff]
    %v3129 = vld [vmem:[%s9 + $0x238] sm:$0xff]
    %v3130 = vld [vmem:[%s9 + $0x240] sm:$0xff]
    %v3131 = vld [vmem:[%s9 + $0x248] sm:$0xff]
    %v3132 = vld [vmem:[%s9 + $0x250] sm:$0xff]
    %v3133 = vld [vmem:[%s9 + $0x258] sm:$0xff]
    %v3134 = vld [vmem:[%s9 + $0x260] sm:$0xff]
    %v3135 = vld [vmem:[%s9 + $0x268] sm:$0xff]
    %v3136 = vld [vmem:[%s9 + $0x270] sm:$0xff]
    %v3137 = vld [vmem:[%s9 + $0x278] sm:$0xff]
    %v3138 = vld [vmem:[%s9 + $0x280] sm:$0xff]
    %v3139 = vld [vmem:[%s9 + $0x288] sm:$0xff]
    %v3140 = vld [vmem:[%s9 + $0x290] sm:$0xff]
    %v3141 = vld [vmem:[%s9 + $0x298] sm:$0xff]
    %v3142 = vld [vmem:[%s9 + $0x2a0] sm:$0xff]
    %v3143 = vld [vmem:[%s9 + $0x2a8] sm:$0xff]
    %v3144 = vld [vmem:[%s9 + $0x2b0] sm:$0xff]
    %v3145 = vld [vmem:[%s9 + $0x2b8] sm:$0xff]
    %v3146 = vld [vmem:[%s9 + $0x2c0] sm:$0xff]
    %v3147 = vld [vmem:[%s9 + $0x2c8] sm:$0xff]
    %v3148 = vld [vmem:[%s9 + $0x2d0] sm:$0xff]
    %v3149 = vld [vmem:[%s9 + $0x2d8] sm:$0xff]
    %v3150 = vld [vmem:[%s9 + $0x2e0] sm:$0xff]
    %v3151 = vld [vmem:[%s9 + $0x2e8] sm:$0xff]
    %v3152 = vld [vmem:[%s9 + $0x2f0] sm:$0xff]
    %v3153 = vld [vmem:[%s9 + $0x2f8] sm:$0xff]
    %v3154 = vld [vmem:[%s9 + $0x300] sm:$0xff]
    %v3155 = vld [vmem:[%s9 + $0x308] sm:$0xff]
    %v3156 = vld [vmem:[%s9 + $0x310] sm:$0xff]
    %v3157 = vld [vmem:[%s9 + $0x318] sm:$0xff]
    %v3158 = vld [vmem:[%s9 + $0x320] sm:$0xff]
    %v3159 = vld [vmem:[%s9 + $0x328] sm:$0xff]
    %v3160 = vld [vmem:[%s9 + $0x330] sm:$0xff]
    %v3161 = vld [vmem:[%s9 + $0x338] sm:$0xff]
    %v3162 = vld [vmem:[%s9 + $0x340] sm:$0xff]
    %v3163 = vld [vmem:[%s9 + $0x348] sm:$0xff]
    %v3164 = vld [vmem:[%s9 + $0x350] sm:$0xff]
    %v3165 = vld [vmem:[%s9 + $0x358] sm:$0xff]
    %v3166 = vld [vmem:[%s9 + $0x360] sm:$0xff]
    %v3167 = vld [vmem:[%s9 + $0x368] sm:$0xff]
    %v3168 = vld [vmem:[%s9 + $0x370] sm:$0xff]
    %v3169 = vld [vmem:[%s9 + $0x378] sm:$0xff]
    %v3170 = vld [vmem:[%s9 + $0x380] sm:$0xff]
    %v3171 = vld [vmem:[%s9 + $0x388] sm:$0xff]
    %v3172 = vld [vmem:[%s9 + $0x390] sm:$0xff]
    %v3173 = vld [vmem:[%s9 + $0x398] sm:$0xff]
    %v3174 = vld [vmem:[%s9 + $0x3a0] sm:$0xff]
    %v3175 = vld [vmem:[%s9 + $0x3a8] sm:$0xff]
    %v3176 = vld [vmem:[%s9 + $0x3b0] sm:$0xff]
    %v3177 = vld [vmem:[%s9 + $0x3b8] sm:$0xff]
    %v3178 = vld [vmem:[%s9 + $0x3c0] sm:$0xff]
    %v3179 = vld [vmem:[%s9 + $0x3c8] sm:$0xff]
    %v3180 = vld [vmem:[%s9 + $0x3d0] sm:$0xff]
    %v3181 = vld [vmem:[%s9 + $0x3d8] sm:$0xff]
    %v3182 = vld [vmem:[%s9 + $0x3e0] sm:$0xff]
    %v3183 = vld [vmem:[%s9 + $0x3e8] sm:$0xff]
    %v3184 = vld [vmem:[%s9 + $0x3f0] sm:$0xff]
    %v3185 = vld [vmem:[%s9 + $0x3f8] sm:$0xff]
    %v3186 = vld [vmem:[%s10] sm:$0xf]
    %v3188 = vperm.slane %v3186, 0
    %v3189 = vperm.slane %v3186, 1
    %v3190 = vperm.slane %v3186, 2
    %v3191 = vperm.slane %v3186, 3
    %v3324 = vunpack.c.l.b16 %v3058
    %v3325 = vunpack.c.h.b16 %v3058
    %v3326 = vunpack.c.l.b16 %v3059
    %v3327 = vunpack.c.h.b16 %v3059
    %v3328 = vunpack.c.l.b16 %v3060
    %v3329 = vunpack.c.h.b16 %v3060
    %v3330 = vunpack.c.l.b16 %v3061
    %v3331 = vunpack.c.h.b16 %v3061
    %v3332 = vunpack.c.l.b16 %v3062
    %v3333 = vunpack.c.h.b16 %v3062
    %v3334 = vunpack.c.l.b16 %v3063
    %v3335 = vunpack.c.h.b16 %v3063
    %v3336 = vunpack.c.l.b16 %v3064
    %v3337 = vunpack.c.h.b16 %v3064
    %v3338 = vunpack.c.l.b16 %v3065
    %v3339 = vunpack.c.h.b16 %v3065
    %v3340 = vunpack.c.l.b16 %v3066
    %v3341 = vunpack.c.h.b16 %v3066
    %v3342 = vunpack.c.l.b16 %v3067
    %v3343 = vunpack.c.h.b16 %v3067
    %v3344 = vunpack.c.l.b16 %v3068
    %v3345 = vunpack.c.h.b16 %v3068
    %v3346 = vunpack.c.l.b16 %v3069
    %v3347 = vunpack.c.h.b16 %v3069
    %v3348 = vunpack.c.l.b16 %v3070
    %v3349 = vunpack.c.h.b16 %v3070
    %v3350 = vunpack.c.l.b16 %v3071
    %v3351 = vunpack.c.h.b16 %v3071
    %v3352 = vunpack.c.l.b16 %v3072
    %v3353 = vunpack.c.h.b16 %v3072
    %v3354 = vunpack.c.l.b16 %v3073
    %v3355 = vunpack.c.h.b16 %v3073
    %v3356 = vunpack.c.l.b16 %v3074
    %v3357 = vunpack.c.h.b16 %v3074
    %v3358 = vunpack.c.l.b16 %v3075
    %v3359 = vunpack.c.h.b16 %v3075
    %v3360 = vunpack.c.l.b16 %v3076
    %v3361 = vunpack.c.h.b16 %v3076
    %v3362 = vunpack.c.l.b16 %v3077
    %v3363 = vunpack.c.h.b16 %v3077
    %v3364 = vunpack.c.l.b16 %v3078
    %v3365 = vunpack.c.h.b16 %v3078
    %v3366 = vunpack.c.l.b16 %v3079
    %v3367 = vunpack.c.h.b16 %v3079
    %v3368 = vunpack.c.l.b16 %v3080
    %v3369 = vunpack.c.h.b16 %v3080
    %v3370 = vunpack.c.l.b16 %v3081
    %v3371 = vunpack.c.h.b16 %v3081
    %v3372 = vunpack.c.l.b16 %v3082
    %v3373 = vunpack.c.h.b16 %v3082
    %v3374 = vunpack.c.l.b16 %v3083
    %v3375 = vunpack.c.h.b16 %v3083
    %v3376 = vunpack.c.l.b16 %v3084
    %v3377 = vunpack.c.h.b16 %v3084
    %v3378 = vunpack.c.l.b16 %v3085
    %v3379 = vunpack.c.h.b16 %v3085
    %v3380 = vunpack.c.l.b16 %v3086
    %v3381 = vunpack.c.h.b16 %v3086
    %v3382 = vunpack.c.l.b16 %v3087
    %v3383 = vunpack.c.h.b16 %v3087
    %v3384 = vunpack.c.l.b16 %v3088
    %v3385 = vunpack.c.h.b16 %v3088
    %v3386 = vunpack.c.l.b16 %v3089
    %v3387 = vunpack.c.h.b16 %v3089
    %v3388 = vunpack.c.l.b16 %v3090
    %v3389 = vunpack.c.h.b16 %v3090
    %v3390 = vunpack.c.l.b16 %v3091
    %v3391 = vunpack.c.h.b16 %v3091
    %v3392 = vunpack.c.l.b16 %v3092
    %v3393 = vunpack.c.h.b16 %v3092
    %v3394 = vunpack.c.l.b16 %v3093
    %v3395 = vunpack.c.h.b16 %v3093
    %v3396 = vunpack.c.l.b16 %v3094
    %v3397 = vunpack.c.h.b16 %v3094
    %v3398 = vunpack.c.l.b16 %v3095
    %v3399 = vunpack.c.h.b16 %v3095
    %v3400 = vunpack.c.l.b16 %v3096
    %v3401 = vunpack.c.h.b16 %v3096
    %v3402 = vunpack.c.l.b16 %v3097
    %v3403 = vunpack.c.h.b16 %v3097
    %v3404 = vunpack.c.l.b16 %v3098
    %v3405 = vunpack.c.h.b16 %v3098
    %v3406 = vunpack.c.l.b16 %v3099
    %v3407 = vunpack.c.h.b16 %v3099
    %v3408 = vunpack.c.l.b16 %v3100
    %v3409 = vunpack.c.h.b16 %v3100
    %v3410 = vunpack.c.l.b16 %v3101
    %v3411 = vunpack.c.h.b16 %v3101
    %v3412 = vunpack.c.l.b16 %v3102
    %v3413 = vunpack.c.h.b16 %v3102
    %v3414 = vunpack.c.l.b16 %v3103
    %v3415 = vunpack.c.h.b16 %v3103
    %v3416 = vunpack.c.l.b16 %v3104
    %v3417 = vunpack.c.h.b16 %v3104
    %v3418 = vunpack.c.l.b16 %v3105
    %v3419 = vunpack.c.h.b16 %v3105
    %v3420 = vunpack.c.l.b16 %v3106
    %v3421 = vunpack.c.h.b16 %v3106
    %v3422 = vunpack.c.l.b16 %v3107
    %v3423 = vunpack.c.h.b16 %v3107
    %v3424 = vunpack.c.l.b16 %v3108
    %v3425 = vunpack.c.h.b16 %v3108
    %v3426 = vunpack.c.l.b16 %v3109
    %v3427 = vunpack.c.h.b16 %v3109
    %v3428 = vunpack.c.l.b16 %v3110
    %v3429 = vunpack.c.h.b16 %v3110
    %v3430 = vunpack.c.l.b16 %v3111
    %v3431 = vunpack.c.h.b16 %v3111
    %v3432 = vunpack.c.l.b16 %v3112
    %v3433 = vunpack.c.h.b16 %v3112
    %v3434 = vunpack.c.l.b16 %v3113
    %v3435 = vunpack.c.h.b16 %v3113
    %v3436 = vunpack.c.l.b16 %v3114
    %v3437 = vunpack.c.h.b16 %v3114
    %v3438 = vunpack.c.l.b16 %v3115
    %v3439 = vunpack.c.h.b16 %v3115
    %v3440 = vunpack.c.l.b16 %v3116
    %v3441 = vunpack.c.h.b16 %v3116
    %v3442 = vunpack.c.l.b16 %v3117
    %v3443 = vunpack.c.h.b16 %v3117
    %v3444 = vunpack.c.l.b16 %v3118
    %v3445 = vunpack.c.h.b16 %v3118
    %v3446 = vunpack.c.l.b16 %v3119
    %v3447 = vunpack.c.h.b16 %v3119
    %v3448 = vunpack.c.l.b16 %v3120
    %v3449 = vunpack.c.h.b16 %v3120
    %v3450 = vunpack.c.l.b16 %v3121
    %v3451 = vunpack.c.h.b16 %v3121
    %v3452 = vunpack.c.l.b16 %v3122
    %v3453 = vunpack.c.h.b16 %v3122
    %v3454 = vunpack.c.l.b16 %v3123
    %v3455 = vunpack.c.h.b16 %v3123
    %v3456 = vunpack.c.l.b16 %v3124
    %v3457 = vunpack.c.h.b16 %v3124
    %v3458 = vunpack.c.l.b16 %v3125
    %v3459 = vunpack.c.h.b16 %v3125
    %v3460 = vunpack.c.l.b16 %v3126
    %v3461 = vunpack.c.h.b16 %v3126
    %v3462 = vunpack.c.l.b16 %v3127
    %v3463 = vunpack.c.h.b16 %v3127
    %v3464 = vunpack.c.l.b16 %v3128
    %v3465 = vunpack.c.h.b16 %v3128
    %v3466 = vunpack.c.l.b16 %v3129
    %v3467 = vunpack.c.h.b16 %v3129
    %v3468 = vunpack.c.l.b16 %v3130
    %v3469 = vunpack.c.h.b16 %v3130
    %v3470 = vunpack.c.l.b16 %v3131
    %v3471 = vunpack.c.h.b16 %v3131
    %v3472 = vunpack.c.l.b16 %v3132
    %v3473 = vunpack.c.h.b16 %v3132
    %v3474 = vunpack.c.l.b16 %v3133
    %v3475 = vunpack.c.h.b16 %v3133
    %v3476 = vunpack.c.l.b16 %v3134
    %v3477 = vunpack.c.h.b16 %v3134
    %v3478 = vunpack.c.l.b16 %v3135
    %v3479 = vunpack.c.h.b16 %v3135
    %v3480 = vunpack.c.l.b16 %v3136
    %v3481 = vunpack.c.h.b16 %v3136
    %v3482 = vunpack.c.l.b16 %v3137
    %v3483 = vunpack.c.h.b16 %v3137
    %v3484 = vunpack.c.l.b16 %v3138
    %v3485 = vunpack.c.h.b16 %v3138
    %v3486 = vunpack.c.l.b16 %v3139
    %v3487 = vunpack.c.h.b16 %v3139
    %v3488 = vunpack.c.l.b16 %v3140
    %v3489 = vunpack.c.h.b16 %v3140
    %v3490 = vunpack.c.l.b16 %v3141
    %v3491 = vunpack.c.h.b16 %v3141
    %v3492 = vunpack.c.l.b16 %v3142
    %v3493 = vunpack.c.h.b16 %v3142
    %v3494 = vunpack.c.l.b16 %v3143
    %v3495 = vunpack.c.h.b16 %v3143
    %v3496 = vunpack.c.l.b16 %v3144
    %v3497 = vunpack.c.h.b16 %v3144
    %v3498 = vunpack.c.l.b16 %v3145
    %v3499 = vunpack.c.h.b16 %v3145
    %v3500 = vunpack.c.l.b16 %v3146
    %v3501 = vunpack.c.h.b16 %v3146
    %v3502 = vunpack.c.l.b16 %v3147
    %v3503 = vunpack.c.h.b16 %v3147
    %v3504 = vunpack.c.l.b16 %v3148
    %v3505 = vunpack.c.h.b16 %v3148
    %v3506 = vunpack.c.l.b16 %v3149
    %v3507 = vunpack.c.h.b16 %v3149
    %v3508 = vunpack.c.l.b16 %v3150
    %v3509 = vunpack.c.h.b16 %v3150
    %v3510 = vunpack.c.l.b16 %v3151
    %v3511 = vunpack.c.h.b16 %v3151
    %v3512 = vunpack.c.l.b16 %v3152
    %v3513 = vunpack.c.h.b16 %v3152
    %v3514 = vunpack.c.l.b16 %v3153
    %v3515 = vunpack.c.h.b16 %v3153
    %v3516 = vunpack.c.l.b16 %v3154
    %v3517 = vunpack.c.h.b16 %v3154
    %v3518 = vunpack.c.l.b16 %v3155
    %v3519 = vunpack.c.h.b16 %v3155
    %v3520 = vunpack.c.l.b16 %v3156
    %v3521 = vunpack.c.h.b16 %v3156
    %v3522 = vunpack.c.l.b16 %v3157
    %v3523 = vunpack.c.h.b16 %v3157
    %v3524 = vunpack.c.l.b16 %v3158
    %v3525 = vunpack.c.h.b16 %v3158
    %v3526 = vunpack.c.l.b16 %v3159
    %v3527 = vunpack.c.h.b16 %v3159
    %v3528 = vunpack.c.l.b16 %v3160
    %v3529 = vunpack.c.h.b16 %v3160
    %v3530 = vunpack.c.l.b16 %v3161
    %v3531 = vunpack.c.h.b16 %v3161
    %v3532 = vunpack.c.l.b16 %v3162
    %v3533 = vunpack.c.h.b16 %v3162
    %v3534 = vunpack.c.l.b16 %v3163
    %v3535 = vunpack.c.h.b16 %v3163
    %v3536 = vunpack.c.l.b16 %v3164
    %v3537 = vunpack.c.h.b16 %v3164
    %v3538 = vunpack.c.l.b16 %v3165
    %v3539 = vunpack.c.h.b16 %v3165
    %v3540 = vunpack.c.l.b16 %v3166
    %v3541 = vunpack.c.h.b16 %v3166
    %v3542 = vunpack.c.l.b16 %v3167
    %v3543 = vunpack.c.h.b16 %v3167
    %v3544 = vunpack.c.l.b16 %v3168
    %v3545 = vunpack.c.h.b16 %v3168
    %v3546 = vunpack.c.l.b16 %v3169
    %v3547 = vunpack.c.h.b16 %v3169
    %v3548 = vunpack.c.l.b16 %v3170
    %v3549 = vunpack.c.h.b16 %v3170
    %v3550 = vunpack.c.l.b16 %v3171
    %v3551 = vunpack.c.h.b16 %v3171
    %v3552 = vunpack.c.l.b16 %v3172
    %v3553 = vunpack.c.h.b16 %v3172
    %v3554 = vunpack.c.l.b16 %v3173
    %v3555 = vunpack.c.h.b16 %v3173
    %v3556 = vunpack.c.l.b16 %v3174
    %v3557 = vunpack.c.h.b16 %v3174
    %v3558 = vunpack.c.l.b16 %v3175
    %v3559 = vunpack.c.h.b16 %v3175
    %v3560 = vunpack.c.l.b16 %v3176
    %v3561 = vunpack.c.h.b16 %v3176
    %v3562 = vunpack.c.l.b16 %v3177
    %v3563 = vunpack.c.h.b16 %v3177
    %v3564 = vunpack.c.l.b16 %v3178
    %v3565 = vunpack.c.h.b16 %v3178
    %v3566 = vunpack.c.l.b16 %v3179
    %v3567 = vunpack.c.h.b16 %v3179
    %v3568 = vunpack.c.l.b16 %v3180
    %v3569 = vunpack.c.h.b16 %v3180
    %v3570 = vunpack.c.l.b16 %v3181
    %v3571 = vunpack.c.h.b16 %v3181
    %v3572 = vunpack.c.l.b16 %v3182
    %v3573 = vunpack.c.h.b16 %v3182
    %v3574 = vunpack.c.l.b16 %v3183
    %v3575 = vunpack.c.h.b16 %v3183
    %v3576 = vunpack.c.l.b16 %v3184
    %v3577 = vunpack.c.h.b16 %v3184
    %v3578 = vunpack.c.l.b16 %v3185
    %v3579 = vunpack.c.h.b16 %v3185
    %v3580 = vpack.c.b16 %v3328, %v3324
    %v3581 = vpack.c.b16 %v3329, %v3325
    %v3582 = vpack.c.b16 %v3330, %v3326
    %v3583 = vpack.c.b16 %v3331, %v3327
    %v3584 = vpack.c.b16 %v3336, %v3332
    %v3585 = vpack.c.b16 %v3337, %v3333
    %v3586 = vpack.c.b16 %v3338, %v3334
    %v3587 = vpack.c.b16 %v3339, %v3335
    %v3588 = vpack.c.b16 %v3344, %v3340
    %v3589 = vpack.c.b16 %v3345, %v3341
    %v3590 = vpack.c.b16 %v3346, %v3342
    %v3591 = vpack.c.b16 %v3347, %v3343
    %v3592 = vpack.c.b16 %v3352, %v3348
    %v3593 = vpack.c.b16 %v3353, %v3349
    %v3594 = vpack.c.b16 %v3354, %v3350
    %v3595 = vpack.c.b16 %v3355, %v3351
    %v3596 = vpack.c.b16 %v3360, %v3356
    %v3597 = vpack.c.b16 %v3361, %v3357
    %v3598 = vpack.c.b16 %v3362, %v3358
    %v3599 = vpack.c.b16 %v3363, %v3359
    %v3600 = vpack.c.b16 %v3368, %v3364
    %v3601 = vpack.c.b16 %v3369, %v3365
    %v3602 = vpack.c.b16 %v3370, %v3366
    %v3603 = vpack.c.b16 %v3371, %v3367
    %v3604 = vpack.c.b16 %v3376, %v3372
    %v3605 = vpack.c.b16 %v3377, %v3373
    %v3606 = vpack.c.b16 %v3378, %v3374
    %v3607 = vpack.c.b16 %v3379, %v3375
    %v3608 = vpack.c.b16 %v3384, %v3380
    %v3609 = vpack.c.b16 %v3385, %v3381
    %v3610 = vpack.c.b16 %v3386, %v3382
    %v3611 = vpack.c.b16 %v3387, %v3383
    %v3612 = vpack.c.b16 %v3392, %v3388
    %v3613 = vpack.c.b16 %v3393, %v3389
    %v3614 = vpack.c.b16 %v3394, %v3390
    %v3615 = vpack.c.b16 %v3395, %v3391
    %v3616 = vpack.c.b16 %v3400, %v3396
    %v3617 = vpack.c.b16 %v3401, %v3397
    %v3618 = vpack.c.b16 %v3402, %v3398
    %v3619 = vpack.c.b16 %v3403, %v3399
    %v3620 = vpack.c.b16 %v3408, %v3404
    %v3621 = vpack.c.b16 %v3409, %v3405
    %v3622 = vpack.c.b16 %v3410, %v3406
    %v3623 = vpack.c.b16 %v3411, %v3407
    %v3624 = vpack.c.b16 %v3416, %v3412
    %v3625 = vpack.c.b16 %v3417, %v3413
    %v3626 = vpack.c.b16 %v3418, %v3414
    %v3627 = vpack.c.b16 %v3419, %v3415
    %v3628 = vpack.c.b16 %v3424, %v3420
    %v3629 = vpack.c.b16 %v3425, %v3421
    %v3630 = vpack.c.b16 %v3426, %v3422
    %v3631 = vpack.c.b16 %v3427, %v3423
    %v3632 = vpack.c.b16 %v3432, %v3428
    %v3633 = vpack.c.b16 %v3433, %v3429
    %v3634 = vpack.c.b16 %v3434, %v3430
    %v3635 = vpack.c.b16 %v3435, %v3431
    %v3636 = vpack.c.b16 %v3440, %v3436
    %v3637 = vpack.c.b16 %v3441, %v3437
    %v3638 = vpack.c.b16 %v3442, %v3438
    %v3639 = vpack.c.b16 %v3443, %v3439
    %v3640 = vpack.c.b16 %v3448, %v3444
    %v3641 = vpack.c.b16 %v3449, %v3445
    %v3642 = vpack.c.b16 %v3450, %v3446
    %v3643 = vpack.c.b16 %v3451, %v3447
    %v3644 = vpack.c.b16 %v3456, %v3452
    %v3645 = vpack.c.b16 %v3457, %v3453
    %v3646 = vpack.c.b16 %v3458, %v3454
    %v3647 = vpack.c.b16 %v3459, %v3455
    %v3648 = vpack.c.b16 %v3464, %v3460
    %v3649 = vpack.c.b16 %v3465, %v3461
    %v3650 = vpack.c.b16 %v3466, %v3462
    %v3651 = vpack.c.b16 %v3467, %v3463
    %v3652 = vpack.c.b16 %v3472, %v3468
    %v3653 = vpack.c.b16 %v3473, %v3469
    %v3654 = vpack.c.b16 %v3474, %v3470
    %v3655 = vpack.c.b16 %v3475, %v3471
    %v3656 = vpack.c.b16 %v3480, %v3476
    %v3657 = vpack.c.b16 %v3481, %v3477
    %v3658 = vpack.c.b16 %v3482, %v3478
    %v3659 = vpack.c.b16 %v3483, %v3479
    %v3660 = vpack.c.b16 %v3488, %v3484
    %v3661 = vpack.c.b16 %v3489, %v3485
    %v3662 = vpack.c.b16 %v3490, %v3486
    %v3663 = vpack.c.b16 %v3491, %v3487
    %v3664 = vpack.c.b16 %v3496, %v3492
    %v3665 = vpack.c.b16 %v3497, %v3493
    %v3666 = vpack.c.b16 %v3498, %v3494
    %v3667 = vpack.c.b16 %v3499, %v3495
    %v3668 = vpack.c.b16 %v3504, %v3500
    %v3669 = vpack.c.b16 %v3505, %v3501
    %v3670 = vpack.c.b16 %v3506, %v3502
    %v3671 = vpack.c.b16 %v3507, %v3503
    %v3672 = vpack.c.b16 %v3512, %v3508
    %v3673 = vpack.c.b16 %v3513, %v3509
    %v3674 = vpack.c.b16 %v3514, %v3510
    %v3675 = vpack.c.b16 %v3515, %v3511
    %v3676 = vpack.c.b16 %v3520, %v3516
    %v3677 = vpack.c.b16 %v3521, %v3517
    %v3678 = vpack.c.b16 %v3522, %v3518
    %v3679 = vpack.c.b16 %v3523, %v3519
    %v3680 = vpack.c.b16 %v3528, %v3524
    %v3681 = vpack.c.b16 %v3529, %v3525
    %v3682 = vpack.c.b16 %v3530, %v3526
    %v3683 = vpack.c.b16 %v3531, %v3527
    %v3684 = vpack.c.b16 %v3536, %v3532
    %v3685 = vpack.c.b16 %v3537, %v3533
    %v3686 = vpack.c.b16 %v3538, %v3534
    %v3687 = vpack.c.b16 %v3539, %v3535
    %v3688 = vpack.c.b16 %v3544, %v3540
    %v3689 = vpack.c.b16 %v3545, %v3541
    %v3690 = vpack.c.b16 %v3546, %v3542
    %v3691 = vpack.c.b16 %v3547, %v3543
    %v3692 = vpack.c.b16 %v3552, %v3548
    %v3693 = vpack.c.b16 %v3553, %v3549
    %v3694 = vpack.c.b16 %v3554, %v3550
    %v3695 = vpack.c.b16 %v3555, %v3551
    %v3696 = vpack.c.b16 %v3560, %v3556
    %v3697 = vpack.c.b16 %v3561, %v3557
    %v3698 = vpack.c.b16 %v3562, %v3558
    %v3699 = vpack.c.b16 %v3563, %v3559
    %v3700 = vpack.c.b16 %v3568, %v3564
    %v3701 = vpack.c.b16 %v3569, %v3565
    %v3702 = vpack.c.b16 %v3570, %v3566
    %v3703 = vpack.c.b16 %v3571, %v3567
    %v3704 = vpack.c.b16 %v3576, %v3572
    %v3705 = vpack.c.b16 %v3577, %v3573
    %v3706 = vpack.c.b16 %v3578, %v3574
    %v3707 = vpack.c.b16 %v3579, %v3575
    %3836 = vmatpush.bf16.msra.mxu0 %v3608
    %3837 = vmatpush.bf16.msra.mxu0 %v3604
    %3838 = vmatpush.bf16.msra.mxu0 %v3600
    %3839 = vmatpush.bf16.msra.mxu0 %v3596
    %3840 = vmatpush.bf16.msra.mxu0 %v3592
    %3841 = vmatpush.bf16.msra.mxu0 %v3588
    %3842 = vmatpush.bf16.msra.mxu0 %v3584
    %3843 = vmatpush.bf16.msra.mxu0 %v3580
    %3844 = vmatmul.bf16.gmra.mxu0 %v3054
    %v3845 = vpop.f32.mrf.mxu0
    %v3846 = vadd.f32 %v3188, %v3845
    %v3847 = vpop.f32.mrf.mxu0
    %3848 = vdwg.mxu0
    %3849 = vmatpush.bf16.msra.mxu0 %v3640
    %3850 = vmatpush.bf16.msra.mxu0 %v3636
    %3851 = vmatpush.bf16.msra.mxu0 %v3632
    %3852 = vmatpush.bf16.msra.mxu0 %v3628
    %3853 = vmatpush.bf16.msra.mxu0 %v3624
    %3854 = vmatpush.bf16.msra.mxu0 %v3620
    %3855 = vmatpush.bf16.msra.mxu0 %v3616
    %3856 = vmatpush.bf16.msra.mxu0 %v3612
    %3857 = vmatmul.bf16.gmra.mxu0 %v3055
    %v3858 = vpop.f32.mrf.mxu0
    %v3859 = vadd.f32 %v3846, %v3858
    %v3860 = vpop.f32.mrf.mxu0
    %3861 = vdwg.mxu0
    %3862 = vmatpush.bf16.msra.mxu0 %v3672
    %3863 = vmatpush.bf16.msra.mxu0 %v3668
    %3864 = vmatpush.bf16.msra.mxu0 %v3664
    %3865 = vmatpush.bf16.msra.mxu0 %v3660
    %3866 = vmatpush.bf16.msra.mxu0 %v3656
    %3867 = vmatpush.bf16.msra.mxu0 %v3652
    %3868 = vmatpush.bf16.msra.mxu0 %v3648
    %3869 = vmatpush.bf16.msra.mxu0 %v3644
    %3870 = vmatmul.bf16.gmra.mxu0 %v3056
    %v3871 = vpop.f32.mrf.mxu0
    %v3872 = vadd.f32 %v3859, %v3871
    %v3873 = vpop.f32.mrf.mxu0
    %3874 = vdwg.mxu0
    %3875 = vmatpush.bf16.msra.mxu0 %v3704
    %3876 = vmatpush.bf16.msra.mxu0 %v3700
    %3877 = vmatpush.bf16.msra.mxu0 %v3696
    %3878 = vmatpush.bf16.msra.mxu0 %v3692
    %3879 = vmatpush.bf16.msra.mxu0 %v3688
    %3880 = vmatpush.bf16.msra.mxu0 %v3684
    %3881 = vmatpush.bf16.msra.mxu0 %v3680
    %3882 = vmatpush.bf16.msra.mxu0 %v3676
    %3883 = vmatmul.bf16.gmra.mxu0 %v3057
    %v3884 = vpop.f32.mrf.mxu0
    %v3885 = vadd.f32 %v3872, %v3884
    %v3886 = vpop.f32.mrf.mxu0
    %3887 = vdwg.mxu0
    %3888 = vmatpush.bf16.msra.mxu0 %v3609
    %3889 = vmatpush.bf16.msra.mxu0 %v3605
    %3890 = vmatpush.bf16.msra.mxu0 %v3601
    %3891 = vmatpush.bf16.msra.mxu0 %v3597
    %3892 = vmatpush.bf16.msra.mxu0 %v3593
    %3893 = vmatpush.bf16.msra.mxu0 %v3589
    %3894 = vmatpush.bf16.msra.mxu0 %v3585
    %3895 = vmatpush.bf16.msra.mxu0 %v3581
    %3896 = vmatmul.bf16.gmra.mxu0 %v3054
    %v3897 = vpop.f32.mrf.mxu0
    %v3898 = vadd.f32 %v3189, %v3897
    %v3899 = vpop.f32.mrf.mxu0
    %3900 = vdwg.mxu0
    %3901 = vmatpush.bf16.msra.mxu0 %v3641
    %3902 = vmatpush.bf16.msra.mxu0 %v3637
    %3903 = vmatpush.bf16.msra.mxu0 %v3633
    %3904 = vmatpush.bf16.msra.mxu0 %v3629
    %3905 = vmatpush.bf16.msra.mxu0 %v3625
    %3906 = vmatpush.bf16.msra.mxu0 %v3621
    %3907 = vmatpush.bf16.msra.mxu0 %v3617
    %3908 = vmatpush.bf16.msra.mxu0 %v3613
    %3909 = vmatmul.bf16.gmra.mxu0 %v3055
    %v3910 = vpop.f32.mrf.mxu0
    %v3911 = vadd.f32 %v3898, %v3910
    %v3912 = vpop.f32.mrf.mxu0
    %3913 = vdwg.mxu0
    %3914 = vmatpush.bf16.msra.mxu0 %v3673
    %3915 = vmatpush.bf16.msra.mxu0 %v3669
    %3916 = vmatpush.bf16.msra.mxu0 %v3665
    %3917 = vmatpush.bf16.msra.mxu0 %v3661
    %3918 = vmatpush.bf16.msra.mxu0 %v3657
    %3919 = vmatpush.bf16.msra.mxu0 %v3653
    %3920 = vmatpush.bf16.msra.mxu0 %v3649
    %3921 = vmatpush.bf16.msra.mxu0 %v3645
    %3922 = vmatmul.bf16.gmra.mxu0 %v3056
    %v3923 = vpop.f32.mrf.mxu0
    %v3924 = vadd.f32 %v3911, %v3923
    %v3925 = vpop.f32.mrf.mxu0
    %3926 = vdwg.mxu0
    %3927 = vmatpush.bf16.msra.mxu0 %v3705
    %3928 = vmatpush.bf16.msra.mxu0 %v3701
    %3929 = vmatpush.bf16.msra.mxu0 %v3697
    %3930 = vmatpush.bf16.msra.mxu0 %v3693
    %3931 = vmatpush.bf16.msra.mxu0 %v3689
    %3932 = vmatpush.bf16.msra.mxu0 %v3685
    %3933 = vmatpush.bf16.msra.mxu0 %v3681
    %3934 = vmatpush.bf16.msra.mxu0 %v3677
    %3935 = vmatmul.bf16.gmra.mxu0 %v3057
    %v3936 = vpop.f32.mrf.mxu0
    %v3937 = vadd.f32 %v3924, %v3936
    %v3938 = vpop.f32.mrf.mxu0
    %3939 = vdwg.mxu0
    %3940 = vmatpush.bf16.msra.mxu0 %v3610
    %3941 = vmatpush.bf16.msra.mxu0 %v3606
    %3942 = vmatpush.bf16.msra.mxu0 %v3602
    %3943 = vmatpush.bf16.msra.mxu0 %v3598
    %3944 = vmatpush.bf16.msra.mxu0 %v3594
    %3945 = vmatpush.bf16.msra.mxu0 %v3590
    %3946 = vmatpush.bf16.msra.mxu0 %v3586
    %3947 = vmatpush.bf16.msra.mxu0 %v3582
    %3948 = vmatmul.bf16.gmra.mxu0 %v3054
    %v3949 = vpop.f32.mrf.mxu0
    %v3950 = vadd.f32 %v3190, %v3949
    %v3951 = vpop.f32.mrf.mxu0
    %3952 = vdwg.mxu0
    %3953 = vmatpush.bf16.msra.mxu0 %v3642
    %3954 = vmatpush.bf16.msra.mxu0 %v3638
    %3955 = vmatpush.bf16.msra.mxu0 %v3634
    %3956 = vmatpush.bf16.msra.mxu0 %v3630
    %3957 = vmatpush.bf16.msra.mxu0 %v3626
    %3958 = vmatpush.bf16.msra.mxu0 %v3622
    %3959 = vmatpush.bf16.msra.mxu0 %v3618
    %3960 = vmatpush.bf16.msra.mxu0 %v3614
    %3961 = vmatmul.bf16.gmra.mxu0 %v3055
    %v3962 = vpop.f32.mrf.mxu0
    %v3963 = vadd.f32 %v3950, %v3962
    %v3964 = vpop.f32.mrf.mxu0
    %3965 = vdwg.mxu0
    %3966 = vmatpush.bf16.msra.mxu0 %v3674
    %3967 = vmatpush.bf16.msra.mxu0 %v3670
    %3968 = vmatpush.bf16.msra.mxu0 %v3666
    %3969 = vmatpush.bf16.msra.mxu0 %v3662
    %3970 = vmatpush.bf16.msra.mxu0 %v3658
    %3971 = vmatpush.bf16.msra.mxu0 %v3654
    %3972 = vmatpush.bf16.msra.mxu0 %v3650
    %3973 = vmatpush.bf16.msra.mxu0 %v3646
    %3974 = vmatmul.bf16.gmra.mxu0 %v3056
    %v3975 = vpop.f32.mrf.mxu0
    %v3976 = vadd.f32 %v3963, %v3975
    %v3977 = vpop.f32.mrf.mxu0
    %3978 = vdwg.mxu0
    %3979 = vmatpush.bf16.msra.mxu0 %v3706
    %3980 = vmatpush.bf16.msra.mxu0 %v3702
    %3981 = vmatpush.bf16.msra.mxu0 %v3698
    %3982 = vmatpush.bf16.msra.mxu0 %v3694
    %3983 = vmatpush.bf16.msra.mxu0 %v3690
    %3984 = vmatpush.bf16.msra.mxu0 %v3686
    %3985 = vmatpush.bf16.msra.mxu0 %v3682
    %3986 = vmatpush.bf16.msra.mxu0 %v3678
    %3987 = vmatmul.bf16.gmra.mxu0 %v3057
    %v3988 = vpop.f32.mrf.mxu0
    %v3989 = vadd.f32 %v3976, %v3988
    %v3990 = vpop.f32.mrf.mxu0
    %3991 = vdwg.mxu0
    %3992 = vmatpush.bf16.msra.mxu0 %v3611
    %3993 = vmatpush.bf16.msra.mxu0 %v3607
    %3994 = vmatpush.bf16.msra.mxu0 %v3603
    %3995 = vmatpush.bf16.msra.mxu0 %v3599
    %3996 = vmatpush.bf16.msra.mxu0 %v3595
    %3997 = vmatpush.bf16.msra.mxu0 %v3591
    %3998 = vmatpush.bf16.msra.mxu0 %v3587
    %3999 = vmatpush.bf16.msra.mxu0 %v3583
    %4000 = vmatmul.bf16.gmra.mxu0 %v3054
    %v4001 = vpop.f32.mrf.mxu0
    %v4002 = vadd.f32 %v3191, %v4001
    %v4003 = vpop.f32.mrf.mxu0
    %4004 = vdwg.mxu0
    %4005 = vmatpush.bf16.msra.mxu0 %v3643
    %4006 = vmatpush.bf16.msra.mxu0 %v3639
    %4007 = vmatpush.bf16.msra.mxu0 %v3635
    %4008 = vmatpush.bf16.msra.mxu0 %v3631
    %4009 = vmatpush.bf16.msra.mxu0 %v3627
    %4010 = vmatpush.bf16.msra.mxu0 %v3623
    %4011 = vmatpush.bf16.msra.mxu0 %v3619
    %4012 = vmatpush.bf16.msra.mxu0 %v3615
    %4013 = vmatmul.bf16.gmra.mxu0 %v3055
    %v4014 = vpop.f32.mrf.mxu0
    %v4015 = vadd.f32 %v4002, %v4014
    %v4016 = vpop.f32.mrf.mxu0
    %4017 = vdwg.mxu0
    %4018 = vmatpush.bf16.msra.mxu0 %v3675
    %4019 = vmatpush.bf16.msra.mxu0 %v3671
    %4020 = vmatpush.bf16.msra.mxu0 %v3667
    %4021 = vmatpush.bf16.msra.mxu0 %v3663
    %4022 = vmatpush.bf16.msra.mxu0 %v3659
    %4023 = vmatpush.bf16.msra.mxu0 %v3655
    %4024 = vmatpush.bf16.msra.mxu0 %v3651
    %4025 = vmatpush.bf16.msra.mxu0 %v3647
    %4026 = vmatmul.bf16.gmra.mxu0 %v3056
    %v4027 = vpop.f32.mrf.mxu0
    %v4028 = vadd.f32 %v4015, %v4027
    %v4029 = vpop.f32.mrf.mxu0
    %4030 = vdwg.mxu0
    %4031 = vmatpush.bf16.msra.mxu0 %v3707
    %4032 = vmatpush.bf16.msra.mxu0 %v3703
    %4033 = vmatpush.bf16.msra.mxu0 %v3699
    %4034 = vmatpush.bf16.msra.mxu0 %v3695
    %4035 = vmatpush.bf16.msra.mxu0 %v3691
    %4036 = vmatpush.bf16.msra.mxu0 %v3687
    %4037 = vmatpush.bf16.msra.mxu0 %v3683
    %4038 = vmatpush.bf16.msra.mxu0 %v3679
    %4039 = vmatmul.bf16.gmra.mxu0 %v3057
    %v4040 = vpop.f32.mrf.mxu0
    %v4041 = vadd.f32 %v4028, %v4040
    %v4042 = vpop.f32.mrf.mxu0
    %4043 = vdwg.mxu0
    %v4048 = vrot.slane %v3937, 6
    %v4049 = vrot.slane %v3989, 4
    %v4050 = vrot.slane %v4041, 2
    %vm4051 = vcmask 1041408
    %v4052 = vsel %vm4051, %v3885, %v4048
    %vm4053 = vcmask 1045508
    %v4054 = vsel %vm4053, %v4049, %v4050
    %vm4055 = vcmask 1043456
    %v4056 = vsel %vm4055, %v4052, %v4054
    %4058 = vst [vmem:[#allocation2] sm:$0xff] %v4056
    // Predicated region
    $region46: #{simple_audio_encoder_forward.1} parent=1 // pred_check
      _
    $region47: #{simple_audio_encoder_forward.1} parent=1 // pred_check_branch
      %4060 = sbr.rel (0) target = $region49
    $region48: #{simple_audio_encoder_forward.1} parent=1 // pred_region
      %4062 = vsyncadd [#allocation3], 0
      %s4064 = sshll.u32 [#allocation2], 4
      %s4065 = int_to_ptr.vmem [resolvable:$true] %s4064
      %s4066 = sshll.u32 %s11, 4
      %s4067 = int_to_ptr.hbm [resolvable:$true] %s4066
      %4069 = dma.vmem_to_hbm [thread:$0]  %s4065, 128, %s4067, [#allocation3]
    $region49: #{simple_audio_encoder_forward.1} parent=1 // pred_fallthru
      _
    // Predicated region
    $region50: #{simple_audio_encoder_forward.1} parent=1 // pred_check
      _
    $region51: #{simple_audio_encoder_forward.1} parent=1 // pred_check_branch
      %4071 = sbr.rel (0) target = $region53
    $region52: #{simple_audio_encoder_forward.1} parent=1 // pred_region
      %4073 = dma.done [#allocation3], 128
    $region53: #{simple_audio_encoder_forward.1} parent=1 // pred_fallthru
      _
    %4074 = vsyncpa [#allocation3], 1

</llo_original>
